<compile_context>
chip_gen: v7x
topology: tpu7x:2x2x1
jax: 0.10.0
libtpu: 0.0.40
codegen_flags: <defaults>
</compile_context>

<pallas_src>
import functools

import jax
import jax.numpy as jnp
import numpy as np
from jax.experimental import pallas as pl
from jax.experimental.pallas import tpu as pltpu


# ----------------------------------------------------------------------------
# Fused attention kernel: grid = (B,), heads unrolled inside the body
# ----------------------------------------------------------------------------
def _mhsa_kernel(
    q_ref, k_ref, v_ref,            # (1, Lq, D), (1, Lk, D), (1, Lk, D)   raw inputs
    locb_ref,                       # (H, 1, Lq, Lk) f32   masked log spatial bias (precomputed)
    wq_ref, bq_ref,                 # (H, D, dk) cdt, (H, 1, dk) f32   (1/sqrt(dk) folded in)
    wk_ref, bk_ref,                 # (H, D, dk) cdt, (H, 1, dk) f32
    wv_ref, bv_ref,                 # (H, D, dk) cdt, (H, 1, dk) f32
    wfc_ref, bfc_ref,               # (H, dk, D) cdt, (1, D) f32       output projection (resident)
    gamma_ref, beta_ref,            # (1, D) f32                        layer-norm affine
    out_ref,                        # (1, Lq, D)
    fused_ref,                      # (H, 1, Lq, Lk)
    *, n_head, ln_eps, compute_dtype,
):
    f32 = jnp.float32
    cdt = compute_dtype

    x_q = q_ref[0]                                  # (Lq, D)  original dtype (also the residual)
    x_k = k_ref[0]                                  # (Lk, D)
    x_v = v_ref[0]                                  # (Lk, D)
    xq_c = x_q.astype(cdt)
    xk_c = x_k.astype(cdt)
    xv_c = x_v.astype(cdt)

    def head_body(h, acc):
        # per-head projections (full K = D contraction, f32 accumulation on the MXU)
        qh = jnp.dot(xq_c, wq_ref[h], preferred_element_type=f32) + bq_ref[h]   # (Lq, dk) f32
        kh = jnp.dot(xk_c, wk_ref[h], preferred_element_type=f32) + bk_ref[h]   # (Lk, dk) f32
        vh = jnp.dot(xv_c, wv_ref[h], preferred_element_type=f32) + bv_ref[h]   # (Lk, dk) f32

        # scores (scale already folded into wq/bq) + precomputed masked log-spatial bias
        attn = jax.lax.dot_general(qh.astype(cdt), kh.astype(cdt),
                                   (((1,), (1,)), ((), ())),
                                   preferred_element_type=f32)                   # (Lq, Lk) f32
        fused = attn + locb_ref[h][0]                                            # f32

        # softmax over keys (f32); padded keys carry a -1e30 bias -> exp underflows to 0
        fused = fused - jnp.max(fused, axis=-1, keepdims=True)
        fused = jnp.exp(fused)
        denom = jnp.sum(fused, axis=-1, keepdims=True)
        inv = pl.reciprocal(denom, approx=True)             # EUP slot
        inv = inv * (2.0 - denom * inv)                     # one Newton step -> f32-grade accuracy
        probs = fused * inv

        fused_ref[h] = probs[None].astype(fused_ref.dtype)

        # context for this head, then fold the output projection per head into the accumulator
        ctx = jnp.dot(probs.astype(cdt), vh.astype(cdt), preferred_element_type=f32)   # (Lq, dk)
        acc = acc + jnp.dot(ctx.astype(cdt), wfc_ref[h], preferred_element_type=f32)   # (Lq, D)
        return acc

    acc0 = jnp.zeros(out_ref.shape[1:], f32)                # (Lq, D)
    acc = jax.lax.fori_loop(0, n_head, head_body, acc0, unroll=True)

    # finalize: bias + residual + LayerNorm (f32 math), one lane-dense store per batch row-block
    # TODO(synk): dropout omitted (eval mode / identity)
    out = acc + bfc_ref[...].astype(f32) + x_q.astype(f32)
    mean = jnp.mean(out, axis=-1, keepdims=True)
    cent = out - mean
    var = jnp.mean(cent * cent, axis=-1, keepdims=True)
    normed = cent * jax.lax.rsqrt(var + ln_eps)
    out_ref[0] = (normed * gamma_ref[...].astype(f32)
                  + beta_ref[...].astype(f32)).astype(out_ref.dtype)


# ----------------------------------------------------------------------------
# Wrapper
# ----------------------------------------------------------------------------
def multihead_attention_spatial(q, k, v, pairwise_locs, params, *, n_head,
                                key_padding_mask=None,
                                compute_dtype=jnp.bfloat16,
                                fused_dtype=jnp.float32,
                                ln_eps=1e-5,
                                vmem_limit_bytes=48 * 1024 * 1024):
    """Pallas implementation of MultiHeadAttentionSpatial.forward ('mul' fusion)."""
    B, Lq, D = q.shape
    _, Lk, _ = k.shape
    assert D % n_head == 0
    H, dk = n_head, D // n_head
    f32 = jnp.float32
    cdt = compute_dtype
    scale = 1.0 / float(np.sqrt(dk))

    # ---- one-time parameter transforms (XLA): per-head slabs, scale folded into wq/bq ----
    def col_heads(w):                                   # (D, D) -> (H, D, dk)  (column slabs)
        return jnp.transpose(w.reshape(D, H, dk), (1, 0, 2))

    wq = (col_heads(params["wq"]) * scale).astype(cdt)
    wk = col_heads(params["wk"]).astype(cdt)
    wv = col_heads(params["wv"]).astype(cdt)
    bq = (params["bq"].reshape(H, 1, dk) * scale).astype(f32)
    bk = params["bk"].reshape(H, 1, dk).astype(f32)
    bv = params["bv"].reshape(H, 1, dk).astype(f32)
    wfc = params["wfc"].reshape(H, dk, D).astype(cdt)   # row slab h = wfc[h*dk:(h+1)*dk, :]
    bfc = params["bfc"].reshape(1, D).astype(f32)
    gamma = params["gamma"].reshape(1, D).astype(f32)
    beta = params["beta"].reshape(1, D).astype(f32)

    # ---- tiny spatial FC precomputed; masking + log folded into its epilogue ----
    loc = jnp.einsum("blts,sh->hblt", pairwise_locs.astype(f32), params["wloc"].astype(f32))
    loc = jax.nn.relu(loc + params["bloc"].astype(f32)[:, None, None, None])    # (H, B, Lq, Lk)
    locb = jnp.log(jnp.maximum(loc, 1e-6))
    if key_padding_mask is not None:
        mask = key_padding_mask.reshape(1, B, 1, Lk)
        locb = jnp.where(mask, jnp.float32(-1e30), locb)

    kernel = functools.partial(_mhsa_kernel, n_head=H, ln_eps=ln_eps, compute_dtype=cdt)

    out, fused = pl.pallas_call(
        kernel,
        out_shape=(
            jax.ShapeDtypeStruct((B, Lq, D), q.dtype),
            jax.ShapeDtypeStruct((H, B, Lq, Lk), fused_dtype),
        ),
        grid=(B,),
        in_specs=[
            pl.BlockSpec((1, Lq, D), lambda b: (b, 0, 0)),          # q (proj input + residual)
            pl.BlockSpec((1, Lk, D), lambda b: (b, 0, 0)),          # k
            pl.BlockSpec((1, Lk, D), lambda b: (b, 0, 0)),          # v
            pl.BlockSpec((H, 1, Lq, Lk), lambda b: (0, b, 0, 0)),   # masked log spatial bias
            pl.BlockSpec((H, D, dk), lambda b: (0, 0, 0)),          # wq (scale folded, resident)
            pl.BlockSpec((H, 1, dk), lambda b: (0, 0, 0)),          # bq
            pl.BlockSpec((H, D, dk), lambda b: (0, 0, 0)),          # wk
            pl.BlockSpec((H, 1, dk), lambda b: (0, 0, 0)),          # bk
            pl.BlockSpec((H, D, dk), lambda b: (0, 0, 0)),          # wv
            pl.BlockSpec((H, 1, dk), lambda b: (0, 0, 0)),          # bv
            pl.BlockSpec((H, dk, D), lambda b: (0, 0, 0)),          # wfc (resident)
            pl.BlockSpec((1, D), lambda b: (0, 0)),                 # bfc
            pl.BlockSpec((1, D), lambda b: (0, 0)),                 # gamma
            pl.BlockSpec((1, D), lambda b: (0, 0)),                 # beta
        ],
        out_specs=(
            pl.BlockSpec((1, Lq, D), lambda b: (b, 0, 0)),          # output (post-LN)
            pl.BlockSpec((H, 1, Lq, Lk), lambda b: (0, b, 0, 0)),   # fused attention
        ),
        compiler_params=pltpu.CompilerParams(
            dimension_semantics=("parallel",),
            vmem_limit_bytes=vmem_limit_bytes,
        ),
    )(q, k, v, locb, wq, bq, wk, bk, wv, bv, wfc, bfc, gamma, beta)

    return out, fused


# ----------------------------------------------------------------------------
# Pure-JAX reference (mirrors the PyTorch forward) for a correctness check
# ----------------------------------------------------------------------------
def _reference(q, k, v, pairwise_locs, params, *, n_head, key_padding_mask=None):
    B, Lq, D = q.shape
    _, Lk, _ = k.shape
    dk = D // n_head

    def lin(x, w, b):
        return x @ w + b.reshape(-1)

    def heads(x, L):
        return jnp.transpose(x.reshape(B, L, n_head, dk), (2, 0, 1, 3))   # h b l k

    qh = heads(lin(q, params["wq"], params["bq"]), Lq)
    kh = heads(lin(k, params["wk"], params["bk"]), Lk)
    vh = heads(lin(v, params["wv"], params["bv"]), Lk)

    attn = jnp.einsum("hblk,hbtk->hblt", qh, kh) / np.sqrt(dk)
    loc = pairwise_locs @ params["wloc"] + params["bloc"]                 # b l t h
    loc = jnp.maximum(jnp.transpose(loc, (3, 0, 1, 2)), 0.0)              # h b l t (relu, 'mul')
    if key_padding_mask is not None:
        m = key_padding_mask[None, :, None, :]
        attn = jnp.where(m, -jnp.inf, attn)
        loc = jnp.where(m, 0.0, loc)
    fused = jax.nn.softmax(jnp.log(jnp.maximum(loc, 1e-6)) + attn, axis=3)
    out = jnp.einsum("hblt,hbtv->hblv", fused, vh)
    out = jnp.transpose(out, (1, 2, 0, 3)).reshape(B, Lq, D)
    out = lin(out, params["wfc"], params["bfc"]) + q
    mean = jnp.mean(out, axis=-1, keepdims=True)
    var = jnp.mean((out - mean) ** 2, axis=-1, keepdims=True)
    out = (out - mean) * jax.lax.rsqrt(var + 1e-5)
    out = out * params["gamma"].reshape(-1) + params["beta"].reshape(-1)
    return out, fused


# ----------------------------------------------------------------------------
# Main
# ----------------------------------------------------------------------------
if __name__ == "__main__":
    B, L, T = 2, 8, 8
    D, H, S = 32, 4, 5          # d_model, n_head, spatial_dim

    key = jax.random.PRNGKey(0)
    ks = jax.random.split(key, 16)

    params = {
        "wq": 0.2 * jax.random.normal(ks[0], (D, D), jnp.float32),
        "bq": 0.1 * jax.random.normal(ks[1], (1, D), jnp.float32),
        "wk": 0.2 * jax.random.normal(ks[2], (D, D), jnp.float32),
        "bk": 0.1 * jax.random.normal(ks[3], (1, D), jnp.float32),
        "wv": 0.2 * jax.random.normal(ks[4], (D, D), jnp.float32),
        "bv": 0.1 * jax.random.normal(ks[5], (1, D), jnp.float32),
        "wfc": 0.2 * jax.random.normal(ks[6], (D, D), jnp.float32),
        "bfc": 0.1 * jax.random.normal(ks[7], (1, D), jnp.float32),
        "gamma": jnp.ones((1, D), jnp.float32),
        "beta": jnp.zeros((1, D), jnp.float32),
        "wloc": 0.5 * jax.random.normal(ks[8], (S, H), jnp.float32),
        "bloc": 0.1 * jax.random.normal(ks[9], (H,), jnp.float32),
    }

    q = jax.random.normal(ks[10], (B, L, D), jnp.float32)
    k = jax.random.normal(ks[11], (B, T, D), jnp.float32)
    v = jax.random.normal(ks[12], (B, T, D), jnp.float32)
    pairwise_locs = jax.random.normal(ks[13], (B, L, T, S), jnp.float32)

    # --- case 1: no key padding mask, f32 compute (tight tolerance) ---
    out, fused_attn = multihead_attention_spatial(
        q, k, v, pairwise_locs, params, n_head=H, key_padding_mask=None,
        compute_dtype=jnp.float32)
    out = jax.block_until_ready(out)
    fused_attn = jax.block_until_ready(fused_attn)

    ref_out, ref_fused = _reference(
        q, k, v, pairwise_locs, params, n_head=H, key_padding_mask=None)
    np.testing.assert_allclose(np.asarray(out), np.asarray(ref_out), rtol=2e-4, atol=2e-4)
    np.testing.assert_allclose(np.asarray(fused_attn), np.asarray(ref_fused), rtol=2e-4, atol=2e-4)
    assert out.shape == (B, L, D) and fused_attn.shape == (H, B, L, T)

    # --- case 2: with a key padding mask (no fully-padded row), f32 compute ---
    kpm = jax.random.uniform(ks[14], (B, T)) > 0.6
    kpm = kpm.at[:, 0].set(False)
    out_m, fused_m = multihead_attention_spatial(
        q, k, v, pairwise_locs, params, n_head=H, key_padding_mask=kpm,
        compute_dtype=jnp.float32)
    out_m = jax.block_until_ready(out_m)
    fused_m = jax.block_until_ready(fused_m)

    ref_out_m, ref_fused_m = _reference(
        q, k, v, pairwise_locs, params, n_head=H, key_padding_mask=kpm)
    np.testing.assert_allclose(np.asarray(out_m), np.asarray(ref_out_m), rtol=2e-4, atol=2e-4)
    np.testing.assert_allclose(np.asarray(fused_m), np.asarray(ref_fused_m), rtol=2e-4, atol=2e-4)

    # --- case 3: bf16 MXU operand fast path (loose tolerance vs f32 reference) ---
    out_b, fused_b = multihead_attention_spatial(
        q, k, v, pairwise_locs, params, n_head=H, key_padding_mask=kpm,
        compute_dtype=jnp.bfloat16)
    out_b = jax.block_until_ready(out_b)
    fused_b = jax.block_until_ready(fused_b)
    np.testing.assert_allclose(np.asarray(out_b), np.asarray(ref_out_m), rtol=1e-1, atol=1e-1)
    np.testing.assert_allclose(np.asarray(fused_b), np.asarray(ref_fused_m), rtol=1e-1, atol=5e-2)

    print("KERNEL_OK")
</pallas_src>

<mosaic_0001>
module attributes {stable_mosaic.version = 11 : i64} {
  func.func @_mhsa_kernel(%arg0: i32, %arg1: memref<1x8x32xf32, #tpu.memory_space<vmem>>, %arg2: memref<1x8x32xf32, #tpu.memory_space<vmem>>, %arg3: memref<1x8x32xf32, #tpu.memory_space<vmem>>, %arg4: memref<4x1x8x8xf32, #tpu.memory_space<vmem>>, %arg5: memref<4x32x8xf32, #tpu.memory_space<vmem>>, %arg6: memref<4x1x8xf32, #tpu.memory_space<vmem>>, %arg7: memref<4x32x8xf32, #tpu.memory_space<vmem>>, %arg8: memref<4x1x8xf32, #tpu.memory_space<vmem>>, %arg9: memref<4x32x8xf32, #tpu.memory_space<vmem>>, %arg10: memref<4x1x8xf32, #tpu.memory_space<vmem>>, %arg11: memref<4x8x32xf32, #tpu.memory_space<vmem>>, %arg12: memref<1x32xf32, #tpu.memory_space<vmem>>, %arg13: memref<1x32xf32, #tpu.memory_space<vmem>>, %arg14: memref<1x32xf32, #tpu.memory_space<vmem>>, %arg15: memref<1x8x32xf32, #tpu.memory_space<vmem>>, %arg16: memref<4x1x8x8xf32, #tpu.memory_space<vmem>>) attributes {dimension_semantics = [#tpu.dimension_semantics<parallel>], iteration_bounds = array<i64: 2>, scalar_prefetch = 0 : i64, scratch_operands = 0 : i64, tpu.core_type = #tpu.core_type<tc>, window_params = [{transform_indices = @transform_0, window_bounds = array<i64: 1, 8, 32>}, {transform_indices = @transform_1, window_bounds = array<i64: 1, 8, 32>}, {transform_indices = @transform_2, window_bounds = array<i64: 1, 8, 32>}, {transform_indices = @transform_3, window_bounds = array<i64: 4, 1, 8, 8>}, {pipeline_mode = #tpu.pipeline_mode<synchronous>, transform_indices = @transform_4, window_bounds = array<i64: 4, 32, 8>}, {pipeline_mode = #tpu.pipeline_mode<synchronous>, transform_indices = @transform_5, window_bounds = array<i64: 4, 1, 8>}, {pipeline_mode = #tpu.pipeline_mode<synchronous>, transform_indices = @transform_6, window_bounds = array<i64: 4, 32, 8>}, {pipeline_mode = #tpu.pipeline_mode<synchronous>, transform_indices = @transform_7, window_bounds = array<i64: 4, 1, 8>}, {pipeline_mode = #tpu.pipeline_mode<synchronous>, transform_indices = @transform_8, window_bounds = array<i64: 4, 32, 8>}, {pipeline_mode = #tpu.pipeline_mode<synchronous>, transform_indices = @transform_9, window_bounds = array<i64: 4, 1, 8>}, {pipeline_mode = #tpu.pipeline_mode<synchronous>, transform_indices = @transform_10, window_bounds = array<i64: 4, 8, 32>}, {pipeline_mode = #tpu.pipeline_mode<synchronous>, transform_indices = @transform_11, window_bounds = array<i64: 1, 32>}, {pipeline_mode = #tpu.pipeline_mode<synchronous>, transform_indices = @transform_12, window_bounds = array<i64: 1, 32>}, {pipeline_mode = #tpu.pipeline_mode<synchronous>, transform_indices = @transform_13, window_bounds = array<i64: 1, 32>}, {transform_indices = @transform_14, window_bounds = array<i64: 1, 8, 32>}, {transform_indices = @transform_15, window_bounds = array<i64: 4, 1, 8, 8>}]} {
    %c0 = arith.constant 0 : index
    %c0_0 = arith.constant 0 : index
    %c0_1 = arith.constant 0 : index
    %0 = vector.load %arg1[%c0, %c0_0, %c0_1] : memref<1x8x32xf32, #tpu.memory_space<vmem>>, vector<1x8x32xf32>
    %1 = vector.shape_cast %0 : vector<1x8x32xf32> to vector<8x32xf32>
    %c0_2 = arith.constant 0 : index
    %c0_3 = arith.constant 0 : index
    %c0_4 = arith.constant 0 : index
    %2 = vector.load %arg2[%c0_2, %c0_3, %c0_4] : memref<1x8x32xf32, #tpu.memory_space<vmem>>, vector<1x8x32xf32>
    %3 = vector.shape_cast %2 : vector<1x8x32xf32> to vector<8x32xf32>
    %c0_5 = arith.constant 0 : index
    %c0_6 = arith.constant 0 : index
    %c0_7 = arith.constant 0 : index
    %4 = vector.load %arg3[%c0_5, %c0_6, %c0_7] : memref<1x8x32xf32, #tpu.memory_space<vmem>>, vector<1x8x32xf32>
    %5 = vector.shape_cast %4 : vector<1x8x32xf32> to vector<8x32xf32>
    %cst = arith.constant 0.000000e+00 : f32
    %6 = vector.broadcast %cst : f32 to vector<8x32xf32>
    %c0_i32 = arith.constant 0 : i32
    %7 = arith.index_cast %c0_i32 : i32 to index
    %c0_8 = arith.constant 0 : index
    %c0_9 = arith.constant 0 : index
    %8 = vector.load %arg5[%7, %c0_8, %c0_9] : memref<4x32x8xf32, #tpu.memory_space<vmem>>, vector<1x32x8xf32>
    %9 = vector.shape_cast %8 : vector<1x32x8xf32> to vector<32x8xf32>
    %cst_10 = arith.constant dense<0.000000e+00> : vector<8x8xf32>
    %10 = tpu.matmul %1, %9, %cst_10 {dimension_numbers = #tpu.dot_dimension_numbers<[1], [0], [0], [1], [0, 0, 1, 1], [], []>} : vector<8x32xf32>, vector<32x8xf32>, vector<8x8xf32> -> vector<8x8xf32>
    %11 = arith.index_cast %c0_i32 : i32 to index
    %c0_11 = arith.constant 0 : index
    %c0_12 = arith.constant 0 : index
    %12 = vector.load %arg6[%11, %c0_11, %c0_12] : memref<4x1x8xf32, #tpu.memory_space<vmem>>, vector<1x1x8xf32>
    %13 = vector.shape_cast %12 : vector<1x1x8xf32> to vector<1x8xf32>
    %14 = vector.broadcast %13 : vector<1x8xf32> to vector<8x8xf32>
    %15 = arith.addf %10, %14 : vector<8x8xf32>
    %16 = arith.index_cast %c0_i32 : i32 to index
    %c0_13 = arith.constant 0 : index
    %c0_14 = arith.constant 0 : index
    %17 = vector.load %arg7[%16, %c0_13, %c0_14] : memref<4x32x8xf32, #tpu.memory_space<vmem>>, vector<1x32x8xf32>
    %18 = vector.shape_cast %17 : vector<1x32x8xf32> to vector<32x8xf32>
    %cst_15 = arith.constant dense<0.000000e+00> : vector<8x8xf32>
    %19 = tpu.matmul %3, %18, %cst_15 {dimension_numbers = #tpu.dot_dimension_numbers<[1], [0], [0], [1], [0, 0, 1, 1], [], []>} : vector<8x32xf32>, vector<32x8xf32>, vector<8x8xf32> -> vector<8x8xf32>
    %20 = arith.index_cast %c0_i32 : i32 to index
    %c0_16 = arith.constant 0 : index
    %c0_17 = arith.constant 0 : index
    %21 = vector.load %arg8[%20, %c0_16, %c0_17] : memref<4x1x8xf32, #tpu.memory_space<vmem>>, vector<1x1x8xf32>
    %22 = vector.shape_cast %21 : vector<1x1x8xf32> to vector<1x8xf32>
    %23 = vector.broadcast %22 : vector<1x8xf32> to vector<8x8xf32>
    %24 = arith.addf %19, %23 : vector<8x8xf32>
    %25 = arith.index_cast %c0_i32 : i32 to index
    %c0_18 = arith.constant 0 : index
    %c0_19 = arith.constant 0 : index
    %26 = vector.load %arg9[%25, %c0_18, %c0_19] : memref<4x32x8xf32, #tpu.memory_space<vmem>>, vector<1x32x8xf32>
    %27 = vector.shape_cast %26 : vector<1x32x8xf32> to vector<32x8xf32>
    %cst_20 = arith.constant dense<0.000000e+00> : vector<8x8xf32>
    %28 = tpu.matmul %5, %27, %cst_20 {dimension_numbers = #tpu.dot_dimension_numbers<[1], [0], [0], [1], [0, 0, 1, 1], [], []>} : vector<8x32xf32>, vector<32x8xf32>, vector<8x8xf32> -> vector<8x8xf32>
    %29 = arith.index_cast %c0_i32 : i32 to index
    %c0_21 = arith.constant 0 : index
    %c0_22 = arith.constant 0 : index
    %30 = vector.load %arg10[%29, %c0_21, %c0_22] : memref<4x1x8xf32, #tpu.memory_space<vmem>>, vector<1x1x8xf32>
    %31 = vector.shape_cast %30 : vector<1x1x8xf32> to vector<1x8xf32>
    %32 = vector.broadcast %31 : vector<1x8xf32> to vector<8x8xf32>
    %33 = arith.addf %28, %32 : vector<8x8xf32>
    %cst_23 = arith.constant dense<0.000000e+00> : vector<8x8xf32>
    %34 = tpu.matmul %15, %24, %cst_23 {dimension_numbers = #tpu.dot_dimension_numbers<[1], [1], [0], [0], [0, 0, 1, 0], [], []>} : vector<8x8xf32>, vector<8x8xf32>, vector<8x8xf32> -> vector<8x8xf32>
    %35 = arith.index_cast %c0_i32 : i32 to index
    %c0_24 = arith.constant 0 : index
    %c0_25 = arith.constant 0 : index
    %c0_26 = arith.constant 0 : index
    %36 = vector.load %arg4[%35, %c0_24, %c0_25, %c0_26] : memref<4x1x8x8xf32, #tpu.memory_space<vmem>>, vector<1x1x8x8xf32>
    %37 = vector.shape_cast %36 : vector<1x1x8x8xf32> to vector<1x8x8xf32>
    %38 = vector.shape_cast %37 : vector<1x8x8xf32> to vector<8x8xf32>
    %39 = arith.addf %34, %38 : vector<8x8xf32>
    %cst_27 = arith.constant dense<0xFF800000> : vector<8xf32>
    %40 = vector.multi_reduction <maximumf>, %39, %cst_27 [1] : vector<8x8xf32> to vector<8xf32>
    %41 = vector.shape_cast %40 : vector<8xf32> to vector<8x1xf32>
    %42 = vector.broadcast %41 : vector<8x1xf32> to vector<8x8xf32>
    %43 = arith.subf %39, %42 : vector<8x8xf32>
    %44 = math.exp %43 : vector<8x8xf32>
    %cst_28 = arith.constant dense<0.000000e+00> : vector<8xf32>
    %45 = vector.multi_reduction <add>, %44, %cst_28 [1] : vector<8x8xf32> to vector<8xf32>
    %46 = vector.shape_cast %45 : vector<8xf32> to vector<8x1xf32>
    %47 = tpu.reciprocal %46 {approx = true} : vector<8x1xf32> -> vector<8x1xf32>
    %48 = arith.mulf %46, %47 : vector<8x1xf32>
    %cst_29 = arith.constant 2.000000e+00 : f32
    %49 = vector.broadcast %cst_29 : f32 to vector<8x1xf32>
    %50 = arith.subf %49, %48 : vector<8x1xf32>
    %51 = arith.mulf %47, %50 : vector<8x1xf32>
    %52 = vector.broadcast %51 : vector<8x1xf32> to vector<8x8xf32>
    %53 = arith.mulf %44, %52 : vector<8x8xf32>
    %54 = vector.shape_cast %53 : vector<8x8xf32> to vector<1x8x8xf32>
    %55 = arith.index_cast %c0_i32 : i32 to index
    %c0_30 = arith.constant 0 : index
    %c0_31 = arith.constant 0 : index
    %c0_32 = arith.constant 0 : index
    %56 = vector.load %arg16[%55, %c0_30, %c0_31, %c0_32] : memref<4x1x8x8xf32, #tpu.memory_space<vmem>>, vector<1x1x8x8xf32>
    %57 = vector.shape_cast %56 : vector<1x1x8x8xf32> to vector<1x8x8xf32>
    %58 = vector.shape_cast %54 : vector<1x8x8xf32> to vector<1x1x8x8xf32>
    tpu.vector_store %arg16[%55, %c0_30, %c0_31, %c0_32], %58 {strides = array<i32>} : memref<4x1x8x8xf32, #tpu.memory_space<vmem>>, vector<1x1x8x8xf32>,
    %cst_33 = arith.constant dense<0.000000e+00> : vector<8x8xf32>
    %59 = tpu.matmul %53, %33, %cst_33 {dimension_numbers = #tpu.dot_dimension_numbers<[1], [0], [0], [1], [0, 0, 1, 1], [], []>} : vector<8x8xf32>, vector<8x8xf32>, vector<8x8xf32> -> vector<8x8xf32>
    %60 = arith.index_cast %c0_i32 : i32 to index
    %c0_34 = arith.constant 0 : index
    %c0_35 = arith.constant 0 : index
    %61 = vector.load %arg11[%60, %c0_34, %c0_35] : memref<4x8x32xf32, #tpu.memory_space<vmem>>, vector<1x8x32xf32>
    %62 = vector.shape_cast %61 : vector<1x8x32xf32> to vector<8x32xf32>
    %cst_36 = arith.constant dense<0.000000e+00> : vector<8x32xf32>
    %63 = tpu.matmul %59, %62, %cst_36 {dimension_numbers = #tpu.dot_dimension_numbers<[1], [0], [0], [1], [0, 0, 1, 1], [], []>} : vector<8x8xf32>, vector<8x32xf32>, vector<8x32xf32> -> vector<8x32xf32>
    %64 = arith.addf %6, %63 : vector<8x32xf32>
    %c1_i32 = arith.constant 1 : i32
    %65 = arith.index_cast %c1_i32 : i32 to index
    %c0_37 = arith.constant 0 : index
    %c0_38 = arith.constant 0 : index
    %66 = vector.load %arg5[%65, %c0_37, %c0_38] : memref<4x32x8xf32, #tpu.memory_space<vmem>>, vector<1x32x8xf32>
    %67 = vector.shape_cast %66 : vector<1x32x8xf32> to vector<32x8xf32>
    %cst_39 = arith.constant dense<0.000000e+00> : vector<8x8xf32>
    %68 = tpu.matmul %1, %67, %cst_39 {dimension_numbers = #tpu.dot_dimension_numbers<[1], [0], [0], [1], [0, 0, 1, 1], [], []>} : vector<8x32xf32>, vector<32x8xf32>, vector<8x8xf32> -> vector<8x8xf32>
    %69 = arith.index_cast %c1_i32 : i32 to index
    %c0_40 = arith.constant 0 : index
    %c0_41 = arith.constant 0 : index
    %70 = vector.load %arg6[%69, %c0_40, %c0_41] : memref<4x1x8xf32, #tpu.memory_space<vmem>>, vector<1x1x8xf32>
    %71 = vector.shape_cast %70 : vector<1x1x8xf32> to vector<1x8xf32>
    %72 = vector.broadcast %71 : vector<1x8xf32> to vector<8x8xf32>
    %73 = arith.addf %68, %72 : vector<8x8xf32>
    %74 = arith.index_cast %c1_i32 : i32 to index
    %c0_42 = arith.constant 0 : index
    %c0_43 = arith.constant 0 : index
    %75 = vector.load %arg7[%74, %c0_42, %c0_43] : memref<4x32x8xf32, #tpu.memory_space<vmem>>, vector<1x32x8xf32>
    %76 = vector.shape_cast %75 : vector<1x32x8xf32> to vector<32x8xf32>
    %cst_44 = arith.constant dense<0.000000e+00> : vector<8x8xf32>
    %77 = tpu.matmul %3, %76, %cst_44 {dimension_numbers = #tpu.dot_dimension_numbers<[1], [0], [0], [1], [0, 0, 1, 1], [], []>} : vector<8x32xf32>, vector<32x8xf32>, vector<8x8xf32> -> vector<8x8xf32>
    %78 = arith.index_cast %c1_i32 : i32 to index
    %c0_45 = arith.constant 0 : index
    %c0_46 = arith.constant 0 : index
    %79 = vector.load %arg8[%78, %c0_45, %c0_46] : memref<4x1x8xf32, #tpu.memory_space<vmem>>, vector<1x1x8xf32>
    %80 = vector.shape_cast %79 : vector<1x1x8xf32> to vector<1x8xf32>
    %81 = vector.broadcast %80 : vector<1x8xf32> to vector<8x8xf32>
    %82 = arith.addf %77, %81 : vector<8x8xf32>
    %83 = arith.index_cast %c1_i32 : i32 to index
    %c0_47 = arith.constant 0 : index
    %c0_48 = arith.constant 0 : index
    %84 = vector.load %arg9[%83, %c0_47, %c0_48] : memref<4x32x8xf32, #tpu.memory_space<vmem>>, vector<1x32x8xf32>
    %85 = vector.shape_cast %84 : vector<1x32x8xf32> to vector<32x8xf32>
    %cst_49 = arith.constant dense<0.000000e+00> : vector<8x8xf32>
    %86 = tpu.matmul %5, %85, %cst_49 {dimension_numbers = #tpu.dot_dimension_numbers<[1], [0], [0], [1], [0, 0, 1, 1], [], []>} : vector<8x32xf32>, vector<32x8xf32>, vector<8x8xf32> -> vector<8x8xf32>
    %87 = arith.index_cast %c1_i32 : i32 to index
    %c0_50 = arith.constant 0 : index
    %c0_51 = arith.constant 0 : index
    %88 = vector.load %arg10[%87, %c0_50, %c0_51] : memref<4x1x8xf32, #tpu.memory_space<vmem>>, vector<1x1x8xf32>
    %89 = vector.shape_cast %88 : vector<1x1x8xf32> to vector<1x8xf32>
    %90 = vector.broadcast %89 : vector<1x8xf32> to vector<8x8xf32>
    %91 = arith.addf %86, %90 : vector<8x8xf32>
    %cst_52 = arith.constant dense<0.000000e+00> : vector<8x8xf32>
    %92 = tpu.matmul %73, %82, %cst_52 {dimension_numbers = #tpu.dot_dimension_numbers<[1], [1], [0], [0], [0, 0, 1, 0], [], []>} : vector<8x8xf32>, vector<8x8xf32>, vector<8x8xf32> -> vector<8x8xf32>
    %93 = arith.index_cast %c1_i32 : i32 to index
    %c0_53 = arith.constant 0 : index
    %c0_54 = arith.constant 0 : index
    %c0_55 = arith.constant 0 : index
    %94 = vector.load %arg4[%93, %c0_53, %c0_54, %c0_55] : memref<4x1x8x8xf32, #tpu.memory_space<vmem>>, vector<1x1x8x8xf32>
    %95 = vector.shape_cast %94 : vector<1x1x8x8xf32> to vector<1x8x8xf32>
    %96 = vector.shape_cast %95 : vector<1x8x8xf32> to vector<8x8xf32>
    %97 = arith.addf %92, %96 : vector<8x8xf32>
    %cst_56 = arith.constant dense<0xFF800000> : vector<8xf32>
    %98 = vector.multi_reduction <maximumf>, %97, %cst_56 [1] : vector<8x8xf32> to vector<8xf32>
    %99 = vector.shape_cast %98 : vector<8xf32> to vector<8x1xf32>
    %100 = vector.broadcast %99 : vector<8x1xf32> to vector<8x8xf32>
    %101 = arith.subf %97, %100 : vector<8x8xf32>
    %102 = math.exp %101 : vector<8x8xf32>
    %cst_57 = arith.constant dense<0.000000e+00> : vector<8xf32>
    %103 = vector.multi_reduction <add>, %102, %cst_57 [1] : vector<8x8xf32> to vector<8xf32>
    %104 = vector.shape_cast %103 : vector<8xf32> to vector<8x1xf32>
    %105 = tpu.reciprocal %104 {approx = true} : vector<8x1xf32> -> vector<8x1xf32>
    %106 = arith.mulf %104, %105 : vector<8x1xf32>
    %cst_58 = arith.constant 2.000000e+00 : f32
    %107 = vector.broadcast %cst_58 : f32 to vector<8x1xf32>
    %108 = arith.subf %107, %106 : vector<8x1xf32>
    %109 = arith.mulf %105, %108 : vector<8x1xf32>
    %110 = vector.broadcast %109 : vector<8x1xf32> to vector<8x8xf32>
    %111 = arith.mulf %102, %110 : vector<8x8xf32>
    %112 = vector.shape_cast %111 : vector<8x8xf32> to vector<1x8x8xf32>
    %113 = arith.index_cast %c1_i32 : i32 to index
    %c0_59 = arith.constant 0 : index
    %c0_60 = arith.constant 0 : index
    %c0_61 = arith.constant 0 : index
    %114 = vector.load %arg16[%113, %c0_59, %c0_60, %c0_61] : memref<4x1x8x8xf32, #tpu.memory_space<vmem>>, vector<1x1x8x8xf32>
    %115 = vector.shape_cast %114 : vector<1x1x8x8xf32> to vector<1x8x8xf32>
    %116 = vector.shape_cast %112 : vector<1x8x8xf32> to vector<1x1x8x8xf32>
    tpu.vector_store %arg16[%113, %c0_59, %c0_60, %c0_61], %116 {strides = array<i32>} : memref<4x1x8x8xf32, #tpu.memory_space<vmem>>, vector<1x1x8x8xf32>,
    %cst_62 = arith.constant dense<0.000000e+00> : vector<8x8xf32>
    %117 = tpu.matmul %111, %91, %cst_62 {dimension_numbers = #tpu.dot_dimension_numbers<[1], [0], [0], [1], [0, 0, 1, 1], [], []>} : vector<8x8xf32>, vector<8x8xf32>, vector<8x8xf32> -> vector<8x8xf32>
    %118 = arith.index_cast %c1_i32 : i32 to index
    %c0_63 = arith.constant 0 : index
    %c0_64 = arith.constant 0 : index
    %119 = vector.load %arg11[%118, %c0_63, %c0_64] : memref<4x8x32xf32, #tpu.memory_space<vmem>>, vector<1x8x32xf32>
    %120 = vector.shape_cast %119 : vector<1x8x32xf32> to vector<8x32xf32>
    %cst_65 = arith.constant dense<0.000000e+00> : vector<8x32xf32>
    %121 = tpu.matmul %117, %120, %cst_65 {dimension_numbers = #tpu.dot_dimension_numbers<[1], [0], [0], [1], [0, 0, 1, 1], [], []>} : vector<8x8xf32>, vector<8x32xf32>, vector<8x32xf32> -> vector<8x32xf32>
    %122 = arith.addf %64, %121 : vector<8x32xf32>
    %c2_i32 = arith.constant 2 : i32
    %123 = arith.index_cast %c2_i32 : i32 to index
    %c0_66 = arith.constant 0 : index
    %c0_67 = arith.constant 0 : index
    %124 = vector.load %arg5[%123, %c0_66, %c0_67] : memref<4x32x8xf32, #tpu.memory_space<vmem>>, vector<1x32x8xf32>
    %125 = vector.shape_cast %124 : vector<1x32x8xf32> to vector<32x8xf32>
    %cst_68 = arith.constant dense<0.000000e+00> : vector<8x8xf32>
    %126 = tpu.matmul %1, %125, %cst_68 {dimension_numbers = #tpu.dot_dimension_numbers<[1], [0], [0], [1], [0, 0, 1, 1], [], []>} : vector<8x32xf32>, vector<32x8xf32>, vector<8x8xf32> -> vector<8x8xf32>
    %127 = arith.index_cast %c2_i32 : i32 to index
    %c0_69 = arith.constant 0 : index
    %c0_70 = arith.constant 0 : index
    %128 = vector.load %arg6[%127, %c0_69, %c0_70] : memref<4x1x8xf32, #tpu.memory_space<vmem>>, vector<1x1x8xf32>
    %129 = vector.shape_cast %128 : vector<1x1x8xf32> to vector<1x8xf32>
    %130 = vector.broadcast %129 : vector<1x8xf32> to vector<8x8xf32>
    %131 = arith.addf %126, %130 : vector<8x8xf32>
    %132 = arith.index_cast %c2_i32 : i32 to index
    %c0_71 = arith.constant 0 : index
    %c0_72 = arith.constant 0 : index
    %133 = vector.load %arg7[%132, %c0_71, %c0_72] : memref<4x32x8xf32, #tpu.memory_space<vmem>>, vector<1x32x8xf32>
    %134 = vector.shape_cast %133 : vector<1x32x8xf32> to vector<32x8xf32>
    %cst_73 = arith.constant dense<0.000000e+00> : vector<8x8xf32>
    %135 = tpu.matmul %3, %134, %cst_73 {dimension_numbers = #tpu.dot_dimension_numbers<[1], [0], [0], [1], [0, 0, 1, 1], [], []>} : vector<8x32xf32>, vector<32x8xf32>, vector<8x8xf32> -> vector<8x8xf32>
    %136 = arith.index_cast %c2_i32 : i32 to index
    %c0_74 = arith.constant 0 : index
    %c0_75 = arith.constant 0 : index
    %137 = vector.load %arg8[%136, %c0_74, %c0_75] : memref<4x1x8xf32, #tpu.memory_space<vmem>>, vector<1x1x8xf32>
    %138 = vector.shape_cast %137 : vector<1x1x8xf32> to vector<1x8xf32>
    %139 = vector.broadcast %138 : vector<1x8xf32> to vector<8x8xf32>
    %140 = arith.addf %135, %139 : vector<8x8xf32>
    %141 = arith.index_cast %c2_i32 : i32 to index
    %c0_76 = arith.constant 0 : index
    %c0_77 = arith.constant 0 : index
    %142 = vector.load %arg9[%141, %c0_76, %c0_77] : memref<4x32x8xf32, #tpu.memory_space<vmem>>, vector<1x32x8xf32>
    %143 = vector.shape_cast %142 : vector<1x32x8xf32> to vector<32x8xf32>
    %cst_78 = arith.constant dense<0.000000e+00> : vector<8x8xf32>
    %144 = tpu.matmul %5, %143, %cst_78 {dimension_numbers = #tpu.dot_dimension_numbers<[1], [0], [0], [1], [0, 0, 1, 1], [], []>} : vector<8x32xf32>, vector<32x8xf32>, vector<8x8xf32> -> vector<8x8xf32>
    %145 = arith.index_cast %c2_i32 : i32 to index
    %c0_79 = arith.constant 0 : index
    %c0_80 = arith.constant 0 : index
    %146 = vector.load %arg10[%145, %c0_79, %c0_80] : memref<4x1x8xf32, #tpu.memory_space<vmem>>, vector<1x1x8xf32>
    %147 = vector.shape_cast %146 : vector<1x1x8xf32> to vector<1x8xf32>
    %148 = vector.broadcast %147 : vector<1x8xf32> to vector<8x8xf32>
    %149 = arith.addf %144, %148 : vector<8x8xf32>
    %cst_81 = arith.constant dense<0.000000e+00> : vector<8x8xf32>
    %150 = tpu.matmul %131, %140, %cst_81 {dimension_numbers = #tpu.dot_dimension_numbers<[1], [1], [0], [0], [0, 0, 1, 0], [], []>} : vector<8x8xf32>, vector<8x8xf32>, vector<8x8xf32> -> vector<8x8xf32>
    %151 = arith.index_cast %c2_i32 : i32 to index
    %c0_82 = arith.constant 0 : index
    %c0_83 = arith.constant 0 : index
    %c0_84 = arith.constant 0 : index
    %152 = vector.load %arg4[%151, %c0_82, %c0_83, %c0_84] : memref<4x1x8x8xf32, #tpu.memory_space<vmem>>, vector<1x1x8x8xf32>
    %153 = vector.shape_cast %152 : vector<1x1x8x8xf32> to vector<1x8x8xf32>
    %154 = vector.shape_cast %153 : vector<1x8x8xf32> to vector<8x8xf32>
    %155 = arith.addf %150, %154 : vector<8x8xf32>
    %cst_85 = arith.constant dense<0xFF800000> : vector<8xf32>
    %156 = vector.multi_reduction <maximumf>, %155, %cst_85 [1] : vector<8x8xf32> to vector<8xf32>
    %157 = vector.shape_cast %156 : vector<8xf32> to vector<8x1xf32>
    %158 = vector.broadcast %157 : vector<8x1xf32> to vector<8x8xf32>
    %159 = arith.subf %155, %158 : vector<8x8xf32>
    %160 = math.exp %159 : vector<8x8xf32>
    %cst_86 = arith.constant dense<0.000000e+00> : vector<8xf32>
    %161 = vector.multi_reduction <add>, %160, %cst_86 [1] : vector<8x8xf32> to vector<8xf32>
    %162 = vector.shape_cast %161 : vector<8xf32> to vector<8x1xf32>
    %163 = tpu.reciprocal %162 {approx = true} : vector<8x1xf32> -> vector<8x1xf32>
    %164 = arith.mulf %162, %163 : vector<8x1xf32>
    %cst_87 = arith.constant 2.000000e+00 : f32
    %165 = vector.broadcast %cst_87 : f32 to vector<8x1xf32>
    %166 = arith.subf %165, %164 : vector<8x1xf32>
    %167 = arith.mulf %163, %166 : vector<8x1xf32>
    %168 = vector.broadcast %167 : vector<8x1xf32> to vector<8x8xf32>
    %169 = arith.mulf %160, %168 : vector<8x8xf32>
    %170 = vector.shape_cast %169 : vector<8x8xf32> to vector<1x8x8xf32>
    %171 = arith.index_cast %c2_i32 : i32 to index
    %c0_88 = arith.constant 0 : index
    %c0_89 = arith.constant 0 : index
    %c0_90 = arith.constant 0 : index
    %172 = vector.load %arg16[%171, %c0_88, %c0_89, %c0_90] : memref<4x1x8x8xf32, #tpu.memory_space<vmem>>, vector<1x1x8x8xf32>
    %173 = vector.shape_cast %172 : vector<1x1x8x8xf32> to vector<1x8x8xf32>
    %174 = vector.shape_cast %170 : vector<1x8x8xf32> to vector<1x1x8x8xf32>
    tpu.vector_store %arg16[%171, %c0_88, %c0_89, %c0_90], %174 {strides = array<i32>} : memref<4x1x8x8xf32, #tpu.memory_space<vmem>>, vector<1x1x8x8xf32>,
    %cst_91 = arith.constant dense<0.000000e+00> : vector<8x8xf32>
    %175 = tpu.matmul %169, %149, %cst_91 {dimension_numbers = #tpu.dot_dimension_numbers<[1], [0], [0], [1], [0, 0, 1, 1], [], []>} : vector<8x8xf32>, vector<8x8xf32>, vector<8x8xf32> -> vector<8x8xf32>
    %176 = arith.index_cast %c2_i32 : i32 to index
    %c0_92 = arith.constant 0 : index
    %c0_93 = arith.constant 0 : index
    %177 = vector.load %arg11[%176, %c0_92, %c0_93] : memref<4x8x32xf32, #tpu.memory_space<vmem>>, vector<1x8x32xf32>
    %178 = vector.shape_cast %177 : vector<1x8x32xf32> to vector<8x32xf32>
    %cst_94 = arith.constant dense<0.000000e+00> : vector<8x32xf32>
    %179 = tpu.matmul %175, %178, %cst_94 {dimension_numbers = #tpu.dot_dimension_numbers<[1], [0], [0], [1], [0, 0, 1, 1], [], []>} : vector<8x8xf32>, vector<8x32xf32>, vector<8x32xf32> -> vector<8x32xf32>
    %180 = arith.addf %122, %179 : vector<8x32xf32>
    %c3_i32 = arith.constant 3 : i32
    %181 = arith.index_cast %c3_i32 : i32 to index
    %c0_95 = arith.constant 0 : index
    %c0_96 = arith.constant 0 : index
    %182 = vector.load %arg5[%181, %c0_95, %c0_96] : memref<4x32x8xf32, #tpu.memory_space<vmem>>, vector<1x32x8xf32>
    %183 = vector.shape_cast %182 : vector<1x32x8xf32> to vector<32x8xf32>
    %cst_97 = arith.constant dense<0.000000e+00> : vector<8x8xf32>
    %184 = tpu.matmul %1, %183, %cst_97 {dimension_numbers = #tpu.dot_dimension_numbers<[1], [0], [0], [1], [0, 0, 1, 1], [], []>} : vector<8x32xf32>, vector<32x8xf32>, vector<8x8xf32> -> vector<8x8xf32>
    %185 = arith.index_cast %c3_i32 : i32 to index
    %c0_98 = arith.constant 0 : index
    %c0_99 = arith.constant 0 : index
    %186 = vector.load %arg6[%185, %c0_98, %c0_99] : memref<4x1x8xf32, #tpu.memory_space<vmem>>, vector<1x1x8xf32>
    %187 = vector.shape_cast %186 : vector<1x1x8xf32> to vector<1x8xf32>
    %188 = vector.broadcast %187 : vector<1x8xf32> to vector<8x8xf32>
    %189 = arith.addf %184, %188 : vector<8x8xf32>
    %190 = arith.index_cast %c3_i32 : i32 to index
    %c0_100 = arith.constant 0 : index
    %c0_101 = arith.constant 0 : index
    %191 = vector.load %arg7[%190, %c0_100, %c0_101] : memref<4x32x8xf32, #tpu.memory_space<vmem>>, vector<1x32x8xf32>
    %192 = vector.shape_cast %191 : vector<1x32x8xf32> to vector<32x8xf32>
    %cst_102 = arith.constant dense<0.000000e+00> : vector<8x8xf32>
    %193 = tpu.matmul %3, %192, %cst_102 {dimension_numbers = #tpu.dot_dimension_numbers<[1], [0], [0], [1], [0, 0, 1, 1], [], []>} : vector<8x32xf32>, vector<32x8xf32>, vector<8x8xf32> -> vector<8x8xf32>
    %194 = arith.index_cast %c3_i32 : i32 to index
    %c0_103 = arith.constant 0 : index
    %c0_104 = arith.constant 0 : index
    %195 = vector.load %arg8[%194, %c0_103, %c0_104] : memref<4x1x8xf32, #tpu.memory_space<vmem>>, vector<1x1x8xf32>
    %196 = vector.shape_cast %195 : vector<1x1x8xf32> to vector<1x8xf32>
    %197 = vector.broadcast %196 : vector<1x8xf32> to vector<8x8xf32>
    %198 = arith.addf %193, %197 : vector<8x8xf32>
    %199 = arith.index_cast %c3_i32 : i32 to index
    %c0_105 = arith.constant 0 : index
    %c0_106 = arith.constant 0 : index
    %200 = vector.load %arg9[%199, %c0_105, %c0_106] : memref<4x32x8xf32, #tpu.memory_space<vmem>>, vector<1x32x8xf32>
    %201 = vector.shape_cast %200 : vector<1x32x8xf32> to vector<32x8xf32>
    %cst_107 = arith.constant dense<0.000000e+00> : vector<8x8xf32>
    %202 = tpu.matmul %5, %201, %cst_107 {dimension_numbers = #tpu.dot_dimension_numbers<[1], [0], [0], [1], [0, 0, 1, 1], [], []>} : vector<8x32xf32>, vector<32x8xf32>, vector<8x8xf32> -> vector<8x8xf32>
    %203 = arith.index_cast %c3_i32 : i32 to index
    %c0_108 = arith.constant 0 : index
    %c0_109 = arith.constant 0 : index
    %204 = vector.load %arg10[%203, %c0_108, %c0_109] : memref<4x1x8xf32, #tpu.memory_space<vmem>>, vector<1x1x8xf32>
    %205 = vector.shape_cast %204 : vector<1x1x8xf32> to vector<1x8xf32>
    %206 = vector.broadcast %205 : vector<1x8xf32> to vector<8x8xf32>
    %207 = arith.addf %202, %206 : vector<8x8xf32>
    %cst_110 = arith.constant dense<0.000000e+00> : vector<8x8xf32>
    %208 = tpu.matmul %189, %198, %cst_110 {dimension_numbers = #tpu.dot_dimension_numbers<[1], [1], [0], [0], [0, 0, 1, 0], [], []>} : vector<8x8xf32>, vector<8x8xf32>, vector<8x8xf32> -> vector<8x8xf32>
    %209 = arith.index_cast %c3_i32 : i32 to index
    %c0_111 = arith.constant 0 : index
    %c0_112 = arith.constant 0 : index
    %c0_113 = arith.constant 0 : index
    %210 = vector.load %arg4[%209, %c0_111, %c0_112, %c0_113] : memref<4x1x8x8xf32, #tpu.memory_space<vmem>>, vector<1x1x8x8xf32>
    %211 = vector.shape_cast %210 : vector<1x1x8x8xf32> to vector<1x8x8xf32>
    %212 = vector.shape_cast %211 : vector<1x8x8xf32> to vector<8x8xf32>
    %213 = arith.addf %208, %212 : vector<8x8xf32>
    %cst_114 = arith.constant dense<0xFF800000> : vector<8xf32>
    %214 = vector.multi_reduction <maximumf>, %213, %cst_114 [1] : vector<8x8xf32> to vector<8xf32>
    %215 = vector.shape_cast %214 : vector<8xf32> to vector<8x1xf32>
    %216 = vector.broadcast %215 : vector<8x1xf32> to vector<8x8xf32>
    %217 = arith.subf %213, %216 : vector<8x8xf32>
    %218 = math.exp %217 : vector<8x8xf32>
    %cst_115 = arith.constant dense<0.000000e+00> : vector<8xf32>
    %219 = vector.multi_reduction <add>, %218, %cst_115 [1] : vector<8x8xf32> to vector<8xf32>
    %220 = vector.shape_cast %219 : vector<8xf32> to vector<8x1xf32>
    %221 = tpu.reciprocal %220 {approx = true} : vector<8x1xf32> -> vector<8x1xf32>
    %222 = arith.mulf %220, %221 : vector<8x1xf32>
    %cst_116 = arith.constant 2.000000e+00 : f32
    %223 = vector.broadcast %cst_116 : f32 to vector<8x1xf32>
    %224 = arith.subf %223, %222 : vector<8x1xf32>
    %225 = arith.mulf %221, %224 : vector<8x1xf32>
    %226 = vector.broadcast %225 : vector<8x1xf32> to vector<8x8xf32>
    %227 = arith.mulf %218, %226 : vector<8x8xf32>
    %228 = vector.shape_cast %227 : vector<8x8xf32> to vector<1x8x8xf32>
    %229 = arith.index_cast %c3_i32 : i32 to index
    %c0_117 = arith.constant 0 : index
    %c0_118 = arith.constant 0 : index
    %c0_119 = arith.constant 0 : index
    %230 = vector.load %arg16[%229, %c0_117, %c0_118, %c0_119] : memref<4x1x8x8xf32, #tpu.memory_space<vmem>>, vector<1x1x8x8xf32>
    %231 = vector.shape_cast %230 : vector<1x1x8x8xf32> to vector<1x8x8xf32>
    %232 = vector.shape_cast %228 : vector<1x8x8xf32> to vector<1x1x8x8xf32>
    tpu.vector_store %arg16[%229, %c0_117, %c0_118, %c0_119], %232 {strides = array<i32>} : memref<4x1x8x8xf32, #tpu.memory_space<vmem>>, vector<1x1x8x8xf32>,
    %cst_120 = arith.constant dense<0.000000e+00> : vector<8x8xf32>
    %233 = tpu.matmul %227, %207, %cst_120 {dimension_numbers = #tpu.dot_dimension_numbers<[1], [0], [0], [1], [0, 0, 1, 1], [], []>} : vector<8x8xf32>, vector<8x8xf32>, vector<8x8xf32> -> vector<8x8xf32>
    %234 = arith.index_cast %c3_i32 : i32 to index
    %c0_121 = arith.constant 0 : index
    %c0_122 = arith.constant 0 : index
    %235 = vector.load %arg11[%234, %c0_121, %c0_122] : memref<4x8x32xf32, #tpu.memory_space<vmem>>, vector<1x8x32xf32>
    %236 = vector.shape_cast %235 : vector<1x8x32xf32> to vector<8x32xf32>
    %cst_123 = arith.constant dense<0.000000e+00> : vector<8x32xf32>
    %237 = tpu.matmul %233, %236, %cst_123 {dimension_numbers = #tpu.dot_dimension_numbers<[1], [0], [0], [1], [0, 0, 1, 1], [], []>} : vector<8x8xf32>, vector<8x32xf32>, vector<8x32xf32> -> vector<8x32xf32>
    %238 = arith.addf %180, %237 : vector<8x32xf32>
    %c4_i32 = arith.constant 4 : i32
    %c0_124 = arith.constant 0 : index
    %c0_125 = arith.constant 0 : index
    %239 = vector.load %arg12[%c0_124, %c0_125] : memref<1x32xf32, #tpu.memory_space<vmem>>, vector<1x32xf32>
    %240 = vector.broadcast %239 : vector<1x32xf32> to vector<8x32xf32>
    %241 = arith.addf %238, %240 : vector<8x32xf32>
    %242 = arith.addf %241, %1 : vector<8x32xf32>
    %cst_126 = arith.constant dense<0.000000e+00> : vector<8xf32>
    %243 = vector.multi_reduction <add>, %242, %cst_126 [1] : vector<8x32xf32> to vector<8xf32>
    %244 = vector.shape_cast %243 : vector<8xf32> to vector<8x1xf32>
    %cst_127 = arith.constant 3.200000e+01 : f32
    %245 = vector.broadcast %cst_127 : f32 to vector<8x1xf32>
    %246 = arith.divf %244, %245 : vector<8x1xf32>
    %247 = vector.broadcast %246 : vector<8x1xf32> to vector<8x32xf32>
    %248 = arith.subf %242, %247 : vector<8x32xf32>
    %249 = arith.mulf %248, %248 : vector<8x32xf32>
    %cst_128 = arith.constant dense<0.000000e+00> : vector<8xf32>
    %250 = vector.multi_reduction <add>, %249, %cst_128 [1] : vector<8x32xf32> to vector<8xf32>
    %251 = vector.shape_cast %250 : vector<8xf32> to vector<8x1xf32>
    %cst_129 = arith.constant 3.200000e+01 : f32
    %252 = vector.broadcast %cst_129 : f32 to vector<8x1xf32>
    %253 = arith.divf %251, %252 : vector<8x1xf32>
    %cst_130 = arith.constant 9.99999974E-6 : f32
    %254 = vector.broadcast %cst_130 : f32 to vector<8x1xf32>
    %255 = arith.addf %253, %254 : vector<8x1xf32>
    %256 = math.rsqrt %255 : vector<8x1xf32>
    %257 = vector.broadcast %256 : vector<8x1xf32> to vector<8x32xf32>
    %258 = arith.mulf %248, %257 : vector<8x32xf32>
    %c0_131 = arith.constant 0 : index
    %c0_132 = arith.constant 0 : index
    %259 = vector.load %arg13[%c0_131, %c0_132] : memref<1x32xf32, #tpu.memory_space<vmem>>, vector<1x32xf32>
    %260 = vector.broadcast %259 : vector<1x32xf32> to vector<8x32xf32>
    %261 = arith.mulf %258, %260 : vector<8x32xf32>
    %c0_133 = arith.constant 0 : index
    %c0_134 = arith.constant 0 : index
    %262 = vector.load %arg14[%c0_133, %c0_134] : memref<1x32xf32, #tpu.memory_space<vmem>>, vector<1x32xf32>
    %263 = vector.broadcast %262 : vector<1x32xf32> to vector<8x32xf32>
    %264 = arith.addf %261, %263 : vector<8x32xf32>
    %c0_135 = arith.constant 0 : index
    %c0_136 = arith.constant 0 : index
    %c0_137 = arith.constant 0 : index
    %265 = vector.load %arg15[%c0_135, %c0_136, %c0_137] : memref<1x8x32xf32, #tpu.memory_space<vmem>>, vector<1x8x32xf32>
    %266 = vector.shape_cast %265 : vector<1x8x32xf32> to vector<8x32xf32>
    %267 = vector.shape_cast %264 : vector<8x32xf32> to vector<1x8x32xf32>
    tpu.vector_store %arg15[%c0_135, %c0_136, %c0_137], %267 {strides = array<i32>} : memref<1x8x32xf32, #tpu.memory_space<vmem>>, vector<1x8x32xf32>,
    return
  }
  func.func @transform_0(%arg0: i32) -> (i32, i32, i32) {
    %c0_i32 = arith.constant 0 : i32
    %c0_i32_0 = arith.constant 0 : i32
    %c0_i32_1 = arith.constant 0 : i32
    return %arg0, %c0_i32, %c0_i32_0 : i32, i32, i32
  }
  func.func @transform_1(%arg0: i32) -> (i32, i32, i32) {
    %c0_i32 = arith.constant 0 : i32
    %c0_i32_0 = arith.constant 0 : i32
    %c0_i32_1 = arith.constant 0 : i32
    return %arg0, %c0_i32, %c0_i32_0 : i32, i32, i32
  }
  func.func @transform_2(%arg0: i32) -> (i32, i32, i32) {
    %c0_i32 = arith.constant 0 : i32
    %c0_i32_0 = arith.constant 0 : i32
    %c0_i32_1 = arith.constant 0 : i32
    return %arg0, %c0_i32, %c0_i32_0 : i32, i32, i32
  }
  func.func @transform_3(%arg0: i32) -> (i32, i32, i32, i32) {
    %c0_i32 = arith.constant 0 : i32
    %c0_i32_0 = arith.constant 0 : i32
    %c0_i32_1 = arith.constant 0 : i32
    %c0_i32_2 = arith.constant 0 : i32
    return %c0_i32, %arg0, %c0_i32_0, %c0_i32_1 : i32, i32, i32, i32
  }
  func.func @transform_4(%arg0: i32) -> (i32, i32, i32) {
    %c0_i32 = arith.constant 0 : i32
    %c0_i32_0 = arith.constant 0 : i32
    %c0_i32_1 = arith.constant 0 : i32
    %c0_i32_2 = arith.constant 0 : i32
    return %c0_i32, %c0_i32_0, %c0_i32_1 : i32, i32, i32
  }
  func.func @transform_5(%arg0: i32) -> (i32, i32, i32) {
    %c0_i32 = arith.constant 0 : i32
    %c0_i32_0 = arith.constant 0 : i32
    %c0_i32_1 = arith.constant 0 : i32
    %c0_i32_2 = arith.constant 0 : i32
    return %c0_i32, %c0_i32_0, %c0_i32_1 : i32, i32, i32
  }
  func.func @transform_6(%arg0: i32) -> (i32, i32, i32) {
    %c0_i32 = arith.constant 0 : i32
    %c0_i32_0 = arith.constant 0 : i32
    %c0_i32_1 = arith.constant 0 : i32
    %c0_i32_2 = arith.constant 0 : i32
    return %c0_i32, %c0_i32_0, %c0_i32_1 : i32, i32, i32
  }
  func.func @transform_7(%arg0: i32) -> (i32, i32, i32) {
    %c0_i32 = arith.constant 0 : i32
    %c0_i32_0 = arith.constant 0 : i32
    %c0_i32_1 = arith.constant 0 : i32
    %c0_i32_2 = arith.constant 0 : i32
    return %c0_i32, %c0_i32_0, %c0_i32_1 : i32, i32, i32
  }
  func.func @transform_8(%arg0: i32) -> (i32, i32, i32) {
    %c0_i32 = arith.constant 0 : i32
    %c0_i32_0 = arith.constant 0 : i32
    %c0_i32_1 = arith.constant 0 : i32
    %c0_i32_2 = arith.constant 0 : i32
    return %c0_i32, %c0_i32_0, %c0_i32_1 : i32, i32, i32
  }
  func.func @transform_9(%arg0: i32) -> (i32, i32, i32) {
    %c0_i32 = arith.constant 0 : i32
    %c0_i32_0 = arith.constant 0 : i32
    %c0_i32_1 = arith.constant 0 : i32
    %c0_i32_2 = arith.constant 0 : i32
    return %c0_i32, %c0_i32_0, %c0_i32_1 : i32, i32, i32
  }
  func.func @transform_10(%arg0: i32) -> (i32, i32, i32) {
    %c0_i32 = arith.constant 0 : i32
    %c0_i32_0 = arith.constant 0 : i32
    %c0_i32_1 = arith.constant 0 : i32
    %c0_i32_2 = arith.constant 0 : i32
    return %c0_i32, %c0_i32_0, %c0_i32_1 : i32, i32, i32
  }
  func.func @transform_11(%arg0: i32) -> (i32, i32) {
    %c0_i32 = arith.constant 0 : i32
    %c0_i32_0 = arith.constant 0 : i32
    %c0_i32_1 = arith.constant 0 : i32
    return %c0_i32, %c0_i32_0 : i32, i32
  }
  func.func @transform_12(%arg0: i32) -> (i32, i32) {
    %c0_i32 = arith.constant 0 : i32
    %c0_i32_0 = arith.constant 0 : i32
    %c0_i32_1 = arith.constant 0 : i32
    return %c0_i32, %c0_i32_0 : i32, i32
  }
  func.func @transform_13(%arg0: i32) -> (i32, i32) {
    %c0_i32 = arith.constant 0 : i32
    %c0_i32_0 = arith.constant 0 : i32
    %c0_i32_1 = arith.constant 0 : i32
    return %c0_i32, %c0_i32_0 : i32, i32
  }
  func.func @transform_14(%arg0: i32) -> (i32, i32, i32) {
    %c0_i32 = arith.constant 0 : i32
    %c0_i32_0 = arith.constant 0 : i32
    %c0_i32_1 = arith.constant 0 : i32
    return %arg0, %c0_i32, %c0_i32_0 : i32, i32, i32
  }
  func.func @transform_15(%arg0: i32) -> (i32, i32, i32, i32) {
    %c0_i32 = arith.constant 0 : i32
    %c0_i32_0 = arith.constant 0 : i32
    %c0_i32_1 = arith.constant 0 : i32
    %c0_i32_2 = arith.constant 0 : i32
    return %c0_i32, %arg0, %c0_i32_0, %c0_i32_1 : i32, i32, i32, i32
  }
}

</mosaic_0001>

<llo_original>
// kernel: tpu_custom_call.1
$region0: #{tpu_custom_call.1}
  #allocation0 [shape = 'u32[]', space=smem, size = 0x4, offset = 0x4, fixed_abs, tag = 'smem constant byte address 0x4 - core index']
  #allocation1 [shape = 'u32[144,128]{1,0:T(1,128)}', space=vmem, size = 0x12000, scoped, tag = 'internal scratch']
  %s0 = inlined_call_operand.vmem [shape: f32[2,8,32], index: 0, kind: input, shape index: {}]
  %s1 = inlined_call_operand.vmem [shape: f32[2,8,32], index: 1, kind: input, shape index: {}]
  %s2 = inlined_call_operand.vmem [shape: f32[2,8,32], index: 2, kind: input, shape index: {}]
  %s3 = inlined_call_operand.vmem [shape: f32[4,2,8,8], index: 3, kind: input, shape index: {}]
  %s4 = inlined_call_operand.vmem [shape: f32[4,32,8], index: 4, kind: input, shape index: {}]
  %s5 = inlined_call_operand.vmem [shape: f32[4,1,8], index: 5, kind: input, shape index: {}]
  %s6 = inlined_call_operand.vmem [shape: f32[4,32,8], index: 6, kind: input, shape index: {}]
  %s7 = inlined_call_operand.vmem [shape: f32[4,1,8], index: 7, kind: input, shape index: {}]
  %s8 = inlined_call_operand.vmem [shape: f32[4,32,8], index: 8, kind: input, shape index: {}]
  %s9 = inlined_call_operand.vmem [shape: f32[4,1,8], index: 9, kind: input, shape index: {}]
  %s10 = inlined_call_operand.vmem [shape: f32[4,8,32], index: 10, kind: input, shape index: {}]
  %s11 = inlined_call_operand.vmem [shape: f32[1,32], index: 11, kind: input, shape index: {}]
  %s12 = inlined_call_operand.vmem [shape: f32[1,32], index: 12, kind: input, shape index: {}]
  %s13 = inlined_call_operand.vmem [shape: f32[1,32], index: 13, kind: input, shape index: {}]
  %s14 = inlined_call_operand.hbm [shape: f32[2,8,32], index: 14, kind: output, shape index: {0}]
  %s15 = inlined_call_operand.hbm [shape: f32[4,2,8,8], index: 15, kind: output, shape index: {1}]
  %16 = xla_tuple %s14, %s15
  %s17 = sld [smem:[#allocation0]]
  $region135: #{tpu_custom_call.1} parent=0
    _
  %s19 = ssub.s32 1, %s17
  %s20 = scalar_select 0, %s19, %s17
  $region1: #{tpu_custom_call.1} parent=0
    #allocation2 [shape = 'u8[32768]{0}', space=vmem, size = 0x8000, scoped, tag = 'input window, operand 3']
    #allocation3 [shape = 'u8[8192]{0}', space=vmem, size = 0x2000, scoped, tag = 'output window, operand 0']
    #allocation4 [shape = 's32[2]{0}', space=sflag, size = 0x8, scoped, tag = 'scoped memory for tpu_custom_call.1']
    #allocation5 [shape = 'u8[32768]{0}', space=vmem, size = 0x8000, scoped, tag = 'output window, operand 1']
    #allocation6 [shape = 's32[2]{0}', space=sflag, size = 0x8, scoped, tag = 'scoped memory for tpu_custom_call.1']
    %21 = vsyncpa [#allocation4], 0
    %s22 = scalar_lea.sflag [#allocation4], 1
    %23 = vsyncpa %s22, 0
    %24 = vsyncpa [#allocation6], 0
    %s25 = scalar_lea.sflag [#allocation6], 1
    %26 = vsyncpa %s25, 0
    loop: start=0, step=1, limit=4
    $region2: #{tpu_custom_call.1} parent=1 // loop_pre_header
      _
    $region3: #{tpu_custom_call.1} parent=1 // loop_header
      %s28 = sphi 0, %s32
      %p29 = scmp.ge.s32.totalorder %s28, 4
      %s38 = sphi 0, %s40
      %s41 = sphi 0, %s38
      %s42 = sphi 0, %s41
      %s58 = sphi 0, %s42
      %s64 = sphi 0, %s66
      %s67 = sphi 0, %s64
      %s68 = sphi 0, %s67
      %s84 = sphi 0, %s68
      %s90 = sphi 0, %s92
      %s93 = sphi 0, %s90
      %s94 = sphi 0, %s93
      %s110 = sphi 0, %s94
      %s116 = sphi 0, %s118
      %s119 = sphi 0, %s116
      %s120 = sphi 0, %s119
      %s136 = sphi 0, %s120
      %s140 = sphi 0, %s140
      %s142 = sphi 0, %s140
      %s143 = sphi 0, %s142
      %s157 = sphi 0, %s143
      %s161 = sphi 0, %s161
      %s163 = sphi 0, %s161
      %s164 = sphi 0, %s163
      %s178 = sphi 0, %s164
      %s182 = sphi 0, %s182
      %s184 = sphi 0, %s182
      %s185 = sphi 0, %s184
      %s199 = sphi 0, %s185
      %s203 = sphi 0, %s203
      %s205 = sphi 0, %s203
      %s206 = sphi 0, %s205
      %s220 = sphi 0, %s206
      %s224 = sphi 0, %s224
      %s226 = sphi 0, %s224
      %s227 = sphi 0, %s226
      %s241 = sphi 0, %s227
      %s245 = sphi 0, %s245
      %s247 = sphi 0, %s245
      %s248 = sphi 0, %s247
      %s262 = sphi 0, %s248
      %s266 = sphi 0, %s266
      %s268 = sphi 0, %s266
      %s269 = sphi 0, %s268
      %s283 = sphi 0, %s269
      %s287 = sphi 0, %s287
      %s289 = sphi 0, %s287
      %s290 = sphi 0, %s289
      %s304 = sphi 0, %s290
      %s308 = sphi 0, %s308
      %s310 = sphi 0, %s308
      %s311 = sphi 0, %s310
      %s325 = sphi 0, %s311
      %s329 = sphi 0, %s329
      %s331 = sphi 0, %s329
      %s332 = sphi 0, %s331
      %s346 = sphi 0, %s332
      %s352 = sphi 0, %s354
      %s355 = sphi 0, %s352
      %s356 = sphi 0, %s355
      %s372 = sphi 0, %s356
      %s378 = sphi 0, %s380
      %s381 = sphi 0, %s378
      %s382 = sphi 0, %s381
      %s398 = sphi 0, %s382
    $region4: #{tpu_custom_call.1} parent=1 // loop_header_branch
      %31 = sbr.rel (%p29) target = $region8
    $region5: #{tpu_custom_call.1} parent=1 // loop_body
      %s33 = ssub.s32 %s28, 1
      %s34 = ssub.s32 %s28, 2
      %s35 = sadd.s32 %s28, 1
      %s36 = ssub.s32 %s28, %s35
      %p37 = scmp.eq.s32.totalorder %s36, 0
      %s39 = sadd.s32 %s38, 1
      %s40 = scalar_select %p37, %s38, %s39
      %p43 = pneg %p37
      %p44 = scmp.eq.s32.totalorder %s28, 1
      %p45 = por %p43, %p44
      %p46 = scmp.ne.s32.totalorder %s38, %s41
      %p47 = scmp.eq.s32.totalorder %s28, 0
      %p48 = por %p46, %p47
      %p49 = scmp.ne.s32.totalorder %s38, %s41
      %p50 = scmp.eq.s32.totalorder %s33, 1
      %p51 = por %p49, %p50
      %p52 = scmp.ne.s32.totalorder %s41, %s42
      %p53 = scmp.eq.s32.totalorder %s33, 0
      %p54 = por %p52, %p53
      %p55 = scmp.ne.s32.totalorder %s41, %s42
      %p56 = scmp.eq.s32.totalorder %s34, 1
      %p57 = por %p55, %p56
      %p59 = scmp.ne.s32.totalorder %s42, %s58
      %p60 = scmp.eq.s32.totalorder %s34, 0
      %p61 = por %p59, %p60
      %s62 = ssub.s32 %s28, %s35
      %p63 = scmp.eq.s32.totalorder %s62, 0
      %s65 = sadd.s32 %s64, 1
      %s66 = scalar_select %p63, %s64, %s65
      %p69 = pneg %p63
      %p70 = scmp.eq.s32.totalorder %s28, 1
      %p71 = por %p69, %p70
      %p72 = scmp.ne.s32.totalorder %s64, %s67
      %p73 = scmp.eq.s32.totalorder %s28, 0
      %p74 = por %p72, %p73
      %p75 = scmp.ne.s32.totalorder %s64, %s67
      %p76 = scmp.eq.s32.totalorder %s33, 1
      %p77 = por %p75, %p76
      %p78 = scmp.ne.s32.totalorder %s67, %s68
      %p79 = scmp.eq.s32.totalorder %s33, 0
      %p80 = por %p78, %p79
      %p81 = scmp.ne.s32.totalorder %s67, %s68
      %p82 = scmp.eq.s32.totalorder %s34, 1
      %p83 = por %p81, %p82
      %p85 = scmp.ne.s32.totalorder %s68, %s84
      %p86 = scmp.eq.s32.totalorder %s34, 0
      %p87 = por %p85, %p86
      %s88 = ssub.s32 %s28, %s35
      %p89 = scmp.eq.s32.totalorder %s88, 0
      %s91 = sadd.s32 %s90, 1
      %s92 = scalar_select %p89, %s90, %s91
      %p95 = pneg %p89
      %p96 = scmp.eq.s32.totalorder %s28, 1
      %p97 = por %p95, %p96
      %p98 = scmp.ne.s32.totalorder %s90, %s93
      %p99 = scmp.eq.s32.totalorder %s28, 0
      %p100 = por %p98, %p99
      %p101 = scmp.ne.s32.totalorder %s90, %s93
      %p102 = scmp.eq.s32.totalorder %s33, 1
      %p103 = por %p101, %p102
      %p104 = scmp.ne.s32.totalorder %s93, %s94
      %p105 = scmp.eq.s32.totalorder %s33, 0
      %p106 = por %p104, %p105
      %p107 = scmp.ne.s32.totalorder %s93, %s94
      %p108 = scmp.eq.s32.totalorder %s34, 1
      %p109 = por %p107, %p108
      %p111 = scmp.ne.s32.totalorder %s94, %s110
      %p112 = scmp.eq.s32.totalorder %s34, 0
      %p113 = por %p111, %p112
      %s114 = ssub.s32 %s28, %s35
      %p115 = scmp.eq.s32.totalorder %s114, 0
      %s117 = sadd.s32 %s116, 1
      %s118 = scalar_select %p115, %s116, %s117
      %p121 = pneg %p115
      %p122 = scmp.eq.s32.totalorder %s28, 1
      %p123 = por %p121, %p122
      %p124 = scmp.ne.s32.totalorder %s116, %s119
      %p125 = scmp.eq.s32.totalorder %s28, 0
      %p126 = por %p124, %p125
      %p127 = scmp.ne.s32.totalorder %s116, %s119
      %p128 = scmp.eq.s32.totalorder %s33, 1
      %p129 = por %p127, %p128
      %p130 = scmp.ne.s32.totalorder %s119, %s120
      %p131 = scmp.eq.s32.totalorder %s33, 0
      %p132 = por %p130, %p131
      %p133 = scmp.ne.s32.totalorder %s119, %s120
      %p134 = scmp.eq.s32.totalorder %s34, 1
      %p135 = por %p133, %p134
      %p137 = scmp.ne.s32.totalorder %s120, %s136
      %p138 = scmp.eq.s32.totalorder %s34, 0
      %p139 = por %p137, %p138
      %s141 = sadd.s32 %s140, 1
      %p144 = scmp.eq.s32.totalorder %s28, 1
      %p145 = scmp.ne.s32.totalorder %s140, %s142
      %p146 = scmp.eq.s32.totalorder %s28, 0
      %p147 = por %p145, %p146
      %p148 = scmp.ne.s32.totalorder %s140, %s142
      %p149 = scmp.eq.s32.totalorder %s33, 1
      %p150 = por %p148, %p149
      %p151 = scmp.ne.s32.totalorder %s142, %s143
      %p152 = scmp.eq.s32.totalorder %s33, 0
      %p153 = por %p151, %p152
      %p154 = scmp.ne.s32.totalorder %s142, %s143
      %p155 = scmp.eq.s32.totalorder %s34, 1
      %p156 = por %p154, %p155
      %p158 = scmp.ne.s32.totalorder %s143, %s157
      %p159 = scmp.eq.s32.totalorder %s34, 0
      %p160 = por %p158, %p159
      %s162 = sadd.s32 %s161, 1
      %p165 = scmp.eq.s32.totalorder %s28, 1
      %p166 = scmp.ne.s32.totalorder %s161, %s163
      %p167 = scmp.eq.s32.totalorder %s28, 0
      %p168 = por %p166, %p167
      %p169 = scmp.ne.s32.totalorder %s161, %s163
      %p170 = scmp.eq.s32.totalorder %s33, 1
      %p171 = por %p169, %p170
      %p172 = scmp.ne.s32.totalorder %s163, %s164
      %p173 = scmp.eq.s32.totalorder %s33, 0
      %p174 = por %p172, %p173
      %p175 = scmp.ne.s32.totalorder %s163, %s164
      %p176 = scmp.eq.s32.totalorder %s34, 1
      %p177 = por %p175, %p176
      %p179 = scmp.ne.s32.totalorder %s164, %s178
      %p180 = scmp.eq.s32.totalorder %s34, 0
      %p181 = por %p179, %p180
      %s183 = sadd.s32 %s182, 1
      %p186 = scmp.eq.s32.totalorder %s28, 1
      %p187 = scmp.ne.s32.totalorder %s182, %s184
      %p188 = scmp.eq.s32.totalorder %s28, 0
      %p189 = por %p187, %p188
      %p190 = scmp.ne.s32.totalorder %s182, %s184
      %p191 = scmp.eq.s32.totalorder %s33, 1
      %p192 = por %p190, %p191
      %p193 = scmp.ne.s32.totalorder %s184, %s185
      %p194 = scmp.eq.s32.totalorder %s33, 0
      %p195 = por %p193, %p194
      %p196 = scmp.ne.s32.totalorder %s184, %s185
      %p197 = scmp.eq.s32.totalorder %s34, 1
      %p198 = por %p196, %p197
      %p200 = scmp.ne.s32.totalorder %s185, %s199
      %p201 = scmp.eq.s32.totalorder %s34, 0
      %p202 = por %p200, %p201
      %s204 = sadd.s32 %s203, 1
      %p207 = scmp.eq.s32.totalorder %s28, 1
      %p208 = scmp.ne.s32.totalorder %s203, %s205
      %p209 = scmp.eq.s32.totalorder %s28, 0
      %p210 = por %p208, %p209
      %p211 = scmp.ne.s32.totalorder %s203, %s205
      %p212 = scmp.eq.s32.totalorder %s33, 1
      %p213 = por %p211, %p212
      %p214 = scmp.ne.s32.totalorder %s205, %s206
      %p215 = scmp.eq.s32.totalorder %s33, 0
      %p216 = por %p214, %p215
      %p217 = scmp.ne.s32.totalorder %s205, %s206
      %p218 = scmp.eq.s32.totalorder %s34, 1
      %p219 = por %p217, %p218
      %p221 = scmp.ne.s32.totalorder %s206, %s220
      %p222 = scmp.eq.s32.totalorder %s34, 0
      %p223 = por %p221, %p222
      %s225 = sadd.s32 %s224, 1
      %p228 = scmp.eq.s32.totalorder %s28, 1
      %p229 = scmp.ne.s32.totalorder %s224, %s226
      %p230 = scmp.eq.s32.totalorder %s28, 0
      %p231 = por %p229, %p230
      %p232 = scmp.ne.s32.totalorder %s224, %s226
      %p233 = scmp.eq.s32.totalorder %s33, 1
      %p234 = por %p232, %p233
      %p235 = scmp.ne.s32.totalorder %s226, %s227
      %p236 = scmp.eq.s32.totalorder %s33, 0
      %p237 = por %p235, %p236
      %p238 = scmp.ne.s32.totalorder %s226, %s227
      %p239 = scmp.eq.s32.totalorder %s34, 1
      %p240 = por %p238, %p239
      %p242 = scmp.ne.s32.totalorder %s227, %s241
      %p243 = scmp.eq.s32.totalorder %s34, 0
      %p244 = por %p242, %p243
      %s246 = sadd.s32 %s245, 1
      %p249 = scmp.eq.s32.totalorder %s28, 1
      %p250 = scmp.ne.s32.totalorder %s245, %s247
      %p251 = scmp.eq.s32.totalorder %s28, 0
      %p252 = por %p250, %p251
      %p253 = scmp.ne.s32.totalorder %s245, %s247
      %p254 = scmp.eq.s32.totalorder %s33, 1
      %p255 = por %p253, %p254
      %p256 = scmp.ne.s32.totalorder %s247, %s248
      %p257 = scmp.eq.s32.totalorder %s33, 0
      %p258 = por %p256, %p257
      %p259 = scmp.ne.s32.totalorder %s247, %s248
      %p260 = scmp.eq.s32.totalorder %s34, 1
      %p261 = por %p259, %p260
      %p263 = scmp.ne.s32.totalorder %s248, %s262
      %p264 = scmp.eq.s32.totalorder %s34, 0
      %p265 = por %p263, %p264
      %s267 = sadd.s32 %s266, 1
      %p270 = scmp.eq.s32.totalorder %s28, 1
      %p271 = scmp.ne.s32.totalorder %s266, %s268
      %p272 = scmp.eq.s32.totalorder %s28, 0
      %p273 = por %p271, %p272
      %p274 = scmp.ne.s32.totalorder %s266, %s268
      %p275 = scmp.eq.s32.totalorder %s33, 1
      %p276 = por %p274, %p275
      %p277 = scmp.ne.s32.totalorder %s268, %s269
      %p278 = scmp.eq.s32.totalorder %s33, 0
      %p279 = por %p277, %p278
      %p280 = scmp.ne.s32.totalorder %s268, %s269
      %p281 = scmp.eq.s32.totalorder %s34, 1
      %p282 = por %p280, %p281
      %p284 = scmp.ne.s32.totalorder %s269, %s283
      %p285 = scmp.eq.s32.totalorder %s34, 0
      %p286 = por %p284, %p285
      %s288 = sadd.s32 %s287, 1
      %p291 = scmp.eq.s32.totalorder %s28, 1
      %p292 = scmp.ne.s32.totalorder %s287, %s289
      %p293 = scmp.eq.s32.totalorder %s28, 0
      %p294 = por %p292, %p293
      %p295 = scmp.ne.s32.totalorder %s287, %s289
      %p296 = scmp.eq.s32.totalorder %s33, 1
      %p297 = por %p295, %p296
      %p298 = scmp.ne.s32.totalorder %s289, %s290
      %p299 = scmp.eq.s32.totalorder %s33, 0
      %p300 = por %p298, %p299
      %p301 = scmp.ne.s32.totalorder %s289, %s290
      %p302 = scmp.eq.s32.totalorder %s34, 1
      %p303 = por %p301, %p302
      %p305 = scmp.ne.s32.totalorder %s290, %s304
      %p306 = scmp.eq.s32.totalorder %s34, 0
      %p307 = por %p305, %p306
      %s309 = sadd.s32 %s308, 1
      %p312 = scmp.eq.s32.totalorder %s28, 1
      %p313 = scmp.ne.s32.totalorder %s308, %s310
      %p314 = scmp.eq.s32.totalorder %s28, 0
      %p315 = por %p313, %p314
      %p316 = scmp.ne.s32.totalorder %s308, %s310
      %p317 = scmp.eq.s32.totalorder %s33, 1
      %p318 = por %p316, %p317
      %p319 = scmp.ne.s32.totalorder %s310, %s311
      %p320 = scmp.eq.s32.totalorder %s33, 0
      %p321 = por %p319, %p320
      %p322 = scmp.ne.s32.totalorder %s310, %s311
      %p323 = scmp.eq.s32.totalorder %s34, 1
      %p324 = por %p322, %p323
      %p326 = scmp.ne.s32.totalorder %s311, %s325
      %p327 = scmp.eq.s32.totalorder %s34, 0
      %p328 = por %p326, %p327
      %s330 = sadd.s32 %s329, 1
      %p333 = scmp.eq.s32.totalorder %s28, 1
      %p334 = scmp.ne.s32.totalorder %s329, %s331
      %p335 = scmp.eq.s32.totalorder %s28, 0
      %p336 = por %p334, %p335
      %p337 = scmp.ne.s32.totalorder %s329, %s331
      %p338 = scmp.eq.s32.totalorder %s33, 1
      %p339 = por %p337, %p338
      %p340 = scmp.ne.s32.totalorder %s331, %s332
      %p341 = scmp.eq.s32.totalorder %s33, 0
      %p342 = por %p340, %p341
      %p343 = scmp.ne.s32.totalorder %s331, %s332
      %p344 = scmp.eq.s32.totalorder %s34, 1
      %p345 = por %p343, %p344
      %p347 = scmp.ne.s32.totalorder %s332, %s346
      %p348 = scmp.eq.s32.totalorder %s34, 0
      %p349 = por %p347, %p348
      %s350 = ssub.s32 %s28, %s35
      %p351 = scmp.eq.s32.totalorder %s350, 0
      %s353 = sadd.s32 %s352, 1
      %s354 = scalar_select %p351, %s352, %s353
      %p357 = pneg %p351
      %p358 = scmp.eq.s32.totalorder %s28, 1
      %p359 = por %p357, %p358
      %p360 = scmp.ne.s32.totalorder %s352, %s355
      %p361 = scmp.eq.s32.totalorder %s28, 0
      %p362 = por %p360, %p361
      %p363 = scmp.ne.s32.totalorder %s352, %s355
      %p364 = scmp.eq.s32.totalorder %s33, 1
      %p365 = por %p363, %p364
      %p366 = scmp.ne.s32.totalorder %s355, %s356
      %p367 = scmp.eq.s32.totalorder %s33, 0
      %p368 = por %p366, %p367
      %p369 = scmp.ne.s32.totalorder %s355, %s356
      %p370 = scmp.eq.s32.totalorder %s34, 1
      %p371 = por %p369, %p370
      %p373 = scmp.ne.s32.totalorder %s356, %s372
      %p374 = scmp.eq.s32.totalorder %s34, 0
      %p375 = por %p373, %p374
      %s376 = ssub.s32 %s28, %s35
      %p377 = scmp.eq.s32.totalorder %s376, 0
      %s379 = sadd.s32 %s378, 1
      %s380 = scalar_select %p377, %s378, %s379
      %p383 = pneg %p377
      %p384 = scmp.eq.s32.totalorder %s28, 1
      %p385 = por %p383, %p384
      %p386 = scmp.ne.s32.totalorder %s378, %s381
      %p387 = scmp.eq.s32.totalorder %s28, 0
      %p388 = por %p386, %p387
      %p389 = scmp.ne.s32.totalorder %s378, %s381
      %p390 = scmp.eq.s32.totalorder %s33, 1
      %p391 = por %p389, %p390
      %p392 = scmp.ne.s32.totalorder %s381, %s382
      %p393 = scmp.eq.s32.totalorder %s33, 0
      %p394 = por %p392, %p393
      %p395 = scmp.ne.s32.totalorder %s381, %s382
      %p396 = scmp.eq.s32.totalorder %s34, 1
      %p397 = por %p395, %p396
      %p399 = scmp.ne.s32.totalorder %s382, %s398
      %p400 = scmp.eq.s32.totalorder %s34, 0
      %p401 = por %p399, %p400
      %p402 = scmp.le.s32.totalorder 1, %s28
      %p403 = scmp.lt.s32.totalorder %s28, 3
      %p404 = pnand %p402, %p403
      %p405 = pneg %p404
      // Predicated region
      $region9: #{tpu_custom_call.1} parent=5 // pred_check
        _
      $region10: #{tpu_custom_call.1} parent=5 // pred_check_branch
        %407 = sbr.rel (%p404) target = $region12
      $region11: #{tpu_custom_call.1} parent=5 // pred_region
        %s408 = ssub.s32 %s28, 1
        // Predicated region
        $region13: #{tpu_custom_call.1} parent=11 // pred_check
          %p409 = pneg %p153
        $region14: #{tpu_custom_call.1} parent=11 // pred_check_branch
          %411 = sbr.rel (%p409) target = $region16
        $region15: #{tpu_custom_call.1} parent=11 // pred_region
          _
        $region16: #{tpu_custom_call.1} parent=11 // pred_fallthru
          _
        // Predicated region
        $region17: #{tpu_custom_call.1} parent=11 // pred_check
          %p412 = pneg %p174
        $region18: #{tpu_custom_call.1} parent=11 // pred_check_branch
          %414 = sbr.rel (%p412) target = $region20
        $region19: #{tpu_custom_call.1} parent=11 // pred_region
          _
        $region20: #{tpu_custom_call.1} parent=11 // pred_fallthru
          _
        // Predicated region
        $region21: #{tpu_custom_call.1} parent=11 // pred_check
          %p415 = pneg %p195
        $region22: #{tpu_custom_call.1} parent=11 // pred_check_branch
          %417 = sbr.rel (%p415) target = $region24
        $region23: #{tpu_custom_call.1} parent=11 // pred_region
          _
        $region24: #{tpu_custom_call.1} parent=11 // pred_fallthru
          _
        // Predicated region
        $region25: #{tpu_custom_call.1} parent=11 // pred_check
          %p418 = pneg %p216
        $region26: #{tpu_custom_call.1} parent=11 // pred_check_branch
          %420 = sbr.rel (%p418) target = $region28
        $region27: #{tpu_custom_call.1} parent=11 // pred_region
          _
        $region28: #{tpu_custom_call.1} parent=11 // pred_fallthru
          _
        // Predicated region
        $region29: #{tpu_custom_call.1} parent=11 // pred_check
          %p421 = pneg %p237
        $region30: #{tpu_custom_call.1} parent=11 // pred_check_branch
          %423 = sbr.rel (%p421) target = $region32
        $region31: #{tpu_custom_call.1} parent=11 // pred_region
          _
        $region32: #{tpu_custom_call.1} parent=11 // pred_fallthru
          _
        // Predicated region
        $region33: #{tpu_custom_call.1} parent=11 // pred_check
          %p424 = pneg %p258
        $region34: #{tpu_custom_call.1} parent=11 // pred_check_branch
          %426 = sbr.rel (%p424) target = $region36
        $region35: #{tpu_custom_call.1} parent=11 // pred_region
          _
        $region36: #{tpu_custom_call.1} parent=11 // pred_fallthru
          _
        // Predicated region
        $region37: #{tpu_custom_call.1} parent=11 // pred_check
          %p427 = pneg %p279
        $region38: #{tpu_custom_call.1} parent=11 // pred_check_branch
          %429 = sbr.rel (%p427) target = $region40
        $region39: #{tpu_custom_call.1} parent=11 // pred_region
          _
        $region40: #{tpu_custom_call.1} parent=11 // pred_fallthru
          _
        // Predicated region
        $region41: #{tpu_custom_call.1} parent=11 // pred_check
          %p430 = pneg %p300
        $region42: #{tpu_custom_call.1} parent=11 // pred_check_branch
          %432 = sbr.rel (%p430) target = $region44
        $region43: #{tpu_custom_call.1} parent=11 // pred_region
          _
        $region44: #{tpu_custom_call.1} parent=11 // pred_fallthru
          _
        // Predicated region
        $region45: #{tpu_custom_call.1} parent=11 // pred_check
          %p433 = pneg %p321
        $region46: #{tpu_custom_call.1} parent=11 // pred_check_branch
          %435 = sbr.rel (%p433) target = $region48
        $region47: #{tpu_custom_call.1} parent=11 // pred_region
          _
        $region48: #{tpu_custom_call.1} parent=11 // pred_fallthru
          _
        // Predicated region
        $region49: #{tpu_custom_call.1} parent=11 // pred_check
          %p436 = pneg %p342
        $region50: #{tpu_custom_call.1} parent=11 // pred_check_branch
          %438 = sbr.rel (%p436) target = $region52
        $region51: #{tpu_custom_call.1} parent=11 // pred_region
          _
        $region52: #{tpu_custom_call.1} parent=11 // pred_fallthru
          _
      $region12: #{tpu_custom_call.1} parent=5 // pred_fallthru
        _
      %p439 = scmp.lt.s32.totalorder %s28, 2
      // Predicated region
      $region53: #{tpu_custom_call.1} parent=5 // pred_check
        %p440 = pneg %p439
      $region54: #{tpu_custom_call.1} parent=5 // pred_check_branch
        %442 = sbr.rel (%p440) target = $region56
      $region55: #{tpu_custom_call.1} parent=5 // pred_region
        // Predicated region
        $region57: #{tpu_custom_call.1} parent=55 // pred_check
          %p443 = pneg %p48
        $region58: #{tpu_custom_call.1} parent=55 // pred_check_branch
          %445 = sbr.rel (%p443) target = $region60
        $region59: #{tpu_custom_call.1} parent=55 // pred_region
          %p446 = scmp.lt.s32.totalorder %s28, 1
          %s447 = scalar_select %p446, %s28, 1
          %s448 = smul.addr %s447, 8
          %s449 = scalar_lea.vmem %s0, %s448
        $region60: #{tpu_custom_call.1} parent=55 // pred_fallthru
          _
        // Predicated region
        $region61: #{tpu_custom_call.1} parent=55 // pred_check
          %p450 = pneg %p74
        $region62: #{tpu_custom_call.1} parent=55 // pred_check_branch
          %452 = sbr.rel (%p450) target = $region64
        $region63: #{tpu_custom_call.1} parent=55 // pred_region
          %p453 = scmp.lt.s32.totalorder %s28, 1
          %s454 = scalar_select %p453, %s28, 1
          %s455 = smul.addr %s454, 8
          %s456 = scalar_lea.vmem %s1, %s455
        $region64: #{tpu_custom_call.1} parent=55 // pred_fallthru
          _
        // Predicated region
        $region65: #{tpu_custom_call.1} parent=55 // pred_check
          %p457 = pneg %p100
        $region66: #{tpu_custom_call.1} parent=55 // pred_check_branch
          %459 = sbr.rel (%p457) target = $region68
        $region67: #{tpu_custom_call.1} parent=55 // pred_region
          %p460 = scmp.lt.s32.totalorder %s28, 1
          %s461 = scalar_select %p460, %s28, 1
          %s462 = smul.addr %s461, 8
          %s463 = scalar_lea.vmem %s2, %s462
        $region68: #{tpu_custom_call.1} parent=55 // pred_fallthru
          _
        // Predicated region
        $region69: #{tpu_custom_call.1} parent=55 // pred_check
          %p464 = pneg %p126
        $region70: #{tpu_custom_call.1} parent=55 // pred_check_branch
          %466 = sbr.rel (%p464) target = $region72
        $region71: #{tpu_custom_call.1} parent=55 // pred_region
          %s467 = sand.u32 %s116, 1
          %s468 = sand.u32 %s116, 1
          %s469 = smul.addr %s468, 32
          %s470 = scalar_lea.vmem [#allocation2], %s469
          %s471 = smul.addr %s28, 8
          %s472 = scalar_lea.vmem %s3, %s471
          // Predicated region
          $region73: #{tpu_custom_call.1} parent=71 // pred_check
            _
          $region74: #{tpu_custom_call.1} parent=71 // pred_check_branch
            %474 = sbr.rel (0) target = $region76
          $region75: #{tpu_custom_call.1} parent=71 // pred_region
            // Predicated region
            $region77: #{tpu_custom_call.1} parent=75 // pred_check
              _
            $region78: #{tpu_custom_call.1} parent=75 // pred_check_branch
              %476 = sbr.rel (0) target = $region80
            $region79: #{tpu_custom_call.1} parent=75 // pred_region
              // Predicated region
              $region92: #{tpu_custom_call.1} parent=79 // pred_check
                _
              $region93: #{tpu_custom_call.1} parent=79 // pred_check_branch
                %497 = sbr.rel (0) target = $region95
              $region94: #{tpu_custom_call.1} parent=79 // pred_region
                loop: start=0, step=1, limit=1
                $region96: #{tpu_custom_call.1} parent=94 // loop_pre_header
                  _
                $region97: #{tpu_custom_call.1} parent=94 // loop_header
                  %s499 = sphi 0, %s503
                  %p500 = scmp.ge.s32.totalorder %s499, 1
                  %s504 = sphi %s472, %s472
                  %s505 = sphi %s470, %s470
                $region98: #{tpu_custom_call.1} parent=94 // loop_header_branch
                  %502 = sbr.rel (%p500) target = $region102
                $region99: #{tpu_custom_call.1} parent=94 // loop_body
                  %v506 = vld [vmem:[%s504] sm:$0xff]
                  %507 = vst [vmem:[%s505] sm:$0xff] %v506
                  %v508 = vld [vmem:[%s504 + $0x10] sm:$0xff]
                  %509 = vst [vmem:[%s505 + $0x8] sm:$0xff] %v508
                  %v510 = vld [vmem:[%s504 + $0x20] sm:$0xff]
                  %511 = vst [vmem:[%s505 + $0x10] sm:$0xff] %v510
                  %v512 = vld [vmem:[%s504 + $0x30] sm:$0xff]
                  %513 = vst [vmem:[%s505 + $0x18] sm:$0xff] %v512
                $region100: #{tpu_custom_call.1} parent=94 // loop_footer
                  %s503 = sadd.s32 1, %s499
                $region101: #{tpu_custom_call.1} parent=94 // loop_footer_branch
                  %498 = sbr.rel target = $region97
                $region102: #{tpu_custom_call.1} parent=94 // loop_exit
                  _
              $region95: #{tpu_custom_call.1} parent=79 // pred_fallthru
                _
              // Predicated region
              $region103: #{tpu_custom_call.1} parent=79 // pred_check
                _
              $region104: #{tpu_custom_call.1} parent=79 // pred_check_branch
                %515 = sbr.rel target = $region106
              $region105: #{tpu_custom_call.1} parent=79 // pred_region
                _
              $region106: #{tpu_custom_call.1} parent=79 // pred_fallthru
                _
            $region80: #{tpu_custom_call.1} parent=75 // pred_fallthru
              _
            // Predicated region
            $region81: #{tpu_custom_call.1} parent=75 // pred_check
              _
            $region82: #{tpu_custom_call.1} parent=75 // pred_check_branch
              %478 = sbr.rel target = $region84
            $region83: #{tpu_custom_call.1} parent=75 // pred_region
              loop: start=0, step=1, limit=1
              $region85: #{tpu_custom_call.1} parent=83 // loop_pre_header
                _
              $region86: #{tpu_custom_call.1} parent=83 // loop_header
                %s481 = sphi 0, %s485
                %p482 = scmp.ge.s32.totalorder %s481, 1
                %s486 = sphi %s472, %s472
                %s487 = sphi %s470, %s470
              $region87: #{tpu_custom_call.1} parent=83 // loop_header_branch
                %484 = sbr.rel (%p482) target = $region91
              $region88: #{tpu_custom_call.1} parent=83 // loop_body
                %v488 = vld [vmem:[%s486] sm:$0xff]
                %489 = vst [vmem:[%s487] sm:$0xff] %v488
                %v490 = vld [vmem:[%s486 + $0x10] sm:$0xff]
                %491 = vst [vmem:[%s487 + $0x8] sm:$0xff] %v490
                %v492 = vld [vmem:[%s486 + $0x20] sm:$0xff]
                %493 = vst [vmem:[%s487 + $0x10] sm:$0xff] %v492
                %v494 = vld [vmem:[%s486 + $0x30] sm:$0xff]
                %495 = vst [vmem:[%s487 + $0x18] sm:$0xff] %v494
              $region89: #{tpu_custom_call.1} parent=83 // loop_footer
                %s485 = sadd.s32 1, %s481
              $region90: #{tpu_custom_call.1} parent=83 // loop_footer_branch
                %480 = sbr.rel target = $region86
              $region91: #{tpu_custom_call.1} parent=83 // loop_exit
                _
            $region84: #{tpu_custom_call.1} parent=75 // pred_fallthru
              _
          $region76: #{tpu_custom_call.1} parent=71 // pred_fallthru
            _
          %516 = vnop
        $region72: #{tpu_custom_call.1} parent=55 // pred_fallthru
          _
      $region56: #{tpu_custom_call.1} parent=5 // pred_fallthru
        _
      %p517 = scmp.le.s32.totalorder 1, %s28
      %p518 = scmp.lt.s32.totalorder %s28, 3
      %p519 = pnand %p517, %p518
      %p520 = pneg %p519
      // Predicated region
      $region107: #{tpu_custom_call.1} parent=5 // pred_check
        _
      $region108: #{tpu_custom_call.1} parent=5 // pred_check_branch
        %522 = sbr.rel (%p519) target = $region110
      $region109: #{tpu_custom_call.1} parent=5 // pred_region
        %s523 = ssub.s32 %s28, 1
        %s524 = sand.u32 %s119, 1
        %s525 = sand.u32 %s119, 1
        %s526 = smul.addr %s525, 32
        %s527 = scalar_lea.vmem [#allocation2], %s526
        // Predicated region
        $region111: #{tpu_custom_call.1} parent=109 // pred_check
          %p528 = pneg %p132
        $region112: #{tpu_custom_call.1} parent=109 // pred_check_branch
          %530 = sbr.rel (%p528) target = $region114
        $region113: #{tpu_custom_call.1} parent=109 // pred_region
          _
        $region114: #{tpu_custom_call.1} parent=109 // pred_fallthru
          _
        %p531 = scmp.lt.s32.totalorder %s33, 1
        %s532 = scalar_select %p531, %s33, 1
        %s533 = smul.addr %s532, 8
        %s534 = scalar_lea.vmem %s0, %s533
        %p535 = pneg %p54
        %p536 = pneg %p51
        %p537 = scmp.lt.s32.totalorder %s33, 1
        %s538 = scalar_select %p537, %s33, 1
        %s539 = smul.addr %s538, 8
        %s540 = scalar_lea.vmem %s1, %s539
        %p541 = pneg %p80
        %p542 = pneg %p77
        %p543 = scmp.lt.s32.totalorder %s33, 1
        %s544 = scalar_select %p543, %s33, 1
        %s545 = smul.addr %s544, 8
        %s546 = scalar_lea.vmem %s2, %s545
        %p547 = pneg %p106
        %p548 = pneg %p103
        %s549 = sand.u32 %s119, 1
        %s550 = sand.u32 %s119, 1
        %s551 = smul.addr %s550, 32
        %s552 = scalar_lea.vmem [#allocation2], %s551
        %p553 = pneg %p132
        %p554 = pneg %p129
        %p555 = pneg %p153
        %p556 = pneg %p150
        %p557 = pneg %p174
        %p558 = pneg %p171
        %p559 = pneg %p195
        %p560 = pneg %p192
        %p561 = pneg %p216
        %p562 = pneg %p213
        %p563 = pneg %p237
        %p564 = pneg %p234
        %p565 = pneg %p258
        %p566 = pneg %p255
        %p567 = pneg %p279
        %p568 = pneg %p276
        %p569 = pneg %p300
        %p570 = pneg %p297
        %p571 = pneg %p321
        %p572 = pneg %p318
        %p573 = pneg %p342
        %p574 = pneg %p339
        %p575 = pneg %p368
        %p576 = pneg %p365
        %s577 = sand.u32 %s355, 1
        %s578 = scalar_lea.sflag [#allocation4], %s577
        %s579 = sand.u32 %s355, 1
        %s580 = smul.addr %s579, 8
        %s581 = scalar_lea.vmem [#allocation3], %s580
        %p582 = pneg %p394
        %p583 = pneg %p391
        %s584 = sand.u32 %s381, 1
        %s585 = scalar_lea.sflag [#allocation6], %s584
        %s586 = sand.u32 %s381, 1
        %s587 = smul.addr %s586, 32
        %s588 = scalar_lea.vmem [#allocation5], %s587
        %p589 = scmp.lt.s32.totalorder %s33, 1
        %s590 = scalar_select %p589, %s33, 1
        %s591 = smul.addr %s590, 8
        %s592 = scalar_lea.vmem %s0, %s591
        %p593 = scmp.lt.s32.totalorder %s33, 1
        %s594 = scalar_select %p593, %s33, 1
        %s595 = smul.addr %s594, 8
        %s596 = scalar_lea.vmem %s1, %s595
        %p597 = scmp.lt.s32.totalorder %s33, 1
        %s598 = scalar_select %p597, %s33, 1
        %s599 = smul.addr %s598, 8
        %s600 = scalar_lea.vmem %s2, %s599
        %v601 = vld [vmem:[%s592] sm:$0xff]
        %v602 = vld [vmem:[%s596] sm:$0xff]
        %v603 = vld [vmem:[%s600] sm:$0xff]
        %v604 = vld [vmem:[%s4] sm:$0xff]
        %v605 = vld [vmem:[%s4 + $0x8] sm:$0xff]
        %v606 = vld [vmem:[%s4 + $0x10] sm:$0xff]
        %v607 = vld [vmem:[%s4 + $0x18] sm:$0xff]
        %v608 = vld [vmem:[%s5] sm:$0x1]
        %v610 = vlaneseq
        %v611 = vshrl.u32 %v610, 7
        %v612 = vsub.s32 0, %v611
        %v613 = vrot.slane %v608, %v612
        %vm615 = vcmask 261120
        %v617 = vsel %vm615, %v601, 0
        %619 = vmatprep.subr.mxu0 0.0
        %620 = vmatpush1.msra.mxu0 %v604
        %621 = vmatprep.subr.mxu0 0.0
        %622 = vmatpush1.msra.mxu0 %v605
        %623 = vmatprep.subr.mxu0 0.0
        %624 = vmatpush1.msra.mxu0 %v606
        %625 = vmatprep.subr.mxu0 0.0
        %626 = vmatpush1.msra.mxu0 %v607
        %627 = vmatprep.subr.mxu0 0.0
        %628 = vmatpush1.msra.mxu0 0.0
        %629 = vmatprep.subr.mxu0 0.0
        %630 = vmatpush1.msra.mxu0 0.0
        %631 = vmatprep.subr.mxu0 0.0
        %632 = vmatpush1.msra.mxu0 0.0
        %633 = vmatprep.subr.mxu0 0.0
        %634 = vmatpush1.msra.mxu0 0.0
        %635 = vmatprep.subr.mxu0 0.0
        %636 = vmatpush1.msra.mxu0 0.0
        %637 = vmatprep.subr.mxu0 0.0
        %638 = vmatpush1.msra.mxu0 0.0
        %639 = vmatprep.subr.mxu0 0.0
        %640 = vmatpush1.msra.mxu0 0.0
        %641 = vmatprep.subr.mxu0 0.0
        %642 = vmatpush1.msra.mxu0 0.0
        %643 = vmatprep.subr.mxu0 0.0
        %644 = vmatpush1.msra.mxu0 0.0
        %645 = vmatprep.subr.mxu0 0.0
        %646 = vmatpush1.msra.mxu0 0.0
        %647 = vmatprep.subr.mxu0 0.0
        %648 = vmatpush1.msra.mxu0 0.0
        %649 = vmatprep.subr.mxu0 0.0
        %650 = vmatpush1.msra.mxu0 0.0
        %651 = vmatprep.subr.mxu0 0.0
        %652 = vmatpush1.msra.mxu0 0.0
        %653 = vmatprep.subr.mxu0 0.0
        %654 = vmatpush1.msra.mxu0 0.0
        %655 = vmatprep.subr.mxu0 0.0
        %656 = vmatpush1.msra.mxu0 0.0
        %657 = vmatprep.subr.mxu0 0.0
        %658 = vmatpush1.msra.mxu0 0.0
        %659 = vmatprep.subr.mxu0 0.0
        %660 = vmatpush1.msra.mxu0 0.0
        %661 = vmatprep.subr.mxu0 0.0
        %662 = vmatpush1.msra.mxu0 0.0
        %663 = vmatprep.subr.mxu0 0.0
        %664 = vmatpush1.msra.mxu0 0.0
        %665 = vmatprep.subr.mxu0 0.0
        %666 = vmatpush1.msra.mxu0 0.0
        %667 = vmatprep.subr.mxu0 0.0
        %668 = vmatpush1.msra.mxu0 0.0
        %669 = vmatprep.subr.mxu0 0.0
        %670 = vmatpush1.msra.mxu0 0.0
        %671 = vmatprep.subr.mxu0 0.0
        %672 = vmatpush1.msra.mxu0 0.0
        %673 = vmatprep.subr.mxu0 0.0
        %674 = vmatpush1.msra.mxu0 0.0
        %675 = vmatprep.subr.mxu0 0.0
        %676 = vmatpush1.msra.mxu0 0.0
        %677 = vmatprep.subr.mxu0 0.0
        %678 = vmatpush1.msra.mxu0 0.0
        %679 = vmatprep.subr.mxu0 0.0
        %680 = vmatpush1.msra.mxu0 0.0
        %681 = vmatprep.subr.mxu0 0.0
        %682 = vmatpush1.msra.mxu0 0.0
        %683 = vmatprep.mubr.f32.mxu0 0.0
        %684 = vmatmul.mubr.f32.gmra.mrb[0].mxu0 %v617
        %v685 = vpop.f32.mrb[0].mxu0
        %v686 = vadd.f32 %v613, %v685
        %v687 = vpop.f32.mrb[0].mxu0
        %688 = vdwg.mxu0
        %v689 = vld [vmem:[%s6] sm:$0xff]
        %v690 = vld [vmem:[%s6 + $0x8] sm:$0xff]
        %v691 = vld [vmem:[%s6 + $0x10] sm:$0xff]
        %v692 = vld [vmem:[%s6 + $0x18] sm:$0xff]
        %v693 = vld [vmem:[%s7] sm:$0x1]
        %v695 = vlaneseq
        %v696 = vshrl.u32 %v695, 7
        %v697 = vsub.s32 0, %v696
        %v698 = vrot.slane %v693, %v697
        %v701 = vsel %vm615, %v602, 0
        %703 = vmatprep.subr.mxu0 0.0
        %704 = vmatpush1.msra.mxu0 %v689
        %705 = vmatprep.subr.mxu0 0.0
        %706 = vmatpush1.msra.mxu0 %v690
        %707 = vmatprep.subr.mxu0 0.0
        %708 = vmatpush1.msra.mxu0 %v691
        %709 = vmatprep.subr.mxu0 0.0
        %710 = vmatpush1.msra.mxu0 %v692
        %711 = vmatprep.subr.mxu0 0.0
        %712 = vmatpush1.msra.mxu0 0.0
        %713 = vmatprep.subr.mxu0 0.0
        %714 = vmatpush1.msra.mxu0 0.0
        %715 = vmatprep.subr.mxu0 0.0
        %716 = vmatpush1.msra.mxu0 0.0
        %717 = vmatprep.subr.mxu0 0.0
        %718 = vmatpush1.msra.mxu0 0.0
        %719 = vmatprep.subr.mxu0 0.0
        %720 = vmatpush1.msra.mxu0 0.0
        %721 = vmatprep.subr.mxu0 0.0
        %722 = vmatpush1.msra.mxu0 0.0
        %723 = vmatprep.subr.mxu0 0.0
        %724 = vmatpush1.msra.mxu0 0.0
        %725 = vmatprep.subr.mxu0 0.0
        %726 = vmatpush1.msra.mxu0 0.0
        %727 = vmatprep.subr.mxu0 0.0
        %728 = vmatpush1.msra.mxu0 0.0
        %729 = vmatprep.subr.mxu0 0.0
        %730 = vmatpush1.msra.mxu0 0.0
        %731 = vmatprep.subr.mxu0 0.0
        %732 = vmatpush1.msra.mxu0 0.0
        %733 = vmatprep.subr.mxu0 0.0
        %734 = vmatpush1.msra.mxu0 0.0
        %735 = vmatprep.subr.mxu0 0.0
        %736 = vmatpush1.msra.mxu0 0.0
        %737 = vmatprep.subr.mxu0 0.0
        %738 = vmatpush1.msra.mxu0 0.0
        %739 = vmatprep.subr.mxu0 0.0
        %740 = vmatpush1.msra.mxu0 0.0
        %741 = vmatprep.subr.mxu0 0.0
        %742 = vmatpush1.msra.mxu0 0.0
        %743 = vmatprep.subr.mxu0 0.0
        %744 = vmatpush1.msra.mxu0 0.0
        %745 = vmatprep.subr.mxu0 0.0
        %746 = vmatpush1.msra.mxu0 0.0
        %747 = vmatprep.subr.mxu0 0.0
        %748 = vmatpush1.msra.mxu0 0.0
        %749 = vmatprep.subr.mxu0 0.0
        %750 = vmatpush1.msra.mxu0 0.0
        %751 = vmatprep.subr.mxu0 0.0
        %752 = vmatpush1.msra.mxu0 0.0
        %753 = vmatprep.subr.mxu0 0.0
        %754 = vmatpush1.msra.mxu0 0.0
        %755 = vmatprep.subr.mxu0 0.0
        %756 = vmatpush1.msra.mxu0 0.0
        %757 = vmatprep.subr.mxu0 0.0
        %758 = vmatpush1.msra.mxu0 0.0
        %759 = vmatprep.subr.mxu0 0.0
        %760 = vmatpush1.msra.mxu0 0.0
        %761 = vmatprep.subr.mxu0 0.0
        %762 = vmatpush1.msra.mxu0 0.0
        %763 = vmatprep.subr.mxu0 0.0
        %764 = vmatpush1.msra.mxu0 0.0
        %765 = vmatprep.subr.mxu0 0.0
        %766 = vmatpush1.msra.mxu0 0.0
        %767 = vmatprep.mubr.f32.mxu0 0.0
        %768 = vmatmul.mubr.f32.gmra.mrb[0].mxu0 %v701
        %v769 = vpop.f32.mrb[0].mxu0
        %v770 = vadd.f32 %v698, %v769
        %v771 = vpop.f32.mrb[0].mxu0
        %772 = vdwg.mxu0
        %v773 = vld [vmem:[%s8] sm:$0xff]
        %v774 = vld [vmem:[%s8 + $0x8] sm:$0xff]
        %v775 = vld [vmem:[%s8 + $0x10] sm:$0xff]
        %v776 = vld [vmem:[%s8 + $0x18] sm:$0xff]
        %v777 = vld [vmem:[%s9] sm:$0x1]
        %v779 = vlaneseq
        %v780 = vshrl.u32 %v779, 7
        %v781 = vsub.s32 0, %v780
        %v782 = vrot.slane %v777, %v781
        %v785 = vsel %vm615, %v603, 0
        %787 = vmatprep.subr.mxu0 0.0
        %788 = vmatpush1.msra.mxu0 %v773
        %789 = vmatprep.subr.mxu0 0.0
        %790 = vmatpush1.msra.mxu0 %v774
        %791 = vmatprep.subr.mxu0 0.0
        %792 = vmatpush1.msra.mxu0 %v775
        %793 = vmatprep.subr.mxu0 0.0
        %794 = vmatpush1.msra.mxu0 %v776
        %795 = vmatprep.subr.mxu0 0.0
        %796 = vmatpush1.msra.mxu0 0.0
        %797 = vmatprep.subr.mxu0 0.0
        %798 = vmatpush1.msra.mxu0 0.0
        %799 = vmatprep.subr.mxu0 0.0
        %800 = vmatpush1.msra.mxu0 0.0
        %801 = vmatprep.subr.mxu0 0.0
        %802 = vmatpush1.msra.mxu0 0.0
        %803 = vmatprep.subr.mxu0 0.0
        %804 = vmatpush1.msra.mxu0 0.0
        %805 = vmatprep.subr.mxu0 0.0
        %806 = vmatpush1.msra.mxu0 0.0
        %807 = vmatprep.subr.mxu0 0.0
        %808 = vmatpush1.msra.mxu0 0.0
        %809 = vmatprep.subr.mxu0 0.0
        %810 = vmatpush1.msra.mxu0 0.0
        %811 = vmatprep.subr.mxu0 0.0
        %812 = vmatpush1.msra.mxu0 0.0
        %813 = vmatprep.subr.mxu0 0.0
        %814 = vmatpush1.msra.mxu0 0.0
        %815 = vmatprep.subr.mxu0 0.0
        %816 = vmatpush1.msra.mxu0 0.0
        %817 = vmatprep.subr.mxu0 0.0
        %818 = vmatpush1.msra.mxu0 0.0
        %819 = vmatprep.subr.mxu0 0.0
        %820 = vmatpush1.msra.mxu0 0.0
        %821 = vmatprep.subr.mxu0 0.0
        %822 = vmatpush1.msra.mxu0 0.0
        %823 = vmatprep.subr.mxu0 0.0
        %824 = vmatpush1.msra.mxu0 0.0
        %825 = vmatprep.subr.mxu0 0.0
        %826 = vmatpush1.msra.mxu0 0.0
        %827 = vmatprep.subr.mxu0 0.0
        %828 = vmatpush1.msra.mxu0 0.0
        %829 = vmatprep.subr.mxu0 0.0
        %830 = vmatpush1.msra.mxu0 0.0
        %831 = vmatprep.subr.mxu0 0.0
        %832 = vmatpush1.msra.mxu0 0.0
        %833 = vmatprep.subr.mxu0 0.0
        %834 = vmatpush1.msra.mxu0 0.0
        %835 = vmatprep.subr.mxu0 0.0
        %836 = vmatpush1.msra.mxu0 0.0
        %837 = vmatprep.subr.mxu0 0.0
        %838 = vmatpush1.msra.mxu0 0.0
        %839 = vmatprep.subr.mxu0 0.0
        %840 = vmatpush1.msra.mxu0 0.0
        %841 = vmatprep.subr.mxu0 0.0
        %842 = vmatpush1.msra.mxu0 0.0
        %843 = vmatprep.subr.mxu0 0.0
        %844 = vmatpush1.msra.mxu0 0.0
        %845 = vmatprep.subr.mxu0 0.0
        %846 = vmatpush1.msra.mxu0 0.0
        %847 = vmatprep.subr.mxu0 0.0
        %848 = vmatpush1.msra.mxu0 0.0
        %849 = vmatprep.subr.mxu0 0.0
        %850 = vmatpush1.msra.mxu0 0.0
        %851 = vmatprep.mubr.f32.mxu0 0.0
        %852 = vmatmul.mubr.f32.gmra.mrb[0].mxu0 %v785
        %v853 = vpop.f32.mrb[0].mxu0
        %v854 = vadd.f32 %v782, %v853
        %v855 = vpop.f32.mrb[0].mxu0
        %856 = vdwg.mxu0
        %v857 = vld [vmem:[%s527] sm:$0xff]
        %vm858 = vcmask 64512
        %v860 = vsel %vm858, %v686, 0
        %v863 = vsel %vm858, %v770, 0
        %865 = vmatprep.subr.mxu0 0.0
        %866 = vmatpush1.xpose.msra.mxu0 %v863
        %867 = vmatprep.subr.mxu0 0.0
        %868 = vmatpush1.xpose.msra.mxu0 0.0
        %869 = vmatprep.subr.mxu0 0.0
        %870 = vmatpush1.xpose.msra.mxu0 0.0
        %871 = vmatprep.subr.mxu0 0.0
        %872 = vmatpush1.xpose.msra.mxu0 0.0
        %873 = vmatprep.subr.mxu0 0.0
        %874 = vmatpush1.xpose.msra.mxu0 0.0
        %875 = vmatprep.subr.mxu0 0.0
        %876 = vmatpush1.xpose.msra.mxu0 0.0
        %877 = vmatprep.subr.mxu0 0.0
        %878 = vmatpush1.xpose.msra.mxu0 0.0
        %879 = vmatprep.subr.mxu0 0.0
        %880 = vmatpush1.xpose.msra.mxu0 0.0
        %881 = vmatprep.subr.mxu0 0.0
        %882 = vmatpush1.xpose.msra.mxu0 0.0
        %883 = vmatprep.subr.mxu0 0.0
        %884 = vmatpush1.xpose.msra.mxu0 0.0
        %885 = vmatprep.subr.mxu0 0.0
        %886 = vmatpush1.xpose.msra.mxu0 0.0
        %887 = vmatprep.subr.mxu0 0.0
        %888 = vmatpush1.xpose.msra.mxu0 0.0
        %889 = vmatprep.subr.mxu0 0.0
        %890 = vmatpush1.xpose.msra.mxu0 0.0
        %891 = vmatprep.subr.mxu0 0.0
        %892 = vmatpush1.xpose.msra.mxu0 0.0
        %893 = vmatprep.subr.mxu0 0.0
        %894 = vmatpush1.xpose.msra.mxu0 0.0
        %895 = vmatprep.subr.mxu0 0.0
        %896 = vmatpush1.xpose.msra.mxu0 0.0
        %897 = vmatprep.subr.mxu0 0.0
        %898 = vmatpush1.xpose.msra.mxu0 0.0
        %899 = vmatprep.subr.mxu0 0.0
        %900 = vmatpush1.xpose.msra.mxu0 0.0
        %901 = vmatprep.subr.mxu0 0.0
        %902 = vmatpush1.xpose.msra.mxu0 0.0
        %903 = vmatprep.subr.mxu0 0.0
        %904 = vmatpush1.xpose.msra.mxu0 0.0
        %905 = vmatprep.subr.mxu0 0.0
        %906 = vmatpush1.xpose.msra.mxu0 0.0
        %907 = vmatprep.subr.mxu0 0.0
        %908 = vmatpush1.xpose.msra.mxu0 0.0
        %909 = vmatprep.subr.mxu0 0.0
        %910 = vmatpush1.xpose.msra.mxu0 0.0
        %911 = vmatprep.subr.mxu0 0.0
        %912 = vmatpush1.xpose.msra.mxu0 0.0
        %913 = vmatprep.subr.mxu0 0.0
        %914 = vmatpush1.xpose.msra.mxu0 0.0
        %915 = vmatprep.subr.mxu0 0.0
        %916 = vmatpush1.xpose.msra.mxu0 0.0
        %917 = vmatprep.subr.mxu0 0.0
        %918 = vmatpush1.xpose.msra.mxu0 0.0
        %919 = vmatprep.subr.mxu0 0.0
        %920 = vmatpush1.xpose.msra.mxu0 0.0
        %921 = vmatprep.subr.mxu0 0.0
        %922 = vmatpush1.xpose.msra.mxu0 0.0
        %923 = vmatprep.subr.mxu0 0.0
        %924 = vmatpush1.xpose.msra.mxu0 0.0
        %925 = vmatprep.subr.mxu0 0.0
        %926 = vmatpush1.xpose.msra.mxu0 0.0
        %927 = vmatprep.subr.mxu0 0.0
        %928 = vmatpush1.xpose.msra.mxu0 0.0
        %929 = vmatprep.mubr.f32.mxu0 0.0
        %930 = vmatmul.mubr.f32.gmra.mrb[0].mxu0 %v860
        %v931 = vpop.f32.mrb[0].mxu0
        %v932 = vadd.f32 %v857, %v931
        %v933 = vpop.f32.mrb[0].mxu0
        %934 = vdwg.mxu0
        %v935 = vsel %vm858, %v932, -inf
        %936 = vmax.xlane.f32.xlu0 %v935
        %v937 = vpop.xlane.xlu0 %936
        %v938 = vsub.f32 %v932, %v937
        %v939 = vmul.f32 %v938, 1.442695
        %v940 = vpow.pop %v939
        %v941 = vsel %vm858, %v940, 0.0
        %942 = vadd.xlane.f32.xlu0 %v941
        %v943 = vpop.xlane.xlu0 %942
        %v944 = vrcp.pop %v943
        %v945 = vmul.f32 %v943, %v944
        %v946 = vsub.f32 2.0, %v945
        %v947 = vmul.f32 %v944, %v946
        %v948 = vmul.f32 %v940, %v947
        %949 = vst.msk [vmem:[%s588] sm:$0xff] %vm858, %v948
        %v951 = vsel %vm858, %v948, 0
        %953 = vmatprep.subr.mxu0 0.0
        %954 = vmatpush1.msra.mxu0 %v854
        %955 = vmatprep.subr.mxu0 0.0
        %956 = vmatpush1.msra.mxu0 0.0
        %957 = vmatprep.subr.mxu0 0.0
        %958 = vmatpush1.msra.mxu0 0.0
        %959 = vmatprep.subr.mxu0 0.0
        %960 = vmatpush1.msra.mxu0 0.0
        %961 = vmatprep.subr.mxu0 0.0
        %962 = vmatpush1.msra.mxu0 0.0
        %963 = vmatprep.subr.mxu0 0.0
        %964 = vmatpush1.msra.mxu0 0.0
        %965 = vmatprep.subr.mxu0 0.0
        %966 = vmatpush1.msra.mxu0 0.0
        %967 = vmatprep.subr.mxu0 0.0
        %968 = vmatpush1.msra.mxu0 0.0
        %969 = vmatprep.subr.mxu0 0.0
        %970 = vmatpush1.msra.mxu0 0.0
        %971 = vmatprep.subr.mxu0 0.0
        %972 = vmatpush1.msra.mxu0 0.0
        %973 = vmatprep.subr.mxu0 0.0
        %974 = vmatpush1.msra.mxu0 0.0
        %975 = vmatprep.subr.mxu0 0.0
        %976 = vmatpush1.msra.mxu0 0.0
        %977 = vmatprep.subr.mxu0 0.0
        %978 = vmatpush1.msra.mxu0 0.0
        %979 = vmatprep.subr.mxu0 0.0
        %980 = vmatpush1.msra.mxu0 0.0
        %981 = vmatprep.subr.mxu0 0.0
        %982 = vmatpush1.msra.mxu0 0.0
        %983 = vmatprep.subr.mxu0 0.0
        %984 = vmatpush1.msra.mxu0 0.0
        %985 = vmatprep.subr.mxu0 0.0
        %986 = vmatpush1.msra.mxu0 0.0
        %987 = vmatprep.subr.mxu0 0.0
        %988 = vmatpush1.msra.mxu0 0.0
        %989 = vmatprep.subr.mxu0 0.0
        %990 = vmatpush1.msra.mxu0 0.0
        %991 = vmatprep.subr.mxu0 0.0
        %992 = vmatpush1.msra.mxu0 0.0
        %993 = vmatprep.subr.mxu0 0.0
        %994 = vmatpush1.msra.mxu0 0.0
        %995 = vmatprep.subr.mxu0 0.0
        %996 = vmatpush1.msra.mxu0 0.0
        %997 = vmatprep.subr.mxu0 0.0
        %998 = vmatpush1.msra.mxu0 0.0
        %999 = vmatprep.subr.mxu0 0.0
        %1000 = vmatpush1.msra.mxu0 0.0
        %1001 = vmatprep.subr.mxu0 0.0
        %1002 = vmatpush1.msra.mxu0 0.0
        %1003 = vmatprep.subr.mxu0 0.0
        %1004 = vmatpush1.msra.mxu0 0.0
        %1005 = vmatprep.subr.mxu0 0.0
        %1006 = vmatpush1.msra.mxu0 0.0
        %1007 = vmatprep.subr.mxu0 0.0
        %1008 = vmatpush1.msra.mxu0 0.0
        %1009 = vmatprep.subr.mxu0 0.0
        %1010 = vmatpush1.msra.mxu0 0.0
        %1011 = vmatprep.subr.mxu0 0.0
        %1012 = vmatpush1.msra.mxu0 0.0
        %1013 = vmatprep.subr.mxu0 0.0
        %1014 = vmatpush1.msra.mxu0 0.0
        %1015 = vmatprep.subr.mxu0 0.0
        %1016 = vmatpush1.msra.mxu0 0.0
        %1017 = vmatprep.mubr.f32.mxu0 0.0
        %1018 = vmatmul.mubr.f32.gmra.mrb[0].mxu0 %v951
        %v1019 = vpop.f32.mrb[0].mxu0
        %v1020 = vadd.f32 0.0, %v1019
        %v1021 = vpop.f32.mrb[0].mxu0
        %1022 = vdwg.mxu0
        %v1023 = vld [vmem:[%s10] sm:$0xff]
        %s1024 = scalar_lea.vmem %s4, 32
        %v1025 = vld [vmem:[%s1024] sm:$0xff]
        %v1026 = vld [vmem:[%s1024 + $0x8] sm:$0xff]
        %v1027 = vld [vmem:[%s1024 + $0x10] sm:$0xff]
        %v1028 = vld [vmem:[%s1024 + $0x18] sm:$0xff]
        %s1029 = scalar_lea.vmem %s5, 1
        %v1030 = vld [vmem:[%s1029] sm:$0x1]
        %v1032 = vlaneseq
        %v1033 = vshrl.u32 %v1032, 7
        %v1034 = vsub.s32 0, %v1033
        %v1035 = vrot.slane %v1030, %v1034
        %1037 = vmatprep.subr.mxu0 0.0
        %1038 = vmatpush1.msra.mxu0 %v1025
        %1039 = vmatprep.subr.mxu0 0.0
        %1040 = vmatpush1.msra.mxu0 %v1026
        %1041 = vmatprep.subr.mxu0 0.0
        %1042 = vmatpush1.msra.mxu0 %v1027
        %1043 = vmatprep.subr.mxu0 0.0
        %1044 = vmatpush1.msra.mxu0 %v1028
        %1045 = vmatprep.subr.mxu0 0.0
        %1046 = vmatpush1.msra.mxu0 0.0
        %1047 = vmatprep.subr.mxu0 0.0
        %1048 = vmatpush1.msra.mxu0 0.0
        %1049 = vmatprep.subr.mxu0 0.0
        %1050 = vmatpush1.msra.mxu0 0.0
        %1051 = vmatprep.subr.mxu0 0.0
        %1052 = vmatpush1.msra.mxu0 0.0
        %1053 = vmatprep.subr.mxu0 0.0
        %1054 = vmatpush1.msra.mxu0 0.0
        %1055 = vmatprep.subr.mxu0 0.0
        %1056 = vmatpush1.msra.mxu0 0.0
        %1057 = vmatprep.subr.mxu0 0.0
        %1058 = vmatpush1.msra.mxu0 0.0
        %1059 = vmatprep.subr.mxu0 0.0
        %1060 = vmatpush1.msra.mxu0 0.0
        %1061 = vmatprep.subr.mxu0 0.0
        %1062 = vmatpush1.msra.mxu0 0.0
        %1063 = vmatprep.subr.mxu0 0.0
        %1064 = vmatpush1.msra.mxu0 0.0
        %1065 = vmatprep.subr.mxu0 0.0
        %1066 = vmatpush1.msra.mxu0 0.0
        %1067 = vmatprep.subr.mxu0 0.0
        %1068 = vmatpush1.msra.mxu0 0.0
        %1069 = vmatprep.subr.mxu0 0.0
        %1070 = vmatpush1.msra.mxu0 0.0
        %1071 = vmatprep.subr.mxu0 0.0
        %1072 = vmatpush1.msra.mxu0 0.0
        %1073 = vmatprep.subr.mxu0 0.0
        %1074 = vmatpush1.msra.mxu0 0.0
        %1075 = vmatprep.subr.mxu0 0.0
        %1076 = vmatpush1.msra.mxu0 0.0
        %1077 = vmatprep.subr.mxu0 0.0
        %1078 = vmatpush1.msra.mxu0 0.0
        %1079 = vmatprep.subr.mxu0 0.0
        %1080 = vmatpush1.msra.mxu0 0.0
        %1081 = vmatprep.subr.mxu0 0.0
        %1082 = vmatpush1.msra.mxu0 0.0
        %1083 = vmatprep.subr.mxu0 0.0
        %1084 = vmatpush1.msra.mxu0 0.0
        %1085 = vmatprep.subr.mxu0 0.0
        %1086 = vmatpush1.msra.mxu0 0.0
        %1087 = vmatprep.subr.mxu0 0.0
        %1088 = vmatpush1.msra.mxu0 0.0
        %1089 = vmatprep.subr.mxu0 0.0
        %1090 = vmatpush1.msra.mxu0 0.0
        %1091 = vmatprep.subr.mxu0 0.0
        %1092 = vmatpush1.msra.mxu0 0.0
        %1093 = vmatprep.subr.mxu0 0.0
        %1094 = vmatpush1.msra.mxu0 0.0
        %1095 = vmatprep.subr.mxu0 0.0
        %1096 = vmatpush1.msra.mxu0 0.0
        %1097 = vmatprep.subr.mxu0 0.0
        %1098 = vmatpush1.msra.mxu0 0.0
        %1099 = vmatprep.subr.mxu0 0.0
        %1100 = vmatpush1.msra.mxu0 0.0
        %1101 = vmatprep.mubr.f32.mxu0 0.0
        %1102 = vmatmul.mubr.f32.gmra.mrb[0].mxu0 %v617
        %v1103 = vpop.f32.mrb[0].mxu0
        %v1104 = vadd.f32 %v1035, %v1103
        %v1105 = vpop.f32.mrb[0].mxu0
        %1106 = vdwg.mxu0
        %s1107 = scalar_lea.vmem %s6, 32
        %v1108 = vld [vmem:[%s1107] sm:$0xff]
        %v1109 = vld [vmem:[%s1107 + $0x8] sm:$0xff]
        %v1110 = vld [vmem:[%s1107 + $0x10] sm:$0xff]
        %v1111 = vld [vmem:[%s1107 + $0x18] sm:$0xff]
        %s1112 = scalar_lea.vmem %s7, 1
        %v1113 = vld [vmem:[%s1112] sm:$0x1]
        %v1115 = vlaneseq
        %v1116 = vshrl.u32 %v1115, 7
        %v1117 = vsub.s32 0, %v1116
        %v1118 = vrot.slane %v1113, %v1117
        %1120 = vmatprep.subr.mxu0 0.0
        %1121 = vmatpush1.msra.mxu0 %v1108
        %1122 = vmatprep.subr.mxu0 0.0
        %1123 = vmatpush1.msra.mxu0 %v1109
        %1124 = vmatprep.subr.mxu0 0.0
        %1125 = vmatpush1.msra.mxu0 %v1110
        %1126 = vmatprep.subr.mxu0 0.0
        %1127 = vmatpush1.msra.mxu0 %v1111
        %1128 = vmatprep.subr.mxu0 0.0
        %1129 = vmatpush1.msra.mxu0 0.0
        %1130 = vmatprep.subr.mxu0 0.0
        %1131 = vmatpush1.msra.mxu0 0.0
        %1132 = vmatprep.subr.mxu0 0.0
        %1133 = vmatpush1.msra.mxu0 0.0
        %1134 = vmatprep.subr.mxu0 0.0
        %1135 = vmatpush1.msra.mxu0 0.0
        %1136 = vmatprep.subr.mxu0 0.0
        %1137 = vmatpush1.msra.mxu0 0.0
        %1138 = vmatprep.subr.mxu0 0.0
        %1139 = vmatpush1.msra.mxu0 0.0
        %1140 = vmatprep.subr.mxu0 0.0
        %1141 = vmatpush1.msra.mxu0 0.0
        %1142 = vmatprep.subr.mxu0 0.0
        %1143 = vmatpush1.msra.mxu0 0.0
        %1144 = vmatprep.subr.mxu0 0.0
        %1145 = vmatpush1.msra.mxu0 0.0
        %1146 = vmatprep.subr.mxu0 0.0
        %1147 = vmatpush1.msra.mxu0 0.0
        %1148 = vmatprep.subr.mxu0 0.0
        %1149 = vmatpush1.msra.mxu0 0.0
        %1150 = vmatprep.subr.mxu0 0.0
        %1151 = vmatpush1.msra.mxu0 0.0
        %1152 = vmatprep.subr.mxu0 0.0
        %1153 = vmatpush1.msra.mxu0 0.0
        %1154 = vmatprep.subr.mxu0 0.0
        %1155 = vmatpush1.msra.mxu0 0.0
        %1156 = vmatprep.subr.mxu0 0.0
        %1157 = vmatpush1.msra.mxu0 0.0
        %1158 = vmatprep.subr.mxu0 0.0
        %1159 = vmatpush1.msra.mxu0 0.0
        %1160 = vmatprep.subr.mxu0 0.0
        %1161 = vmatpush1.msra.mxu0 0.0
        %1162 = vmatprep.subr.mxu0 0.0
        %1163 = vmatpush1.msra.mxu0 0.0
        %1164 = vmatprep.subr.mxu0 0.0
        %1165 = vmatpush1.msra.mxu0 0.0
        %1166 = vmatprep.subr.mxu0 0.0
        %1167 = vmatpush1.msra.mxu0 0.0
        %1168 = vmatprep.subr.mxu0 0.0
        %1169 = vmatpush1.msra.mxu0 0.0
        %1170 = vmatprep.subr.mxu0 0.0
        %1171 = vmatpush1.msra.mxu0 0.0
        %1172 = vmatprep.subr.mxu0 0.0
        %1173 = vmatpush1.msra.mxu0 0.0
        %1174 = vmatprep.subr.mxu0 0.0
        %1175 = vmatpush1.msra.mxu0 0.0
        %1176 = vmatprep.subr.mxu0 0.0
        %1177 = vmatpush1.msra.mxu0 0.0
        %1178 = vmatprep.subr.mxu0 0.0
        %1179 = vmatpush1.msra.mxu0 0.0
        %1180 = vmatprep.subr.mxu0 0.0
        %1181 = vmatpush1.msra.mxu0 0.0
        %1182 = vmatprep.subr.mxu0 0.0
        %1183 = vmatpush1.msra.mxu0 0.0
        %1184 = vmatprep.mubr.f32.mxu0 0.0
        %1185 = vmatmul.mubr.f32.gmra.mrb[0].mxu0 %v701
        %v1186 = vpop.f32.mrb[0].mxu0
        %v1187 = vadd.f32 %v1118, %v1186
        %v1188 = vpop.f32.mrb[0].mxu0
        %1189 = vdwg.mxu0
        %s1190 = scalar_lea.vmem %s8, 32
        %v1191 = vld [vmem:[%s1190] sm:$0xff]
        %v1192 = vld [vmem:[%s1190 + $0x8] sm:$0xff]
        %v1193 = vld [vmem:[%s1190 + $0x10] sm:$0xff]
        %v1194 = vld [vmem:[%s1190 + $0x18] sm:$0xff]
        %s1195 = scalar_lea.vmem %s9, 1
        %v1196 = vld [vmem:[%s1195] sm:$0x1]
        %v1198 = vlaneseq
        %v1199 = vshrl.u32 %v1198, 7
        %v1200 = vsub.s32 0, %v1199
        %v1201 = vrot.slane %v1196, %v1200
        %1203 = vmatprep.subr.mxu0 0.0
        %1204 = vmatpush1.msra.mxu0 %v1191
        %1205 = vmatprep.subr.mxu0 0.0
        %1206 = vmatpush1.msra.mxu0 %v1192
        %1207 = vmatprep.subr.mxu0 0.0
        %1208 = vmatpush1.msra.mxu0 %v1193
        %1209 = vmatprep.subr.mxu0 0.0
        %1210 = vmatpush1.msra.mxu0 %v1194
        %1211 = vmatprep.subr.mxu0 0.0
        %1212 = vmatpush1.msra.mxu0 0.0
        %1213 = vmatprep.subr.mxu0 0.0
        %1214 = vmatpush1.msra.mxu0 0.0
        %1215 = vmatprep.subr.mxu0 0.0
        %1216 = vmatpush1.msra.mxu0 0.0
        %1217 = vmatprep.subr.mxu0 0.0
        %1218 = vmatpush1.msra.mxu0 0.0
        %1219 = vmatprep.subr.mxu0 0.0
        %1220 = vmatpush1.msra.mxu0 0.0
        %1221 = vmatprep.subr.mxu0 0.0
        %1222 = vmatpush1.msra.mxu0 0.0
        %1223 = vmatprep.subr.mxu0 0.0
        %1224 = vmatpush1.msra.mxu0 0.0
        %1225 = vmatprep.subr.mxu0 0.0
        %1226 = vmatpush1.msra.mxu0 0.0
        %1227 = vmatprep.subr.mxu0 0.0
        %1228 = vmatpush1.msra.mxu0 0.0
        %1229 = vmatprep.subr.mxu0 0.0
        %1230 = vmatpush1.msra.mxu0 0.0
        %1231 = vmatprep.subr.mxu0 0.0
        %1232 = vmatpush1.msra.mxu0 0.0
        %1233 = vmatprep.subr.mxu0 0.0
        %1234 = vmatpush1.msra.mxu0 0.0
        %1235 = vmatprep.subr.mxu0 0.0
        %1236 = vmatpush1.msra.mxu0 0.0
        %1237 = vmatprep.subr.mxu0 0.0
        %1238 = vmatpush1.msra.mxu0 0.0
        %1239 = vmatprep.subr.mxu0 0.0
        %1240 = vmatpush1.msra.mxu0 0.0
        %1241 = vmatprep.subr.mxu0 0.0
        %1242 = vmatpush1.msra.mxu0 0.0
        %1243 = vmatprep.subr.mxu0 0.0
        %1244 = vmatpush1.msra.mxu0 0.0
        %1245 = vmatprep.subr.mxu0 0.0
        %1246 = vmatpush1.msra.mxu0 0.0
        %1247 = vmatprep.subr.mxu0 0.0
        %1248 = vmatpush1.msra.mxu0 0.0
        %1249 = vmatprep.subr.mxu0 0.0
        %1250 = vmatpush1.msra.mxu0 0.0
        %1251 = vmatprep.subr.mxu0 0.0
        %1252 = vmatpush1.msra.mxu0 0.0
        %1253 = vmatprep.subr.mxu0 0.0
        %1254 = vmatpush1.msra.mxu0 0.0
        %1255 = vmatprep.subr.mxu0 0.0
        %1256 = vmatpush1.msra.mxu0 0.0
        %1257 = vmatprep.subr.mxu0 0.0
        %1258 = vmatpush1.msra.mxu0 0.0
        %1259 = vmatprep.subr.mxu0 0.0
        %1260 = vmatpush1.msra.mxu0 0.0
        %1261 = vmatprep.subr.mxu0 0.0
        %1262 = vmatpush1.msra.mxu0 0.0
        %1263 = vmatprep.subr.mxu0 0.0
        %1264 = vmatpush1.msra.mxu0 0.0
        %1265 = vmatprep.subr.mxu0 0.0
        %1266 = vmatpush1.msra.mxu0 0.0
        %1267 = vmatprep.mubr.f32.mxu0 0.0
        %1268 = vmatmul.mubr.f32.gmra.mrb[0].mxu0 %v785
        %v1269 = vpop.f32.mrb[0].mxu0
        %v1270 = vadd.f32 %v1201, %v1269
        %v1271 = vpop.f32.mrb[0].mxu0
        %1272 = vdwg.mxu0
        %s1273 = scalar_lea.vmem %s527, 8 [#allocation2]
        %v1274 = vld [vmem:[%s1273] sm:$0xff]
        %v1276 = vsel %vm858, %v1104, 0
        %v1279 = vsel %vm858, %v1187, 0
        %1281 = vmatprep.subr.mxu0 0.0
        %1282 = vmatpush1.xpose.msra.mxu0 %v1279
        %1283 = vmatprep.subr.mxu0 0.0
        %1284 = vmatpush1.xpose.msra.mxu0 0.0
        %1285 = vmatprep.subr.mxu0 0.0
        %1286 = vmatpush1.xpose.msra.mxu0 0.0
        %1287 = vmatprep.subr.mxu0 0.0
        %1288 = vmatpush1.xpose.msra.mxu0 0.0
        %1289 = vmatprep.subr.mxu0 0.0
        %1290 = vmatpush1.xpose.msra.mxu0 0.0
        %1291 = vmatprep.subr.mxu0 0.0
        %1292 = vmatpush1.xpose.msra.mxu0 0.0
        %1293 = vmatprep.subr.mxu0 0.0
        %1294 = vmatpush1.xpose.msra.mxu0 0.0
        %1295 = vmatprep.subr.mxu0 0.0
        %1296 = vmatpush1.xpose.msra.mxu0 0.0
        %1297 = vmatprep.subr.mxu0 0.0
        %1298 = vmatpush1.xpose.msra.mxu0 0.0
        %1299 = vmatprep.subr.mxu0 0.0
        %1300 = vmatpush1.xpose.msra.mxu0 0.0
        %1301 = vmatprep.subr.mxu0 0.0
        %1302 = vmatpush1.xpose.msra.mxu0 0.0
        %1303 = vmatprep.subr.mxu0 0.0
        %1304 = vmatpush1.xpose.msra.mxu0 0.0
        %1305 = vmatprep.subr.mxu0 0.0
        %1306 = vmatpush1.xpose.msra.mxu0 0.0
        %1307 = vmatprep.subr.mxu0 0.0
        %1308 = vmatpush1.xpose.msra.mxu0 0.0
        %1309 = vmatprep.subr.mxu0 0.0
        %1310 = vmatpush1.xpose.msra.mxu0 0.0
        %1311 = vmatprep.subr.mxu0 0.0
        %1312 = vmatpush1.xpose.msra.mxu0 0.0
        %1313 = vmatprep.subr.mxu0 0.0
        %1314 = vmatpush1.xpose.msra.mxu0 0.0
        %1315 = vmatprep.subr.mxu0 0.0
        %1316 = vmatpush1.xpose.msra.mxu0 0.0
        %1317 = vmatprep.subr.mxu0 0.0
        %1318 = vmatpush1.xpose.msra.mxu0 0.0
        %1319 = vmatprep.subr.mxu0 0.0
        %1320 = vmatpush1.xpose.msra.mxu0 0.0
        %1321 = vmatprep.subr.mxu0 0.0
        %1322 = vmatpush1.xpose.msra.mxu0 0.0
        %1323 = vmatprep.subr.mxu0 0.0
        %1324 = vmatpush1.xpose.msra.mxu0 0.0
        %1325 = vmatprep.subr.mxu0 0.0
        %1326 = vmatpush1.xpose.msra.mxu0 0.0
        %1327 = vmatprep.subr.mxu0 0.0
        %1328 = vmatpush1.xpose.msra.mxu0 0.0
        %1329 = vmatprep.subr.mxu0 0.0
        %1330 = vmatpush1.xpose.msra.mxu0 0.0
        %1331 = vmatprep.subr.mxu0 0.0
        %1332 = vmatpush1.xpose.msra.mxu0 0.0
        %1333 = vmatprep.subr.mxu0 0.0
        %1334 = vmatpush1.xpose.msra.mxu0 0.0
        %1335 = vmatprep.subr.mxu0 0.0
        %1336 = vmatpush1.xpose.msra.mxu0 0.0
        %1337 = vmatprep.subr.mxu0 0.0
        %1338 = vmatpush1.xpose.msra.mxu0 0.0
        %1339 = vmatprep.subr.mxu0 0.0
        %1340 = vmatpush1.xpose.msra.mxu0 0.0
        %1341 = vmatprep.subr.mxu0 0.0
        %1342 = vmatpush1.xpose.msra.mxu0 0.0
        %1343 = vmatprep.subr.mxu0 0.0
        %1344 = vmatpush1.xpose.msra.mxu0 0.0
        %1345 = vmatprep.mubr.f32.mxu0 0.0
        %1346 = vmatmul.mubr.f32.gmra.mrb[0].mxu0 %v1276
        %v1347 = vpop.f32.mrb[0].mxu0
        %v1348 = vadd.f32 %v1274, %v1347
        %v1349 = vpop.f32.mrb[0].mxu0
        %1350 = vdwg.mxu0
        %v1351 = vsel %vm858, %v1348, -inf
        %1352 = vmax.xlane.f32.xlu0 %v1351
        %v1353 = vpop.xlane.xlu0 %1352
        %v1354 = vsub.f32 %v1348, %v1353
        %v1355 = vmul.f32 %v1354, 1.442695
        %v1356 = vpow.pop %v1355
        %v1357 = vsel %vm858, %v1356, 0.0
        %1358 = vadd.xlane.f32.xlu0 %v1357
        %v1359 = vpop.xlane.xlu0 %1358
        %v1360 = vrcp.pop %v1359
        %v1361 = vmul.f32 %v1359, %v1360
        %v1362 = vsub.f32 2.0, %v1361
        %v1363 = vmul.f32 %v1360, %v1362
        %v1364 = vmul.f32 %v1356, %v1363
        %s1365 = scalar_lea.vmem %s588, 8 [#allocation5]
        %1366 = vst.msk [vmem:[%s1365] sm:$0xff] %vm858, %v1364
        %v1368 = vsel %vm858, %v1364, 0
        %1370 = vmatprep.subr.mxu0 0.0
        %1371 = vmatpush1.msra.mxu0 %v1270
        %1372 = vmatprep.subr.mxu0 0.0
        %1373 = vmatpush1.msra.mxu0 0.0
        %1374 = vmatprep.subr.mxu0 0.0
        %1375 = vmatpush1.msra.mxu0 0.0
        %1376 = vmatprep.subr.mxu0 0.0
        %1377 = vmatpush1.msra.mxu0 0.0
        %1378 = vmatprep.subr.mxu0 0.0
        %1379 = vmatpush1.msra.mxu0 0.0
        %1380 = vmatprep.subr.mxu0 0.0
        %1381 = vmatpush1.msra.mxu0 0.0
        %1382 = vmatprep.subr.mxu0 0.0
        %1383 = vmatpush1.msra.mxu0 0.0
        %1384 = vmatprep.subr.mxu0 0.0
        %1385 = vmatpush1.msra.mxu0 0.0
        %1386 = vmatprep.subr.mxu0 0.0
        %1387 = vmatpush1.msra.mxu0 0.0
        %1388 = vmatprep.subr.mxu0 0.0
        %1389 = vmatpush1.msra.mxu0 0.0
        %1390 = vmatprep.subr.mxu0 0.0
        %1391 = vmatpush1.msra.mxu0 0.0
        %1392 = vmatprep.subr.mxu0 0.0
        %1393 = vmatpush1.msra.mxu0 0.0
        %1394 = vmatprep.subr.mxu0 0.0
        %1395 = vmatpush1.msra.mxu0 0.0
        %1396 = vmatprep.subr.mxu0 0.0
        %1397 = vmatpush1.msra.mxu0 0.0
        %1398 = vmatprep.subr.mxu0 0.0
        %1399 = vmatpush1.msra.mxu0 0.0
        %1400 = vmatprep.subr.mxu0 0.0
        %1401 = vmatpush1.msra.mxu0 0.0
        %1402 = vmatprep.subr.mxu0 0.0
        %1403 = vmatpush1.msra.mxu0 0.0
        %1404 = vmatprep.subr.mxu0 0.0
        %1405 = vmatpush1.msra.mxu0 0.0
        %1406 = vmatprep.subr.mxu0 0.0
        %1407 = vmatpush1.msra.mxu0 0.0
        %1408 = vmatprep.subr.mxu0 0.0
        %1409 = vmatpush1.msra.mxu0 0.0
        %1410 = vmatprep.subr.mxu0 0.0
        %1411 = vmatpush1.msra.mxu0 0.0
        %1412 = vmatprep.subr.mxu0 0.0
        %1413 = vmatpush1.msra.mxu0 0.0
        %1414 = vmatprep.subr.mxu0 0.0
        %1415 = vmatpush1.msra.mxu0 0.0
        %1416 = vmatprep.subr.mxu0 0.0
        %1417 = vmatpush1.msra.mxu0 0.0
        %1418 = vmatprep.subr.mxu0 0.0
        %1419 = vmatpush1.msra.mxu0 0.0
        %1420 = vmatprep.subr.mxu0 0.0
        %1421 = vmatpush1.msra.mxu0 0.0
        %1422 = vmatprep.subr.mxu0 0.0
        %1423 = vmatpush1.msra.mxu0 0.0
        %1424 = vmatprep.subr.mxu0 0.0
        %1425 = vmatpush1.msra.mxu0 0.0
        %1426 = vmatprep.subr.mxu0 0.0
        %1427 = vmatpush1.msra.mxu0 0.0
        %1428 = vmatprep.subr.mxu0 0.0
        %1429 = vmatpush1.msra.mxu0 0.0
        %1430 = vmatprep.subr.mxu0 0.0
        %1431 = vmatpush1.msra.mxu0 0.0
        %1432 = vmatprep.subr.mxu0 0.0
        %1433 = vmatpush1.msra.mxu0 0.0
        %1434 = vmatprep.mubr.f32.mxu0 0.0
        %1435 = vmatmul.mubr.f32.gmra.mrb[0].mxu0 %v1368
        %v1436 = vpop.f32.mrb[0].mxu0
        %v1437 = vadd.f32 0.0, %v1436
        %v1438 = vpop.f32.mrb[0].mxu0
        %1439 = vdwg.mxu0
        %s1440 = scalar_lea.vmem %s10, 8
        %v1441 = vld [vmem:[%s1440] sm:$0xff]
        %v1443 = vsel %vm858, %v1437, 0
        %1445 = vmatprep.subr.mxu0 0.0
        %1446 = vmatpush1.msra.mxu0 %v1441
        %1447 = vmatprep.subr.mxu0 0.0
        %1448 = vmatpush1.msra.mxu0 0.0
        %1449 = vmatprep.subr.mxu0 0.0
        %1450 = vmatpush1.msra.mxu0 0.0
        %1451 = vmatprep.subr.mxu0 0.0
        %1452 = vmatpush1.msra.mxu0 0.0
        %1453 = vmatprep.subr.mxu0 0.0
        %1454 = vmatpush1.msra.mxu0 0.0
        %1455 = vmatprep.subr.mxu0 0.0
        %1456 = vmatpush1.msra.mxu0 0.0
        %1457 = vmatprep.subr.mxu0 0.0
        %1458 = vmatpush1.msra.mxu0 0.0
        %1459 = vmatprep.subr.mxu0 0.0
        %1460 = vmatpush1.msra.mxu0 0.0
        %1461 = vmatprep.subr.mxu0 0.0
        %1462 = vmatpush1.msra.mxu0 0.0
        %1463 = vmatprep.subr.mxu0 0.0
        %1464 = vmatpush1.msra.mxu0 0.0
        %1465 = vmatprep.subr.mxu0 0.0
        %1466 = vmatpush1.msra.mxu0 0.0
        %1467 = vmatprep.subr.mxu0 0.0
        %1468 = vmatpush1.msra.mxu0 0.0
        %1469 = vmatprep.subr.mxu0 0.0
        %1470 = vmatpush1.msra.mxu0 0.0
        %1471 = vmatprep.subr.mxu0 0.0
        %1472 = vmatpush1.msra.mxu0 0.0
        %1473 = vmatprep.subr.mxu0 0.0
        %1474 = vmatpush1.msra.mxu0 0.0
        %1475 = vmatprep.subr.mxu0 0.0
        %1476 = vmatpush1.msra.mxu0 0.0
        %1477 = vmatprep.subr.mxu0 0.0
        %1478 = vmatpush1.msra.mxu0 0.0
        %1479 = vmatprep.subr.mxu0 0.0
        %1480 = vmatpush1.msra.mxu0 0.0
        %1481 = vmatprep.subr.mxu0 0.0
        %1482 = vmatpush1.msra.mxu0 0.0
        %1483 = vmatprep.subr.mxu0 0.0
        %1484 = vmatpush1.msra.mxu0 0.0
        %1485 = vmatprep.subr.mxu0 0.0
        %1486 = vmatpush1.msra.mxu0 0.0
        %1487 = vmatprep.subr.mxu0 0.0
        %1488 = vmatpush1.msra.mxu0 0.0
        %1489 = vmatprep.subr.mxu0 0.0
        %1490 = vmatpush1.msra.mxu0 0.0
        %1491 = vmatprep.subr.mxu0 0.0
        %1492 = vmatpush1.msra.mxu0 0.0
        %1493 = vmatprep.subr.mxu0 0.0
        %1494 = vmatpush1.msra.mxu0 0.0
        %1495 = vmatprep.subr.mxu0 0.0
        %1496 = vmatpush1.msra.mxu0 0.0
        %1497 = vmatprep.subr.mxu0 0.0
        %1498 = vmatpush1.msra.mxu0 0.0
        %1499 = vmatprep.subr.mxu0 0.0
        %1500 = vmatpush1.msra.mxu0 0.0
        %1501 = vmatprep.subr.mxu0 0.0
        %1502 = vmatpush1.msra.mxu0 0.0
        %1503 = vmatprep.subr.mxu0 0.0
        %1504 = vmatpush1.msra.mxu0 0.0
        %1505 = vmatprep.subr.mxu0 0.0
        %1506 = vmatpush1.msra.mxu0 0.0
        %1507 = vmatprep.subr.mxu0 0.0
        %1508 = vmatpush1.msra.mxu0 0.0
        %1509 = vmatprep.mubr.f32.mxu0 0.0
        %1510 = vmatmul.mubr.f32.gmra.mrb[0].mxu0 %v1443
        %v1511 = vpop.f32.mrb[0].mxu0
        %v1512 = vadd.f32 0.0, %v1511
        %v1513 = vpop.f32.mrb[0].mxu0
        %1514 = vdwg.mxu0
        %v1516 = vsel %vm858, %v1020, 0
        %1518 = vmatprep.subr.mxu0 0.0
        %1519 = vmatpush1.msra.mxu0 %v1023
        %1520 = vmatprep.subr.mxu0 0.0
        %1521 = vmatpush1.msra.mxu0 0.0
        %1522 = vmatprep.subr.mxu0 0.0
        %1523 = vmatpush1.msra.mxu0 0.0
        %1524 = vmatprep.subr.mxu0 0.0
        %1525 = vmatpush1.msra.mxu0 0.0
        %1526 = vmatprep.subr.mxu0 0.0
        %1527 = vmatpush1.msra.mxu0 0.0
        %1528 = vmatprep.subr.mxu0 0.0
        %1529 = vmatpush1.msra.mxu0 0.0
        %1530 = vmatprep.subr.mxu0 0.0
        %1531 = vmatpush1.msra.mxu0 0.0
        %1532 = vmatprep.subr.mxu0 0.0
        %1533 = vmatpush1.msra.mxu0 0.0
        %1534 = vmatprep.subr.mxu0 0.0
        %1535 = vmatpush1.msra.mxu0 0.0
        %1536 = vmatprep.subr.mxu0 0.0
        %1537 = vmatpush1.msra.mxu0 0.0
        %1538 = vmatprep.subr.mxu0 0.0
        %1539 = vmatpush1.msra.mxu0 0.0
        %1540 = vmatprep.subr.mxu0 0.0
        %1541 = vmatpush1.msra.mxu0 0.0
        %1542 = vmatprep.subr.mxu0 0.0
        %1543 = vmatpush1.msra.mxu0 0.0
        %1544 = vmatprep.subr.mxu0 0.0
        %1545 = vmatpush1.msra.mxu0 0.0
        %1546 = vmatprep.subr.mxu0 0.0
        %1547 = vmatpush1.msra.mxu0 0.0
        %1548 = vmatprep.subr.mxu0 0.0
        %1549 = vmatpush1.msra.mxu0 0.0
        %1550 = vmatprep.subr.mxu0 0.0
        %1551 = vmatpush1.msra.mxu0 0.0
        %1552 = vmatprep.subr.mxu0 0.0
        %1553 = vmatpush1.msra.mxu0 0.0
        %1554 = vmatprep.subr.mxu0 0.0
        %1555 = vmatpush1.msra.mxu0 0.0
        %1556 = vmatprep.subr.mxu0 0.0
        %1557 = vmatpush1.msra.mxu0 0.0
        %1558 = vmatprep.subr.mxu0 0.0
        %1559 = vmatpush1.msra.mxu0 0.0
        %1560 = vmatprep.subr.mxu0 0.0
        %1561 = vmatpush1.msra.mxu0 0.0
        %1562 = vmatprep.subr.mxu0 0.0
        %1563 = vmatpush1.msra.mxu0 0.0
        %1564 = vmatprep.subr.mxu0 0.0
        %1565 = vmatpush1.msra.mxu0 0.0
        %1566 = vmatprep.subr.mxu0 0.0
        %1567 = vmatpush1.msra.mxu0 0.0
        %1568 = vmatprep.subr.mxu0 0.0
        %1569 = vmatpush1.msra.mxu0 0.0
        %1570 = vmatprep.subr.mxu0 0.0
        %1571 = vmatpush1.msra.mxu0 0.0
        %1572 = vmatprep.subr.mxu0 0.0
        %1573 = vmatpush1.msra.mxu0 0.0
        %1574 = vmatprep.subr.mxu0 0.0
        %1575 = vmatpush1.msra.mxu0 0.0
        %1576 = vmatprep.subr.mxu0 0.0
        %1577 = vmatpush1.msra.mxu0 0.0
        %1578 = vmatprep.subr.mxu0 0.0
        %1579 = vmatpush1.msra.mxu0 0.0
        %1580 = vmatprep.subr.mxu0 0.0
        %1581 = vmatpush1.msra.mxu0 0.0
        %1582 = vmatprep.mubr.f32.mxu0 0.0
        %1583 = vmatmul.mubr.f32.gmra.mrb[0].mxu0 %v1516
        %v1584 = vpop.f32.mrb[0].mxu0
        %v1585 = vadd.f32 %v1512, %v1584
        %v1586 = vpop.f32.mrb[0].mxu0
        %1587 = vdwg.mxu0
        %s1588 = scalar_lea.vmem %s4, 64
        %v1589 = vld [vmem:[%s1588] sm:$0xff]
        %v1590 = vld [vmem:[%s1588 + $0x8] sm:$0xff]
        %v1591 = vld [vmem:[%s1588 + $0x10] sm:$0xff]
        %v1592 = vld [vmem:[%s1588 + $0x18] sm:$0xff]
        %s1593 = scalar_lea.vmem %s5, 2
        %v1594 = vld [vmem:[%s1593] sm:$0x1]
        %v1596 = vlaneseq
        %v1597 = vshrl.u32 %v1596, 7
        %v1598 = vsub.s32 0, %v1597
        %v1599 = vrot.slane %v1594, %v1598
        %1601 = vmatprep.subr.mxu0 0.0
        %1602 = vmatpush1.msra.mxu0 %v1589
        %1603 = vmatprep.subr.mxu0 0.0
        %1604 = vmatpush1.msra.mxu0 %v1590
        %1605 = vmatprep.subr.mxu0 0.0
        %1606 = vmatpush1.msra.mxu0 %v1591
        %1607 = vmatprep.subr.mxu0 0.0
        %1608 = vmatpush1.msra.mxu0 %v1592
        %1609 = vmatprep.subr.mxu0 0.0
        %1610 = vmatpush1.msra.mxu0 0.0
        %1611 = vmatprep.subr.mxu0 0.0
        %1612 = vmatpush1.msra.mxu0 0.0
        %1613 = vmatprep.subr.mxu0 0.0
        %1614 = vmatpush1.msra.mxu0 0.0
        %1615 = vmatprep.subr.mxu0 0.0
        %1616 = vmatpush1.msra.mxu0 0.0
        %1617 = vmatprep.subr.mxu0 0.0
        %1618 = vmatpush1.msra.mxu0 0.0
        %1619 = vmatprep.subr.mxu0 0.0
        %1620 = vmatpush1.msra.mxu0 0.0
        %1621 = vmatprep.subr.mxu0 0.0
        %1622 = vmatpush1.msra.mxu0 0.0
        %1623 = vmatprep.subr.mxu0 0.0
        %1624 = vmatpush1.msra.mxu0 0.0
        %1625 = vmatprep.subr.mxu0 0.0
        %1626 = vmatpush1.msra.mxu0 0.0
        %1627 = vmatprep.subr.mxu0 0.0
        %1628 = vmatpush1.msra.mxu0 0.0
        %1629 = vmatprep.subr.mxu0 0.0
        %1630 = vmatpush1.msra.mxu0 0.0
        %1631 = vmatprep.subr.mxu0 0.0
        %1632 = vmatpush1.msra.mxu0 0.0
        %1633 = vmatprep.subr.mxu0 0.0
        %1634 = vmatpush1.msra.mxu0 0.0
        %1635 = vmatprep.subr.mxu0 0.0
        %1636 = vmatpush1.msra.mxu0 0.0
        %1637 = vmatprep.subr.mxu0 0.0
        %1638 = vmatpush1.msra.mxu0 0.0
        %1639 = vmatprep.subr.mxu0 0.0
        %1640 = vmatpush1.msra.mxu0 0.0
        %1641 = vmatprep.subr.mxu0 0.0
        %1642 = vmatpush1.msra.mxu0 0.0
        %1643 = vmatprep.subr.mxu0 0.0
        %1644 = vmatpush1.msra.mxu0 0.0
        %1645 = vmatprep.subr.mxu0 0.0
        %1646 = vmatpush1.msra.mxu0 0.0
        %1647 = vmatprep.subr.mxu0 0.0
        %1648 = vmatpush1.msra.mxu0 0.0
        %1649 = vmatprep.subr.mxu0 0.0
        %1650 = vmatpush1.msra.mxu0 0.0
        %1651 = vmatprep.subr.mxu0 0.0
        %1652 = vmatpush1.msra.mxu0 0.0
        %1653 = vmatprep.subr.mxu0 0.0
        %1654 = vmatpush1.msra.mxu0 0.0
        %1655 = vmatprep.subr.mxu0 0.0
        %1656 = vmatpush1.msra.mxu0 0.0
        %1657 = vmatprep.subr.mxu0 0.0
        %1658 = vmatpush1.msra.mxu0 0.0
        %1659 = vmatprep.subr.mxu0 0.0
        %1660 = vmatpush1.msra.mxu0 0.0
        %1661 = vmatprep.subr.mxu0 0.0
        %1662 = vmatpush1.msra.mxu0 0.0
        %1663 = vmatprep.subr.mxu0 0.0
        %1664 = vmatpush1.msra.mxu0 0.0
        %1665 = vmatprep.mubr.f32.mxu0 0.0
        %1666 = vmatmul.mubr.f32.gmra.mrb[0].mxu0 %v617
        %v1667 = vpop.f32.mrb[0].mxu0
        %v1668 = vadd.f32 %v1599, %v1667
        %v1669 = vpop.f32.mrb[0].mxu0
        %1670 = vdwg.mxu0
        %s1671 = scalar_lea.vmem %s6, 64
        %v1672 = vld [vmem:[%s1671] sm:$0xff]
        %v1673 = vld [vmem:[%s1671 + $0x8] sm:$0xff]
        %v1674 = vld [vmem:[%s1671 + $0x10] sm:$0xff]
        %v1675 = vld [vmem:[%s1671 + $0x18] sm:$0xff]
        %s1676 = scalar_lea.vmem %s7, 2
        %v1677 = vld [vmem:[%s1676] sm:$0x1]
        %v1679 = vlaneseq
        %v1680 = vshrl.u32 %v1679, 7
        %v1681 = vsub.s32 0, %v1680
        %v1682 = vrot.slane %v1677, %v1681
        %1684 = vmatprep.subr.mxu0 0.0
        %1685 = vmatpush1.msra.mxu0 %v1672
        %1686 = vmatprep.subr.mxu0 0.0
        %1687 = vmatpush1.msra.mxu0 %v1673
        %1688 = vmatprep.subr.mxu0 0.0
        %1689 = vmatpush1.msra.mxu0 %v1674
        %1690 = vmatprep.subr.mxu0 0.0
        %1691 = vmatpush1.msra.mxu0 %v1675
        %1692 = vmatprep.subr.mxu0 0.0
        %1693 = vmatpush1.msra.mxu0 0.0
        %1694 = vmatprep.subr.mxu0 0.0
        %1695 = vmatpush1.msra.mxu0 0.0
        %1696 = vmatprep.subr.mxu0 0.0
        %1697 = vmatpush1.msra.mxu0 0.0
        %1698 = vmatprep.subr.mxu0 0.0
        %1699 = vmatpush1.msra.mxu0 0.0
        %1700 = vmatprep.subr.mxu0 0.0
        %1701 = vmatpush1.msra.mxu0 0.0
        %1702 = vmatprep.subr.mxu0 0.0
        %1703 = vmatpush1.msra.mxu0 0.0
        %1704 = vmatprep.subr.mxu0 0.0
        %1705 = vmatpush1.msra.mxu0 0.0
        %1706 = vmatprep.subr.mxu0 0.0
        %1707 = vmatpush1.msra.mxu0 0.0
        %1708 = vmatprep.subr.mxu0 0.0
        %1709 = vmatpush1.msra.mxu0 0.0
        %1710 = vmatprep.subr.mxu0 0.0
        %1711 = vmatpush1.msra.mxu0 0.0
        %1712 = vmatprep.subr.mxu0 0.0
        %1713 = vmatpush1.msra.mxu0 0.0
        %1714 = vmatprep.subr.mxu0 0.0
        %1715 = vmatpush1.msra.mxu0 0.0
        %1716 = vmatprep.subr.mxu0 0.0
        %1717 = vmatpush1.msra.mxu0 0.0
        %1718 = vmatprep.subr.mxu0 0.0
        %1719 = vmatpush1.msra.mxu0 0.0
        %1720 = vmatprep.subr.mxu0 0.0
        %1721 = vmatpush1.msra.mxu0 0.0
        %1722 = vmatprep.subr.mxu0 0.0
        %1723 = vmatpush1.msra.mxu0 0.0
        %1724 = vmatprep.subr.mxu0 0.0
        %1725 = vmatpush1.msra.mxu0 0.0
        %1726 = vmatprep.subr.mxu0 0.0
        %1727 = vmatpush1.msra.mxu0 0.0
        %1728 = vmatprep.subr.mxu0 0.0
        %1729 = vmatpush1.msra.mxu0 0.0
        %1730 = vmatprep.subr.mxu0 0.0
        %1731 = vmatpush1.msra.mxu0 0.0
        %1732 = vmatprep.subr.mxu0 0.0
        %1733 = vmatpush1.msra.mxu0 0.0
        %1734 = vmatprep.subr.mxu0 0.0
        %1735 = vmatpush1.msra.mxu0 0.0
        %1736 = vmatprep.subr.mxu0 0.0
        %1737 = vmatpush1.msra.mxu0 0.0
        %1738 = vmatprep.subr.mxu0 0.0
        %1739 = vmatpush1.msra.mxu0 0.0
        %1740 = vmatprep.subr.mxu0 0.0
        %1741 = vmatpush1.msra.mxu0 0.0
        %1742 = vmatprep.subr.mxu0 0.0
        %1743 = vmatpush1.msra.mxu0 0.0
        %1744 = vmatprep.subr.mxu0 0.0
        %1745 = vmatpush1.msra.mxu0 0.0
        %1746 = vmatprep.subr.mxu0 0.0
        %1747 = vmatpush1.msra.mxu0 0.0
        %1748 = vmatprep.mubr.f32.mxu0 0.0
        %1749 = vmatmul.mubr.f32.gmra.mrb[0].mxu0 %v701
        %v1750 = vpop.f32.mrb[0].mxu0
        %v1751 = vadd.f32 %v1682, %v1750
        %v1752 = vpop.f32.mrb[0].mxu0
        %1753 = vdwg.mxu0
        %s1754 = scalar_lea.vmem %s8, 64
        %v1755 = vld [vmem:[%s1754] sm:$0xff]
        %v1756 = vld [vmem:[%s1754 + $0x8] sm:$0xff]
        %v1757 = vld [vmem:[%s1754 + $0x10] sm:$0xff]
        %v1758 = vld [vmem:[%s1754 + $0x18] sm:$0xff]
        %s1759 = scalar_lea.vmem %s9, 2
        %v1760 = vld [vmem:[%s1759] sm:$0x1]
        %v1762 = vlaneseq
        %v1763 = vshrl.u32 %v1762, 7
        %v1764 = vsub.s32 0, %v1763
        %v1765 = vrot.slane %v1760, %v1764
        %1767 = vmatprep.subr.mxu0 0.0
        %1768 = vmatpush1.msra.mxu0 %v1755
        %1769 = vmatprep.subr.mxu0 0.0
        %1770 = vmatpush1.msra.mxu0 %v1756
        %1771 = vmatprep.subr.mxu0 0.0
        %1772 = vmatpush1.msra.mxu0 %v1757
        %1773 = vmatprep.subr.mxu0 0.0
        %1774 = vmatpush1.msra.mxu0 %v1758
        %1775 = vmatprep.subr.mxu0 0.0
        %1776 = vmatpush1.msra.mxu0 0.0
        %1777 = vmatprep.subr.mxu0 0.0
        %1778 = vmatpush1.msra.mxu0 0.0
        %1779 = vmatprep.subr.mxu0 0.0
        %1780 = vmatpush1.msra.mxu0 0.0
        %1781 = vmatprep.subr.mxu0 0.0
        %1782 = vmatpush1.msra.mxu0 0.0
        %1783 = vmatprep.subr.mxu0 0.0
        %1784 = vmatpush1.msra.mxu0 0.0
        %1785 = vmatprep.subr.mxu0 0.0
        %1786 = vmatpush1.msra.mxu0 0.0
        %1787 = vmatprep.subr.mxu0 0.0
        %1788 = vmatpush1.msra.mxu0 0.0
        %1789 = vmatprep.subr.mxu0 0.0
        %1790 = vmatpush1.msra.mxu0 0.0
        %1791 = vmatprep.subr.mxu0 0.0
        %1792 = vmatpush1.msra.mxu0 0.0
        %1793 = vmatprep.subr.mxu0 0.0
        %1794 = vmatpush1.msra.mxu0 0.0
        %1795 = vmatprep.subr.mxu0 0.0
        %1796 = vmatpush1.msra.mxu0 0.0
        %1797 = vmatprep.subr.mxu0 0.0
        %1798 = vmatpush1.msra.mxu0 0.0
        %1799 = vmatprep.subr.mxu0 0.0
        %1800 = vmatpush1.msra.mxu0 0.0
        %1801 = vmatprep.subr.mxu0 0.0
        %1802 = vmatpush1.msra.mxu0 0.0
        %1803 = vmatprep.subr.mxu0 0.0
        %1804 = vmatpush1.msra.mxu0 0.0
        %1805 = vmatprep.subr.mxu0 0.0
        %1806 = vmatpush1.msra.mxu0 0.0
        %1807 = vmatprep.subr.mxu0 0.0
        %1808 = vmatpush1.msra.mxu0 0.0
        %1809 = vmatprep.subr.mxu0 0.0
        %1810 = vmatpush1.msra.mxu0 0.0
        %1811 = vmatprep.subr.mxu0 0.0
        %1812 = vmatpush1.msra.mxu0 0.0
        %1813 = vmatprep.subr.mxu0 0.0
        %1814 = vmatpush1.msra.mxu0 0.0
        %1815 = vmatprep.subr.mxu0 0.0
        %1816 = vmatpush1.msra.mxu0 0.0
        %1817 = vmatprep.subr.mxu0 0.0
        %1818 = vmatpush1.msra.mxu0 0.0
        %1819 = vmatprep.subr.mxu0 0.0
        %1820 = vmatpush1.msra.mxu0 0.0
        %1821 = vmatprep.subr.mxu0 0.0
        %1822 = vmatpush1.msra.mxu0 0.0
        %1823 = vmatprep.subr.mxu0 0.0
        %1824 = vmatpush1.msra.mxu0 0.0
        %1825 = vmatprep.subr.mxu0 0.0
        %1826 = vmatpush1.msra.mxu0 0.0
        %1827 = vmatprep.subr.mxu0 0.0
        %1828 = vmatpush1.msra.mxu0 0.0
        %1829 = vmatprep.subr.mxu0 0.0
        %1830 = vmatpush1.msra.mxu0 0.0
        %1831 = vmatprep.mubr.f32.mxu0 0.0
        %1832 = vmatmul.mubr.f32.gmra.mrb[0].mxu0 %v785
        %v1833 = vpop.f32.mrb[0].mxu0
        %v1834 = vadd.f32 %v1765, %v1833
        %v1835 = vpop.f32.mrb[0].mxu0
        %1836 = vdwg.mxu0
        %s1837 = scalar_lea.vmem %s527, 16 [#allocation2]
        %v1838 = vld [vmem:[%s1837] sm:$0xff]
        %v1840 = vsel %vm858, %v1668, 0
        %v1843 = vsel %vm858, %v1751, 0
        %1845 = vmatprep.subr.mxu0 0.0
        %1846 = vmatpush1.xpose.msra.mxu0 %v1843
        %1847 = vmatprep.subr.mxu0 0.0
        %1848 = vmatpush1.xpose.msra.mxu0 0.0
        %1849 = vmatprep.subr.mxu0 0.0
        %1850 = vmatpush1.xpose.msra.mxu0 0.0
        %1851 = vmatprep.subr.mxu0 0.0
        %1852 = vmatpush1.xpose.msra.mxu0 0.0
        %1853 = vmatprep.subr.mxu0 0.0
        %1854 = vmatpush1.xpose.msra.mxu0 0.0
        %1855 = vmatprep.subr.mxu0 0.0
        %1856 = vmatpush1.xpose.msra.mxu0 0.0
        %1857 = vmatprep.subr.mxu0 0.0
        %1858 = vmatpush1.xpose.msra.mxu0 0.0
        %1859 = vmatprep.subr.mxu0 0.0
        %1860 = vmatpush1.xpose.msra.mxu0 0.0
        %1861 = vmatprep.subr.mxu0 0.0
        %1862 = vmatpush1.xpose.msra.mxu0 0.0
        %1863 = vmatprep.subr.mxu0 0.0
        %1864 = vmatpush1.xpose.msra.mxu0 0.0
        %1865 = vmatprep.subr.mxu0 0.0
        %1866 = vmatpush1.xpose.msra.mxu0 0.0
        %1867 = vmatprep.subr.mxu0 0.0
        %1868 = vmatpush1.xpose.msra.mxu0 0.0
        %1869 = vmatprep.subr.mxu0 0.0
        %1870 = vmatpush1.xpose.msra.mxu0 0.0
        %1871 = vmatprep.subr.mxu0 0.0
        %1872 = vmatpush1.xpose.msra.mxu0 0.0
        %1873 = vmatprep.subr.mxu0 0.0
        %1874 = vmatpush1.xpose.msra.mxu0 0.0
        %1875 = vmatprep.subr.mxu0 0.0
        %1876 = vmatpush1.xpose.msra.mxu0 0.0
        %1877 = vmatprep.subr.mxu0 0.0
        %1878 = vmatpush1.xpose.msra.mxu0 0.0
        %1879 = vmatprep.subr.mxu0 0.0
        %1880 = vmatpush1.xpose.msra.mxu0 0.0
        %1881 = vmatprep.subr.mxu0 0.0
        %1882 = vmatpush1.xpose.msra.mxu0 0.0
        %1883 = vmatprep.subr.mxu0 0.0
        %1884 = vmatpush1.xpose.msra.mxu0 0.0
        %1885 = vmatprep.subr.mxu0 0.0
        %1886 = vmatpush1.xpose.msra.mxu0 0.0
        %1887 = vmatprep.subr.mxu0 0.0
        %1888 = vmatpush1.xpose.msra.mxu0 0.0
        %1889 = vmatprep.subr.mxu0 0.0
        %1890 = vmatpush1.xpose.msra.mxu0 0.0
        %1891 = vmatprep.subr.mxu0 0.0
        %1892 = vmatpush1.xpose.msra.mxu0 0.0
        %1893 = vmatprep.subr.mxu0 0.0
        %1894 = vmatpush1.xpose.msra.mxu0 0.0
        %1895 = vmatprep.subr.mxu0 0.0
        %1896 = vmatpush1.xpose.msra.mxu0 0.0
        %1897 = vmatprep.subr.mxu0 0.0
        %1898 = vmatpush1.xpose.msra.mxu0 0.0
        %1899 = vmatprep.subr.mxu0 0.0
        %1900 = vmatpush1.xpose.msra.mxu0 0.0
        %1901 = vmatprep.subr.mxu0 0.0
        %1902 = vmatpush1.xpose.msra.mxu0 0.0
        %1903 = vmatprep.subr.mxu0 0.0
        %1904 = vmatpush1.xpose.msra.mxu0 0.0
        %1905 = vmatprep.subr.mxu0 0.0
        %1906 = vmatpush1.xpose.msra.mxu0 0.0
        %1907 = vmatprep.subr.mxu0 0.0
        %1908 = vmatpush1.xpose.msra.mxu0 0.0
        %1909 = vmatprep.mubr.f32.mxu0 0.0
        %1910 = vmatmul.mubr.f32.gmra.mrb[0].mxu0 %v1840
        %v1911 = vpop.f32.mrb[0].mxu0
        %v1912 = vadd.f32 %v1838, %v1911
        %v1913 = vpop.f32.mrb[0].mxu0
        %1914 = vdwg.mxu0
        %v1915 = vsel %vm858, %v1912, -inf
        %1916 = vmax.xlane.f32.xlu0 %v1915
        %v1917 = vpop.xlane.xlu0 %1916
        %v1918 = vsub.f32 %v1912, %v1917
        %v1919 = vmul.f32 %v1918, 1.442695
        %v1920 = vpow.pop %v1919
        %v1921 = vsel %vm858, %v1920, 0.0
        %1922 = vadd.xlane.f32.xlu0 %v1921
        %v1923 = vpop.xlane.xlu0 %1922
        %v1924 = vrcp.pop %v1923
        %v1925 = vmul.f32 %v1923, %v1924
        %v1926 = vsub.f32 2.0, %v1925
        %v1927 = vmul.f32 %v1924, %v1926
        %v1928 = vmul.f32 %v1920, %v1927
        %s1929 = scalar_lea.vmem %s588, 16 [#allocation5]
        %1930 = vst.msk [vmem:[%s1929] sm:$0xff] %vm858, %v1928
        %v1932 = vsel %vm858, %v1928, 0
        %1934 = vmatprep.subr.mxu0 0.0
        %1935 = vmatpush1.msra.mxu0 %v1834
        %1936 = vmatprep.subr.mxu0 0.0
        %1937 = vmatpush1.msra.mxu0 0.0
        %1938 = vmatprep.subr.mxu0 0.0
        %1939 = vmatpush1.msra.mxu0 0.0
        %1940 = vmatprep.subr.mxu0 0.0
        %1941 = vmatpush1.msra.mxu0 0.0
        %1942 = vmatprep.subr.mxu0 0.0
        %1943 = vmatpush1.msra.mxu0 0.0
        %1944 = vmatprep.subr.mxu0 0.0
        %1945 = vmatpush1.msra.mxu0 0.0
        %1946 = vmatprep.subr.mxu0 0.0
        %1947 = vmatpush1.msra.mxu0 0.0
        %1948 = vmatprep.subr.mxu0 0.0
        %1949 = vmatpush1.msra.mxu0 0.0
        %1950 = vmatprep.subr.mxu0 0.0
        %1951 = vmatpush1.msra.mxu0 0.0
        %1952 = vmatprep.subr.mxu0 0.0
        %1953 = vmatpush1.msra.mxu0 0.0
        %1954 = vmatprep.subr.mxu0 0.0
        %1955 = vmatpush1.msra.mxu0 0.0
        %1956 = vmatprep.subr.mxu0 0.0
        %1957 = vmatpush1.msra.mxu0 0.0
        %1958 = vmatprep.subr.mxu0 0.0
        %1959 = vmatpush1.msra.mxu0 0.0
        %1960 = vmatprep.subr.mxu0 0.0
        %1961 = vmatpush1.msra.mxu0 0.0
        %1962 = vmatprep.subr.mxu0 0.0
        %1963 = vmatpush1.msra.mxu0 0.0
        %1964 = vmatprep.subr.mxu0 0.0
        %1965 = vmatpush1.msra.mxu0 0.0
        %1966 = vmatprep.subr.mxu0 0.0
        %1967 = vmatpush1.msra.mxu0 0.0
        %1968 = vmatprep.subr.mxu0 0.0
        %1969 = vmatpush1.msra.mxu0 0.0
        %1970 = vmatprep.subr.mxu0 0.0
        %1971 = vmatpush1.msra.mxu0 0.0
        %1972 = vmatprep.subr.mxu0 0.0
        %1973 = vmatpush1.msra.mxu0 0.0
        %1974 = vmatprep.subr.mxu0 0.0
        %1975 = vmatpush1.msra.mxu0 0.0
        %1976 = vmatprep.subr.mxu0 0.0
        %1977 = vmatpush1.msra.mxu0 0.0
        %1978 = vmatprep.subr.mxu0 0.0
        %1979 = vmatpush1.msra.mxu0 0.0
        %1980 = vmatprep.subr.mxu0 0.0
        %1981 = vmatpush1.msra.mxu0 0.0
        %1982 = vmatprep.subr.mxu0 0.0
        %1983 = vmatpush1.msra.mxu0 0.0
        %1984 = vmatprep.subr.mxu0 0.0
        %1985 = vmatpush1.msra.mxu0 0.0
        %1986 = vmatprep.subr.mxu0 0.0
        %1987 = vmatpush1.msra.mxu0 0.0
        %1988 = vmatprep.subr.mxu0 0.0
        %1989 = vmatpush1.msra.mxu0 0.0
        %1990 = vmatprep.subr.mxu0 0.0
        %1991 = vmatpush1.msra.mxu0 0.0
        %1992 = vmatprep.subr.mxu0 0.0
        %1993 = vmatpush1.msra.mxu0 0.0
        %1994 = vmatprep.subr.mxu0 0.0
        %1995 = vmatpush1.msra.mxu0 0.0
        %1996 = vmatprep.subr.mxu0 0.0
        %1997 = vmatpush1.msra.mxu0 0.0
        %1998 = vmatprep.mubr.f32.mxu0 0.0
        %1999 = vmatmul.mubr.f32.gmra.mrb[0].mxu0 %v1932
        %v2000 = vpop.f32.mrb[0].mxu0
        %v2001 = vadd.f32 0.0, %v2000
        %v2002 = vpop.f32.mrb[0].mxu0
        %2003 = vdwg.mxu0
        %s2004 = scalar_lea.vmem %s10, 16
        %v2005 = vld [vmem:[%s2004] sm:$0xff]
        %v2007 = vsel %vm858, %v2001, 0
        %2009 = vmatprep.subr.mxu0 0.0
        %2010 = vmatpush1.msra.mxu0 %v2005
        %2011 = vmatprep.subr.mxu0 0.0
        %2012 = vmatpush1.msra.mxu0 0.0
        %2013 = vmatprep.subr.mxu0 0.0
        %2014 = vmatpush1.msra.mxu0 0.0
        %2015 = vmatprep.subr.mxu0 0.0
        %2016 = vmatpush1.msra.mxu0 0.0
        %2017 = vmatprep.subr.mxu0 0.0
        %2018 = vmatpush1.msra.mxu0 0.0
        %2019 = vmatprep.subr.mxu0 0.0
        %2020 = vmatpush1.msra.mxu0 0.0
        %2021 = vmatprep.subr.mxu0 0.0
        %2022 = vmatpush1.msra.mxu0 0.0
        %2023 = vmatprep.subr.mxu0 0.0
        %2024 = vmatpush1.msra.mxu0 0.0
        %2025 = vmatprep.subr.mxu0 0.0
        %2026 = vmatpush1.msra.mxu0 0.0
        %2027 = vmatprep.subr.mxu0 0.0
        %2028 = vmatpush1.msra.mxu0 0.0
        %2029 = vmatprep.subr.mxu0 0.0
        %2030 = vmatpush1.msra.mxu0 0.0
        %2031 = vmatprep.subr.mxu0 0.0
        %2032 = vmatpush1.msra.mxu0 0.0
        %2033 = vmatprep.subr.mxu0 0.0
        %2034 = vmatpush1.msra.mxu0 0.0
        %2035 = vmatprep.subr.mxu0 0.0
        %2036 = vmatpush1.msra.mxu0 0.0
        %2037 = vmatprep.subr.mxu0 0.0
        %2038 = vmatpush1.msra.mxu0 0.0
        %2039 = vmatprep.subr.mxu0 0.0
        %2040 = vmatpush1.msra.mxu0 0.0
        %2041 = vmatprep.subr.mxu0 0.0
        %2042 = vmatpush1.msra.mxu0 0.0
        %2043 = vmatprep.subr.mxu0 0.0
        %2044 = vmatpush1.msra.mxu0 0.0
        %2045 = vmatprep.subr.mxu0 0.0
        %2046 = vmatpush1.msra.mxu0 0.0
        %2047 = vmatprep.subr.mxu0 0.0
        %2048 = vmatpush1.msra.mxu0 0.0
        %2049 = vmatprep.subr.mxu0 0.0
        %2050 = vmatpush1.msra.mxu0 0.0
        %2051 = vmatprep.subr.mxu0 0.0
        %2052 = vmatpush1.msra.mxu0 0.0
        %2053 = vmatprep.subr.mxu0 0.0
        %2054 = vmatpush1.msra.mxu0 0.0
        %2055 = vmatprep.subr.mxu0 0.0
        %2056 = vmatpush1.msra.mxu0 0.0
        %2057 = vmatprep.subr.mxu0 0.0
        %2058 = vmatpush1.msra.mxu0 0.0
        %2059 = vmatprep.subr.mxu0 0.0
        %2060 = vmatpush1.msra.mxu0 0.0
        %2061 = vmatprep.subr.mxu0 0.0
        %2062 = vmatpush1.msra.mxu0 0.0
        %2063 = vmatprep.subr.mxu0 0.0
        %2064 = vmatpush1.msra.mxu0 0.0
        %2065 = vmatprep.subr.mxu0 0.0
        %2066 = vmatpush1.msra.mxu0 0.0
        %2067 = vmatprep.subr.mxu0 0.0
        %2068 = vmatpush1.msra.mxu0 0.0
        %2069 = vmatprep.subr.mxu0 0.0
        %2070 = vmatpush1.msra.mxu0 0.0
        %2071 = vmatprep.subr.mxu0 0.0
        %2072 = vmatpush1.msra.mxu0 0.0
        %2073 = vmatprep.mubr.f32.mxu0 0.0
        %2074 = vmatmul.mubr.f32.gmra.mrb[0].mxu0 %v2007
        %v2075 = vpop.f32.mrb[0].mxu0
        %v2076 = vadd.f32 0.0, %v2075
        %v2077 = vpop.f32.mrb[0].mxu0
        %2078 = vdwg.mxu0
        %v2079 = vadd.f32 %v1585, %v2076
        %s2080 = scalar_lea.vmem %s4, 96
        %v2081 = vld [vmem:[%s2080] sm:$0xff]
        %v2082 = vld [vmem:[%s2080 + $0x8] sm:$0xff]
        %v2083 = vld [vmem:[%s2080 + $0x10] sm:$0xff]
        %v2084 = vld [vmem:[%s2080 + $0x18] sm:$0xff]
        %s2085 = scalar_lea.vmem %s5, 3
        %v2086 = vld [vmem:[%s2085] sm:$0x1]
        %v2088 = vlaneseq
        %v2089 = vshrl.u32 %v2088, 7
        %v2090 = vsub.s32 0, %v2089
        %v2091 = vrot.slane %v2086, %v2090
        %2093 = vmatprep.subr.mxu0 0.0
        %2094 = vmatpush1.msra.mxu0 %v2081
        %2095 = vmatprep.subr.mxu0 0.0
        %2096 = vmatpush1.msra.mxu0 %v2082
        %2097 = vmatprep.subr.mxu0 0.0
        %2098 = vmatpush1.msra.mxu0 %v2083
        %2099 = vmatprep.subr.mxu0 0.0
        %2100 = vmatpush1.msra.mxu0 %v2084
        %2101 = vmatprep.subr.mxu0 0.0
        %2102 = vmatpush1.msra.mxu0 0.0
        %2103 = vmatprep.subr.mxu0 0.0
        %2104 = vmatpush1.msra.mxu0 0.0
        %2105 = vmatprep.subr.mxu0 0.0
        %2106 = vmatpush1.msra.mxu0 0.0
        %2107 = vmatprep.subr.mxu0 0.0
        %2108 = vmatpush1.msra.mxu0 0.0
        %2109 = vmatprep.subr.mxu0 0.0
        %2110 = vmatpush1.msra.mxu0 0.0
        %2111 = vmatprep.subr.mxu0 0.0
        %2112 = vmatpush1.msra.mxu0 0.0
        %2113 = vmatprep.subr.mxu0 0.0
        %2114 = vmatpush1.msra.mxu0 0.0
        %2115 = vmatprep.subr.mxu0 0.0
        %2116 = vmatpush1.msra.mxu0 0.0
        %2117 = vmatprep.subr.mxu0 0.0
        %2118 = vmatpush1.msra.mxu0 0.0
        %2119 = vmatprep.subr.mxu0 0.0
        %2120 = vmatpush1.msra.mxu0 0.0
        %2121 = vmatprep.subr.mxu0 0.0
        %2122 = vmatpush1.msra.mxu0 0.0
        %2123 = vmatprep.subr.mxu0 0.0
        %2124 = vmatpush1.msra.mxu0 0.0
        %2125 = vmatprep.subr.mxu0 0.0
        %2126 = vmatpush1.msra.mxu0 0.0
        %2127 = vmatprep.subr.mxu0 0.0
        %2128 = vmatpush1.msra.mxu0 0.0
        %2129 = vmatprep.subr.mxu0 0.0
        %2130 = vmatpush1.msra.mxu0 0.0
        %2131 = vmatprep.subr.mxu0 0.0
        %2132 = vmatpush1.msra.mxu0 0.0
        %2133 = vmatprep.subr.mxu0 0.0
        %2134 = vmatpush1.msra.mxu0 0.0
        %2135 = vmatprep.subr.mxu0 0.0
        %2136 = vmatpush1.msra.mxu0 0.0
        %2137 = vmatprep.subr.mxu0 0.0
        %2138 = vmatpush1.msra.mxu0 0.0
        %2139 = vmatprep.subr.mxu0 0.0
        %2140 = vmatpush1.msra.mxu0 0.0
        %2141 = vmatprep.subr.mxu0 0.0
        %2142 = vmatpush1.msra.mxu0 0.0
        %2143 = vmatprep.subr.mxu0 0.0
        %2144 = vmatpush1.msra.mxu0 0.0
        %2145 = vmatprep.subr.mxu0 0.0
        %2146 = vmatpush1.msra.mxu0 0.0
        %2147 = vmatprep.subr.mxu0 0.0
        %2148 = vmatpush1.msra.mxu0 0.0
        %2149 = vmatprep.subr.mxu0 0.0
        %2150 = vmatpush1.msra.mxu0 0.0
        %2151 = vmatprep.subr.mxu0 0.0
        %2152 = vmatpush1.msra.mxu0 0.0
        %2153 = vmatprep.subr.mxu0 0.0
        %2154 = vmatpush1.msra.mxu0 0.0
        %2155 = vmatprep.subr.mxu0 0.0
        %2156 = vmatpush1.msra.mxu0 0.0
        %2157 = vmatprep.mubr.f32.mxu0 0.0
        %2158 = vmatmul.mubr.f32.gmra.mrb[0].mxu0 %v617
        %v2159 = vpop.f32.mrb[0].mxu0
        %v2160 = vadd.f32 %v2091, %v2159
        %v2161 = vpop.f32.mrb[0].mxu0
        %2162 = vdwg.mxu0
        %s2163 = scalar_lea.vmem %s6, 96
        %v2164 = vld [vmem:[%s2163] sm:$0xff]
        %v2165 = vld [vmem:[%s2163 + $0x8] sm:$0xff]
        %v2166 = vld [vmem:[%s2163 + $0x10] sm:$0xff]
        %v2167 = vld [vmem:[%s2163 + $0x18] sm:$0xff]
        %s2168 = scalar_lea.vmem %s7, 3
        %v2169 = vld [vmem:[%s2168] sm:$0x1]
        %v2171 = vlaneseq
        %v2172 = vshrl.u32 %v2171, 7
        %v2173 = vsub.s32 0, %v2172
        %v2174 = vrot.slane %v2169, %v2173
        %2176 = vmatprep.subr.mxu0 0.0
        %2177 = vmatpush1.msra.mxu0 %v2164
        %2178 = vmatprep.subr.mxu0 0.0
        %2179 = vmatpush1.msra.mxu0 %v2165
        %2180 = vmatprep.subr.mxu0 0.0
        %2181 = vmatpush1.msra.mxu0 %v2166
        %2182 = vmatprep.subr.mxu0 0.0
        %2183 = vmatpush1.msra.mxu0 %v2167
        %2184 = vmatprep.subr.mxu0 0.0
        %2185 = vmatpush1.msra.mxu0 0.0
        %2186 = vmatprep.subr.mxu0 0.0
        %2187 = vmatpush1.msra.mxu0 0.0
        %2188 = vmatprep.subr.mxu0 0.0
        %2189 = vmatpush1.msra.mxu0 0.0
        %2190 = vmatprep.subr.mxu0 0.0
        %2191 = vmatpush1.msra.mxu0 0.0
        %2192 = vmatprep.subr.mxu0 0.0
        %2193 = vmatpush1.msra.mxu0 0.0
        %2194 = vmatprep.subr.mxu0 0.0
        %2195 = vmatpush1.msra.mxu0 0.0
        %2196 = vmatprep.subr.mxu0 0.0
        %2197 = vmatpush1.msra.mxu0 0.0
        %2198 = vmatprep.subr.mxu0 0.0
        %2199 = vmatpush1.msra.mxu0 0.0
        %2200 = vmatprep.subr.mxu0 0.0
        %2201 = vmatpush1.msra.mxu0 0.0
        %2202 = vmatprep.subr.mxu0 0.0
        %2203 = vmatpush1.msra.mxu0 0.0
        %2204 = vmatprep.subr.mxu0 0.0
        %2205 = vmatpush1.msra.mxu0 0.0
        %2206 = vmatprep.subr.mxu0 0.0
        %2207 = vmatpush1.msra.mxu0 0.0
        %2208 = vmatprep.subr.mxu0 0.0
        %2209 = vmatpush1.msra.mxu0 0.0
        %2210 = vmatprep.subr.mxu0 0.0
        %2211 = vmatpush1.msra.mxu0 0.0
        %2212 = vmatprep.subr.mxu0 0.0
        %2213 = vmatpush1.msra.mxu0 0.0
        %2214 = vmatprep.subr.mxu0 0.0
        %2215 = vmatpush1.msra.mxu0 0.0
        %2216 = vmatprep.subr.mxu0 0.0
        %2217 = vmatpush1.msra.mxu0 0.0
        %2218 = vmatprep.subr.mxu0 0.0
        %2219 = vmatpush1.msra.mxu0 0.0
        %2220 = vmatprep.subr.mxu0 0.0
        %2221 = vmatpush1.msra.mxu0 0.0
        %2222 = vmatprep.subr.mxu0 0.0
        %2223 = vmatpush1.msra.mxu0 0.0
        %2224 = vmatprep.subr.mxu0 0.0
        %2225 = vmatpush1.msra.mxu0 0.0
        %2226 = vmatprep.subr.mxu0 0.0
        %2227 = vmatpush1.msra.mxu0 0.0
        %2228 = vmatprep.subr.mxu0 0.0
        %2229 = vmatpush1.msra.mxu0 0.0
        %2230 = vmatprep.subr.mxu0 0.0
        %2231 = vmatpush1.msra.mxu0 0.0
        %2232 = vmatprep.subr.mxu0 0.0
        %2233 = vmatpush1.msra.mxu0 0.0
        %2234 = vmatprep.subr.mxu0 0.0
        %2235 = vmatpush1.msra.mxu0 0.0
        %2236 = vmatprep.subr.mxu0 0.0
        %2237 = vmatpush1.msra.mxu0 0.0
        %2238 = vmatprep.subr.mxu0 0.0
        %2239 = vmatpush1.msra.mxu0 0.0
        %2240 = vmatprep.mubr.f32.mxu0 0.0
        %2241 = vmatmul.mubr.f32.gmra.mrb[0].mxu0 %v701
        %v2242 = vpop.f32.mrb[0].mxu0
        %v2243 = vadd.f32 %v2174, %v2242
        %v2244 = vpop.f32.mrb[0].mxu0
        %2245 = vdwg.mxu0
        %s2246 = scalar_lea.vmem %s8, 96
        %v2247 = vld [vmem:[%s2246] sm:$0xff]
        %v2248 = vld [vmem:[%s2246 + $0x8] sm:$0xff]
        %v2249 = vld [vmem:[%s2246 + $0x10] sm:$0xff]
        %v2250 = vld [vmem:[%s2246 + $0x18] sm:$0xff]
        %s2251 = scalar_lea.vmem %s9, 3
        %v2252 = vld [vmem:[%s2251] sm:$0x1]
        %v2254 = vlaneseq
        %v2255 = vshrl.u32 %v2254, 7
        %v2256 = vsub.s32 0, %v2255
        %v2257 = vrot.slane %v2252, %v2256
        %2259 = vmatprep.subr.mxu0 0.0
        %2260 = vmatpush1.msra.mxu0 %v2247
        %2261 = vmatprep.subr.mxu0 0.0
        %2262 = vmatpush1.msra.mxu0 %v2248
        %2263 = vmatprep.subr.mxu0 0.0
        %2264 = vmatpush1.msra.mxu0 %v2249
        %2265 = vmatprep.subr.mxu0 0.0
        %2266 = vmatpush1.msra.mxu0 %v2250
        %2267 = vmatprep.subr.mxu0 0.0
        %2268 = vmatpush1.msra.mxu0 0.0
        %2269 = vmatprep.subr.mxu0 0.0
        %2270 = vmatpush1.msra.mxu0 0.0
        %2271 = vmatprep.subr.mxu0 0.0
        %2272 = vmatpush1.msra.mxu0 0.0
        %2273 = vmatprep.subr.mxu0 0.0
        %2274 = vmatpush1.msra.mxu0 0.0
        %2275 = vmatprep.subr.mxu0 0.0
        %2276 = vmatpush1.msra.mxu0 0.0
        %2277 = vmatprep.subr.mxu0 0.0
        %2278 = vmatpush1.msra.mxu0 0.0
        %2279 = vmatprep.subr.mxu0 0.0
        %2280 = vmatpush1.msra.mxu0 0.0
        %2281 = vmatprep.subr.mxu0 0.0
        %2282 = vmatpush1.msra.mxu0 0.0
        %2283 = vmatprep.subr.mxu0 0.0
        %2284 = vmatpush1.msra.mxu0 0.0
        %2285 = vmatprep.subr.mxu0 0.0
        %2286 = vmatpush1.msra.mxu0 0.0
        %2287 = vmatprep.subr.mxu0 0.0
        %2288 = vmatpush1.msra.mxu0 0.0
        %2289 = vmatprep.subr.mxu0 0.0
        %2290 = vmatpush1.msra.mxu0 0.0
        %2291 = vmatprep.subr.mxu0 0.0
        %2292 = vmatpush1.msra.mxu0 0.0
        %2293 = vmatprep.subr.mxu0 0.0
        %2294 = vmatpush1.msra.mxu0 0.0
        %2295 = vmatprep.subr.mxu0 0.0
        %2296 = vmatpush1.msra.mxu0 0.0
        %2297 = vmatprep.subr.mxu0 0.0
        %2298 = vmatpush1.msra.mxu0 0.0
        %2299 = vmatprep.subr.mxu0 0.0
        %2300 = vmatpush1.msra.mxu0 0.0
        %2301 = vmatprep.subr.mxu0 0.0
        %2302 = vmatpush1.msra.mxu0 0.0
        %2303 = vmatprep.subr.mxu0 0.0
        %2304 = vmatpush1.msra.mxu0 0.0
        %2305 = vmatprep.subr.mxu0 0.0
        %2306 = vmatpush1.msra.mxu0 0.0
        %2307 = vmatprep.subr.mxu0 0.0
        %2308 = vmatpush1.msra.mxu0 0.0
        %2309 = vmatprep.subr.mxu0 0.0
        %2310 = vmatpush1.msra.mxu0 0.0
        %2311 = vmatprep.subr.mxu0 0.0
        %2312 = vmatpush1.msra.mxu0 0.0
        %2313 = vmatprep.subr.mxu0 0.0
        %2314 = vmatpush1.msra.mxu0 0.0
        %2315 = vmatprep.subr.mxu0 0.0
        %2316 = vmatpush1.msra.mxu0 0.0
        %2317 = vmatprep.subr.mxu0 0.0
        %2318 = vmatpush1.msra.mxu0 0.0
        %2319 = vmatprep.subr.mxu0 0.0
        %2320 = vmatpush1.msra.mxu0 0.0
        %2321 = vmatprep.subr.mxu0 0.0
        %2322 = vmatpush1.msra.mxu0 0.0
        %2323 = vmatprep.mubr.f32.mxu0 0.0
        %2324 = vmatmul.mubr.f32.gmra.mrb[0].mxu0 %v785
        %v2325 = vpop.f32.mrb[0].mxu0
        %v2326 = vadd.f32 %v2257, %v2325
        %v2327 = vpop.f32.mrb[0].mxu0
        %2328 = vdwg.mxu0
        %s2329 = scalar_lea.vmem %s527, 24 [#allocation2]
        %v2330 = vld [vmem:[%s2329] sm:$0xff]
        %v2332 = vsel %vm858, %v2160, 0
        %v2335 = vsel %vm858, %v2243, 0
        %2337 = vmatprep.subr.mxu0 0.0
        %2338 = vmatpush1.xpose.msra.mxu0 %v2335
        %2339 = vmatprep.subr.mxu0 0.0
        %2340 = vmatpush1.xpose.msra.mxu0 0.0
        %2341 = vmatprep.subr.mxu0 0.0
        %2342 = vmatpush1.xpose.msra.mxu0 0.0
        %2343 = vmatprep.subr.mxu0 0.0
        %2344 = vmatpush1.xpose.msra.mxu0 0.0
        %2345 = vmatprep.subr.mxu0 0.0
        %2346 = vmatpush1.xpose.msra.mxu0 0.0
        %2347 = vmatprep.subr.mxu0 0.0
        %2348 = vmatpush1.xpose.msra.mxu0 0.0
        %2349 = vmatprep.subr.mxu0 0.0
        %2350 = vmatpush1.xpose.msra.mxu0 0.0
        %2351 = vmatprep.subr.mxu0 0.0
        %2352 = vmatpush1.xpose.msra.mxu0 0.0
        %2353 = vmatprep.subr.mxu0 0.0
        %2354 = vmatpush1.xpose.msra.mxu0 0.0
        %2355 = vmatprep.subr.mxu0 0.0
        %2356 = vmatpush1.xpose.msra.mxu0 0.0
        %2357 = vmatprep.subr.mxu0 0.0
        %2358 = vmatpush1.xpose.msra.mxu0 0.0
        %2359 = vmatprep.subr.mxu0 0.0
        %2360 = vmatpush1.xpose.msra.mxu0 0.0
        %2361 = vmatprep.subr.mxu0 0.0
        %2362 = vmatpush1.xpose.msra.mxu0 0.0
        %2363 = vmatprep.subr.mxu0 0.0
        %2364 = vmatpush1.xpose.msra.mxu0 0.0
        %2365 = vmatprep.subr.mxu0 0.0
        %2366 = vmatpush1.xpose.msra.mxu0 0.0
        %2367 = vmatprep.subr.mxu0 0.0
        %2368 = vmatpush1.xpose.msra.mxu0 0.0
        %2369 = vmatprep.subr.mxu0 0.0
        %2370 = vmatpush1.xpose.msra.mxu0 0.0
        %2371 = vmatprep.subr.mxu0 0.0
        %2372 = vmatpush1.xpose.msra.mxu0 0.0
        %2373 = vmatprep.subr.mxu0 0.0
        %2374 = vmatpush1.xpose.msra.mxu0 0.0
        %2375 = vmatprep.subr.mxu0 0.0
        %2376 = vmatpush1.xpose.msra.mxu0 0.0
        %2377 = vmatprep.subr.mxu0 0.0
        %2378 = vmatpush1.xpose.msra.mxu0 0.0
        %2379 = vmatprep.subr.mxu0 0.0
        %2380 = vmatpush1.xpose.msra.mxu0 0.0
        %2381 = vmatprep.subr.mxu0 0.0
        %2382 = vmatpush1.xpose.msra.mxu0 0.0
        %2383 = vmatprep.subr.mxu0 0.0
        %2384 = vmatpush1.xpose.msra.mxu0 0.0
        %2385 = vmatprep.subr.mxu0 0.0
        %2386 = vmatpush1.xpose.msra.mxu0 0.0
        %2387 = vmatprep.subr.mxu0 0.0
        %2388 = vmatpush1.xpose.msra.mxu0 0.0
        %2389 = vmatprep.subr.mxu0 0.0
        %2390 = vmatpush1.xpose.msra.mxu0 0.0
        %2391 = vmatprep.subr.mxu0 0.0
        %2392 = vmatpush1.xpose.msra.mxu0 0.0
        %2393 = vmatprep.subr.mxu0 0.0
        %2394 = vmatpush1.xpose.msra.mxu0 0.0
        %2395 = vmatprep.subr.mxu0 0.0
        %2396 = vmatpush1.xpose.msra.mxu0 0.0
        %2397 = vmatprep.subr.mxu0 0.0
        %2398 = vmatpush1.xpose.msra.mxu0 0.0
        %2399 = vmatprep.subr.mxu0 0.0
        %2400 = vmatpush1.xpose.msra.mxu0 0.0
        %2401 = vmatprep.mubr.f32.mxu0 0.0
        %2402 = vmatmul.mubr.f32.gmra.mrb[0].mxu0 %v2332
        %v2403 = vpop.f32.mrb[0].mxu0
        %v2404 = vadd.f32 %v2330, %v2403
        %v2405 = vpop.f32.mrb[0].mxu0
        %2406 = vdwg.mxu0
        %v2407 = vsel %vm858, %v2404, -inf
        %2408 = vmax.xlane.f32.xlu0 %v2407
        %v2409 = vpop.xlane.xlu0 %2408
        %v2410 = vsub.f32 %v2404, %v2409
        %v2411 = vmul.f32 %v2410, 1.442695
        %v2412 = vpow.pop %v2411
        %v2413 = vsel %vm858, %v2412, 0.0
        %2414 = vadd.xlane.f32.xlu0 %v2413
        %v2415 = vpop.xlane.xlu0 %2414
        %v2416 = vrcp.pop %v2415
        %v2417 = vmul.f32 %v2415, %v2416
        %v2418 = vsub.f32 2.0, %v2417
        %v2419 = vmul.f32 %v2416, %v2418
        %v2420 = vmul.f32 %v2412, %v2419
        %s2421 = scalar_lea.vmem %s588, 24 [#allocation5]
        %2422 = vst.msk [vmem:[%s2421] sm:$0xff] %vm858, %v2420
        %v2424 = vsel %vm858, %v2420, 0
        %2426 = vmatprep.subr.mxu0 0.0
        %2427 = vmatpush1.msra.mxu0 %v2326
        %2428 = vmatprep.subr.mxu0 0.0
        %2429 = vmatpush1.msra.mxu0 0.0
        %2430 = vmatprep.subr.mxu0 0.0
        %2431 = vmatpush1.msra.mxu0 0.0
        %2432 = vmatprep.subr.mxu0 0.0
        %2433 = vmatpush1.msra.mxu0 0.0
        %2434 = vmatprep.subr.mxu0 0.0
        %2435 = vmatpush1.msra.mxu0 0.0
        %2436 = vmatprep.subr.mxu0 0.0
        %2437 = vmatpush1.msra.mxu0 0.0
        %2438 = vmatprep.subr.mxu0 0.0
        %2439 = vmatpush1.msra.mxu0 0.0
        %2440 = vmatprep.subr.mxu0 0.0
        %2441 = vmatpush1.msra.mxu0 0.0
        %2442 = vmatprep.subr.mxu0 0.0
        %2443 = vmatpush1.msra.mxu0 0.0
        %2444 = vmatprep.subr.mxu0 0.0
        %2445 = vmatpush1.msra.mxu0 0.0
        %2446 = vmatprep.subr.mxu0 0.0
        %2447 = vmatpush1.msra.mxu0 0.0
        %2448 = vmatprep.subr.mxu0 0.0
        %2449 = vmatpush1.msra.mxu0 0.0
        %2450 = vmatprep.subr.mxu0 0.0
        %2451 = vmatpush1.msra.mxu0 0.0
        %2452 = vmatprep.subr.mxu0 0.0
        %2453 = vmatpush1.msra.mxu0 0.0
        %2454 = vmatprep.subr.mxu0 0.0
        %2455 = vmatpush1.msra.mxu0 0.0
        %2456 = vmatprep.subr.mxu0 0.0
        %2457 = vmatpush1.msra.mxu0 0.0
        %2458 = vmatprep.subr.mxu0 0.0
        %2459 = vmatpush1.msra.mxu0 0.0
        %2460 = vmatprep.subr.mxu0 0.0
        %2461 = vmatpush1.msra.mxu0 0.0
        %2462 = vmatprep.subr.mxu0 0.0
        %2463 = vmatpush1.msra.mxu0 0.0
        %2464 = vmatprep.subr.mxu0 0.0
        %2465 = vmatpush1.msra.mxu0 0.0
        %2466 = vmatprep.subr.mxu0 0.0
        %2467 = vmatpush1.msra.mxu0 0.0
        %2468 = vmatprep.subr.mxu0 0.0
        %2469 = vmatpush1.msra.mxu0 0.0
        %2470 = vmatprep.subr.mxu0 0.0
        %2471 = vmatpush1.msra.mxu0 0.0
        %2472 = vmatprep.subr.mxu0 0.0
        %2473 = vmatpush1.msra.mxu0 0.0
        %2474 = vmatprep.subr.mxu0 0.0
        %2475 = vmatpush1.msra.mxu0 0.0
        %2476 = vmatprep.subr.mxu0 0.0
        %2477 = vmatpush1.msra.mxu0 0.0
        %2478 = vmatprep.subr.mxu0 0.0
        %2479 = vmatpush1.msra.mxu0 0.0
        %2480 = vmatprep.subr.mxu0 0.0
        %2481 = vmatpush1.msra.mxu0 0.0
        %2482 = vmatprep.subr.mxu0 0.0
        %2483 = vmatpush1.msra.mxu0 0.0
        %2484 = vmatprep.subr.mxu0 0.0
        %2485 = vmatpush1.msra.mxu0 0.0
        %2486 = vmatprep.subr.mxu0 0.0
        %2487 = vmatpush1.msra.mxu0 0.0
        %2488 = vmatprep.subr.mxu0 0.0
        %2489 = vmatpush1.msra.mxu0 0.0
        %2490 = vmatprep.mubr.f32.mxu0 0.0
        %2491 = vmatmul.mubr.f32.gmra.mrb[0].mxu0 %v2424
        %v2492 = vpop.f32.mrb[0].mxu0
        %v2493 = vadd.f32 0.0, %v2492
        %v2494 = vpop.f32.mrb[0].mxu0
        %2495 = vdwg.mxu0
        %s2496 = scalar_lea.vmem %s10, 24
        %v2497 = vld [vmem:[%s2496] sm:$0xff]
        %v2499 = vsel %vm858, %v2493, 0
        %2501 = vmatprep.subr.mxu0 0.0
        %2502 = vmatpush1.msra.mxu0 %v2497
        %2503 = vmatprep.subr.mxu0 0.0
        %2504 = vmatpush1.msra.mxu0 0.0
        %2505 = vmatprep.subr.mxu0 0.0
        %2506 = vmatpush1.msra.mxu0 0.0
        %2507 = vmatprep.subr.mxu0 0.0
        %2508 = vmatpush1.msra.mxu0 0.0
        %2509 = vmatprep.subr.mxu0 0.0
        %2510 = vmatpush1.msra.mxu0 0.0
        %2511 = vmatprep.subr.mxu0 0.0
        %2512 = vmatpush1.msra.mxu0 0.0
        %2513 = vmatprep.subr.mxu0 0.0
        %2514 = vmatpush1.msra.mxu0 0.0
        %2515 = vmatprep.subr.mxu0 0.0
        %2516 = vmatpush1.msra.mxu0 0.0
        %2517 = vmatprep.subr.mxu0 0.0
        %2518 = vmatpush1.msra.mxu0 0.0
        %2519 = vmatprep.subr.mxu0 0.0
        %2520 = vmatpush1.msra.mxu0 0.0
        %2521 = vmatprep.subr.mxu0 0.0
        %2522 = vmatpush1.msra.mxu0 0.0
        %2523 = vmatprep.subr.mxu0 0.0
        %2524 = vmatpush1.msra.mxu0 0.0
        %2525 = vmatprep.subr.mxu0 0.0
        %2526 = vmatpush1.msra.mxu0 0.0
        %2527 = vmatprep.subr.mxu0 0.0
        %2528 = vmatpush1.msra.mxu0 0.0
        %2529 = vmatprep.subr.mxu0 0.0
        %2530 = vmatpush1.msra.mxu0 0.0
        %2531 = vmatprep.subr.mxu0 0.0
        %2532 = vmatpush1.msra.mxu0 0.0
        %2533 = vmatprep.subr.mxu0 0.0
        %2534 = vmatpush1.msra.mxu0 0.0
        %2535 = vmatprep.subr.mxu0 0.0
        %2536 = vmatpush1.msra.mxu0 0.0
        %2537 = vmatprep.subr.mxu0 0.0
        %2538 = vmatpush1.msra.mxu0 0.0
        %2539 = vmatprep.subr.mxu0 0.0
        %2540 = vmatpush1.msra.mxu0 0.0
        %2541 = vmatprep.subr.mxu0 0.0
        %2542 = vmatpush1.msra.mxu0 0.0
        %2543 = vmatprep.subr.mxu0 0.0
        %2544 = vmatpush1.msra.mxu0 0.0
        %2545 = vmatprep.subr.mxu0 0.0
        %2546 = vmatpush1.msra.mxu0 0.0
        %2547 = vmatprep.subr.mxu0 0.0
        %2548 = vmatpush1.msra.mxu0 0.0
        %2549 = vmatprep.subr.mxu0 0.0
        %2550 = vmatpush1.msra.mxu0 0.0
        %2551 = vmatprep.subr.mxu0 0.0
        %2552 = vmatpush1.msra.mxu0 0.0
        %2553 = vmatprep.subr.mxu0 0.0
        %2554 = vmatpush1.msra.mxu0 0.0
        %2555 = vmatprep.subr.mxu0 0.0
        %2556 = vmatpush1.msra.mxu0 0.0
        %2557 = vmatprep.subr.mxu0 0.0
        %2558 = vmatpush1.msra.mxu0 0.0
        %2559 = vmatprep.subr.mxu0 0.0
        %2560 = vmatpush1.msra.mxu0 0.0
        %2561 = vmatprep.subr.mxu0 0.0
        %2562 = vmatpush1.msra.mxu0 0.0
        %2563 = vmatprep.subr.mxu0 0.0
        %2564 = vmatpush1.msra.mxu0 0.0
        %2565 = vmatprep.mubr.f32.mxu0 0.0
        %2566 = vmatmul.mubr.f32.gmra.mrb[0].mxu0 %v2499
        %v2567 = vpop.f32.mrb[0].mxu0
        %v2568 = vadd.f32 0.0, %v2567
        %v2569 = vpop.f32.mrb[0].mxu0
        %2570 = vdwg.mxu0
        %v2571 = vadd.f32 %v2079, %v2568
        %v2572 = vld [vmem:[%s11] sm:$0x1]
        %v2574 = vlaneseq
        %v2575 = vshrl.u32 %v2574, 7
        %v2576 = vsub.s32 0, %v2575
        %v2577 = vrot.slane %v2572, %v2576
        %v2579 = vadd.f32 %v2571, %v2577
        %v2580 = vadd.f32 %v2579, %v601
        %v2581 = vsel %vm615, %v2580, 0.0
        %2582 = vadd.xlane.f32.xlu0 %v2581
        %v2583 = vpop.xlane.xlu0 %2582
        %v2584 = vrcp.pop 32.0
        %v2585 = vmul.f32 %v2583, %v2584
        %v2586 = vsub.f32 %v2580, %v2585
        %v2587 = vmul.f32 %v2586, %v2586
        %v2588 = vsel %vm615, %v2587, 0.0
        %2589 = vadd.xlane.f32.xlu0 %v2588
        %v2590 = vpop.xlane.xlu0 %2589
        %v2591 = vmul.f32 %v2590, %v2584
        %v2592 = vadd.f32 %v2591, 1e-05
        %v2593 = vrsqrt.pop %v2592
        %v2594 = vmul.f32 %v2586, %v2593
        %v2595 = vld [vmem:[%s12] sm:$0x1]
        %v2597 = vlaneseq
        %v2598 = vshrl.u32 %v2597, 7
        %v2599 = vsub.s32 0, %v2598
        %v2600 = vrot.slane %v2595, %v2599
        %v2602 = vmul.f32 %v2594, %v2600
        %v2603 = vld [vmem:[%s13] sm:$0x1]
        %v2605 = vlaneseq
        %v2606 = vshrl.u32 %v2605, 7
        %v2607 = vsub.s32 0, %v2606
        %v2608 = vrot.slane %v2603, %v2607
        %v2610 = vadd.f32 %v2602, %v2608
        %2611 = vst.msk [vmem:[%s581] sm:$0xff] %vm615, %v2610
        %s2612 = sand.u32 %s355, 1
        %s2613 = scalar_lea.sflag [#allocation4], %s2612
        %s2614 = sand.u32 %s355, 1
        %s2615 = smul.addr %s2614, 8
        %s2616 = scalar_lea.vmem [#allocation3], %s2615
        %s2617 = sand.u32 %s381, 1
        %s2618 = scalar_lea.sflag [#allocation6], %s2617
        %s2619 = sand.u32 %s381, 1
        %s2620 = smul.addr %s2619, 32
        %s2621 = scalar_lea.vmem [#allocation5], %s2620
        // Predicated region
        $region115: #{tpu_custom_call.1} parent=109 // pred_check
          %p2622 = pneg %p365
        $region116: #{tpu_custom_call.1} parent=109 // pred_check_branch
          %2624 = sbr.rel (%p2622) target = $region118
        $region117: #{tpu_custom_call.1} parent=109 // pred_region
          %s2626 = ssub.s32 128, 128
          %2627 = vsyncadd %s2613, %s2626
          %s2628 = smul.addr %s33, 128
          %s2629 = scalar_lea.hbm %s14, %s2628
          %s2631 = sshll.u32 %s2616, 4
          %s2632 = int_to_ptr.vmem [resolvable:$true] %s2631
          %2634 = dma.vmem_to_hbm [thread:$0]  %s2632, 128, %s2629, %s2613
        $region118: #{tpu_custom_call.1} parent=109 // pred_fallthru
          _
        // Predicated region
        $region119: #{tpu_custom_call.1} parent=109 // pred_check
          %p2635 = pneg %p391
        $region120: #{tpu_custom_call.1} parent=109 // pred_check_branch
          %2637 = sbr.rel (%p2635) target = $region122
        $region121: #{tpu_custom_call.1} parent=109 // pred_region
          %s2639 = ssub.s32 512, 512
          %2640 = vsyncadd %s2618, %s2639
          %s2641 = smul.addr %s33, 128
          %s2642 = scalar_lea.hbm %s15, %s2641
          %s2643 = sshll.u32 %s2621, 4
          %s2644 = int_to_ptr.vmem [resolvable:$true] %s2643
          %2649 = dma.vmem_to_hbm [thread:$0]  %s2644, 512, %s2642, %s2618, 128, 256, 8
        $region122: #{tpu_custom_call.1} parent=109 // pred_fallthru
          _
      $region110: #{tpu_custom_call.1} parent=5 // pred_fallthru
        _
      %p2650 = scmp.le.s32.totalorder 2, %s28
      // Predicated region
      $region123: #{tpu_custom_call.1} parent=5 // pred_check
        %p2651 = pneg %p2650
      $region124: #{tpu_custom_call.1} parent=5 // pred_check_branch
        %2653 = sbr.rel (%p2651) target = $region126
      $region125: #{tpu_custom_call.1} parent=5 // pred_region
        %s2654 = ssub.s32 %s28, 2
        // Predicated region
        $region127: #{tpu_custom_call.1} parent=125 // pred_check
          %p2655 = pneg %p371
        $region128: #{tpu_custom_call.1} parent=125 // pred_check_branch
          %2657 = sbr.rel (%p2655) target = $region130
        $region129: #{tpu_custom_call.1} parent=125 // pred_region
          %s2658 = sand.u32 %s356, 1
          %s2659 = scalar_lea.sflag [#allocation4], %s2658
          %s2660 = sand.u32 %s356, 1
          %s2661 = smul.addr %s2660, 8
          %s2662 = scalar_lea.vmem [#allocation3], %s2661
          %2663 = dma.done %s2659, 128
        $region130: #{tpu_custom_call.1} parent=125 // pred_fallthru
          _
        // Predicated region
        $region131: #{tpu_custom_call.1} parent=125 // pred_check
          %p2664 = pneg %p397
        $region132: #{tpu_custom_call.1} parent=125 // pred_check_branch
          %2666 = sbr.rel (%p2664) target = $region134
        $region133: #{tpu_custom_call.1} parent=125 // pred_region
          %s2667 = sand.u32 %s382, 1
          %s2668 = scalar_lea.sflag [#allocation6], %s2667
          %s2669 = sand.u32 %s382, 1
          %s2670 = smul.addr %s2669, 32
          %s2671 = scalar_lea.vmem [#allocation5], %s2670
          %2672 = dma.done %s2668, 512
        $region134: #{tpu_custom_call.1} parent=125 // pred_fallthru
          _
      $region126: #{tpu_custom_call.1} parent=5 // pred_fallthru
        _
    $region6: #{tpu_custom_call.1} parent=1 // loop_footer
      %s32 = sadd.s32 1, %s28
    $region7: #{tpu_custom_call.1} parent=1 // loop_footer_branch
      %27 = sbr.rel target = $region3
    $region8: #{tpu_custom_call.1} parent=1 // loop_exit
      _
    %2673 = vsyncpa [#allocation4], 1
    %s2674 = scalar_lea.sflag [#allocation4], 1
    %2675 = vsyncpa %s2674, 1
    %2676 = vsyncpa [#allocation6], 1
    %s2677 = scalar_lea.sflag [#allocation6], 1
    %2678 = vsyncpa %s2677, 1

</llo_original>
